<compile_context>
chip_gen: v5e
topology: v5e:2x2
jax: 0.10.0
libtpu: 0.0.40
codegen_flags: <defaults>
</compile_context>

<pallas_src>
import numpy as np
import jax
import jax.numpy as jnp
from jax.experimental import pallas as pl
from jax.experimental.pallas import tpu as pltpu

# ---------------- configuration (small, consistent with the module) ----------
DIM = 32                  # channels
H = W = 8                 # input_resolution
NUM_HEADS = 4
WINDOW = 4                # window_size
SHIFT = 2                 # shift_size (SW-MSA)
MLP_RATIO = 4.0
EPS = 1e-5                # nn.LayerNorm default eps

HEAD_DIM = DIM // NUM_HEADS
L_TOK = H * W             # tokens per image (all windows packed)
N_WIN = WINDOW * WINDOW   # tokens per window
SCALE = HEAD_DIM ** -0.5
HIDDEN = int(DIM * MLP_RATIO)
_INV_SQRT2 = 0.7071067811865476
NEG_INF = -1e9            # cross-window / cross-batch additive mask (exp -> 0)


# ---------------------------- fused Pallas kernel -----------------------------
def _swin_block_kernel(x_ref, bias_ref, wqkv_ref, bqkv_ref, wp_ref, pb_ref,
                       w1_ref, b1_ref, w2_ref, b2_ref, o_ref):
    """Whole Swin block for one token slab (T tokens, all windows packed)."""
    x = x_ref[0]                                            # (T, C) f32

    # ---- LayerNorm 1 (affine folded into Wqkv on host), biased variance -----
    mean = jnp.mean(x, axis=-1, keepdims=True)
    var = jnp.mean((x - mean) ** 2, axis=-1, keepdims=True)
    xn = (x - mean) * jax.lax.rsqrt(var + EPS)

    # ---- fused QKV: ONE MXU pass, xn is never replicated across heads -------
    qkv = jnp.dot(xn, wqkv_ref[...], preferred_element_type=jnp.float32)
    qkv = qkv + bqkv_ref[...]                               # (T, 3*C)

    def heads(base):        # static lane slices -> (NUM_HEADS, T, HEAD_DIM)
        return jnp.stack(
            [qkv[:, base + h * HEAD_DIM: base + (h + 1) * HEAD_DIM]
             for h in range(NUM_HEADS)], axis=0)

    q = heads(0)            # attention scale already folded into Wq / bq
    k = heads(DIM)
    v = heads(2 * DIM)

    # ---- shifted-window attention: bias = rel-pos + shift mask in-window, ---
    # ---- -1e9 across windows / batch elements (folds roll+partition+reverse)
    s = jnp.einsum('hqd,hkd->hqk', q, k, preferred_element_type=jnp.float32)
    s = s + bias_ref[...].astype(jnp.float32)
    s = s - jnp.max(s, axis=-1, keepdims=True)              # softmax (f32)
    e = jnp.exp(s)
    attn_p = e / jnp.sum(e, axis=-1, keepdims=True)         # exact divide

    o = jnp.einsum('hqk,hkd->hqd', attn_p, v, preferred_element_type=jnp.float32)
    # concat heads along lanes -> single (T,32)@(32,32) projection (one MXU pass)
    o_cat = jnp.concatenate([o[h] for h in range(NUM_HEADS)], axis=-1)
    attn_out = jnp.dot(o_cat, wp_ref[...], preferred_element_type=jnp.float32)
    attn_out = attn_out + pb_ref[...]

    # ---- residual 1 ----------------------------------------------------------
    x2 = x + attn_out

    # ---- LayerNorm 2 (affine folded into fc1) + MLP (exact erf GELU) ---------
    mean2 = jnp.mean(x2, axis=-1, keepdims=True)
    var2 = jnp.mean((x2 - mean2) ** 2, axis=-1, keepdims=True)
    xn2 = (x2 - mean2) * jax.lax.rsqrt(var2 + EPS)
    hcur = jnp.dot(xn2, w1_ref[...], preferred_element_type=jnp.float32) + b1_ref[...]
    hcur = 0.5 * hcur * (1.0 + jax.lax.erf(hcur * jnp.float32(_INV_SQRT2)))
    y = jnp.dot(hcur, w2_ref[...], preferred_element_type=jnp.float32) + b2_ref[...]

    # ---- residual 2 ----------------------------------------------------------
    o_ref[0] = (x2 + y).astype(o_ref.dtype)


# ---------------------------- pallas_call wrapper ------------------------------
def swin_block_forward(x, p, batch_fold):
    B, L, C = x.shape
    assert L == H * W and C == DIM, "input feature has wrong size"
    if batch_fold:
        # single-TC chips: whole batch in one 128-token slab, one grid step
        xt = x.reshape(1, B * L, C)
        grid = (1,)
        semantics = ("arbitrary",)
        x_map = lambda i: (0, 0, 0)
    else:
        # v7x: parallel batch axis keeps both TensorCores busy
        xt = x
        grid = (B,)
        semantics = ("parallel",)
        x_map = lambda i: (i, 0, 0)
    Bt, T, _ = xt.shape
    assert p["bias"].shape == (NUM_HEADS, T, T), "bias built for a different layout"

    c3 = lambda i: (0, 0, 0)
    c2 = lambda i: (0, 0)
    out = pl.pallas_call(
        _swin_block_kernel,
        out_shape=jax.ShapeDtypeStruct((Bt, T, C), x.dtype),
        grid_spec=pltpu.PrefetchScalarGridSpec(
            num_scalar_prefetch=0,
            grid=grid,
            in_specs=[
                pl.BlockSpec((1, T, C), x_map),             # tokens
                pl.BlockSpec((NUM_HEADS, T, T), c3),        # combined attn bias (bf16)
                pl.BlockSpec((DIM, 3 * DIM), c2),           # fused qkv weight (LN1+scale folded)
                pl.BlockSpec((1, 3 * DIM), c2),             # fused qkv bias
                pl.BlockSpec((DIM, DIM), c2),               # output projection weight
                pl.BlockSpec((1, DIM), c2),                 # output projection bias
                pl.BlockSpec((DIM, HIDDEN), c2),            # fc1 w (LN2 folded)
                pl.BlockSpec((1, HIDDEN), c2),              # fc1 b
                pl.BlockSpec((HIDDEN, DIM), c2),            # fc2 w
                pl.BlockSpec((1, DIM), c2),                 # fc2 b
            ],
            out_specs=pl.BlockSpec((1, T, C), x_map),
        ),
        compiler_params=pltpu.CompilerParams(dimension_semantics=semantics),
    )(xt, p["bias"], p["wqkv"], p["bqkv"], p["wp"], p["pb"],
      p["fc1_w"], p["fc1_b"], p["fc2_w"], p["fc2_b"])
    return out.reshape(B, L, C)


def _single_tensorcore_chip():
    """True on v5e/v6e (1 TC/chip) -> fold the batch; False on v7x/v4/v5p."""
    try:
        kind = jax.devices()[0].device_kind.lower()
    except Exception:
        return True
    return not ("v7" in kind or "v4" in kind or "v5p" in kind)


# ---------------------------- static tables (host, numpy) ----------------------
def build_shift_mask():
    """PyTorch SW-MSA attn_mask: (nW, N, N) with 0 / -100."""
    n_w = (H // WINDOW) * (W // WINDOW)
    if SHIFT == 0:
        return np.zeros((n_w, N_WIN, N_WIN), np.float32)
    img_mask = np.zeros((H, W), np.float32)
    h_slices = (slice(0, -WINDOW), slice(-WINDOW, -SHIFT), slice(-SHIFT, None))
    w_slices = (slice(0, -WINDOW), slice(-WINDOW, -SHIFT), slice(-SHIFT, None))
    cnt = 0
    for hs in h_slices:
        for ws in w_slices:
            img_mask[hs, ws] = cnt
            cnt += 1
    nwh, nww = H // WINDOW, W // WINDOW
    mw = img_mask.reshape(nwh, WINDOW, nww, WINDOW)
    mw = mw.transpose(0, 2, 1, 3).reshape(-1, N_WIN)
    attn_mask = mw[:, None, :] - mw[:, :, None]
    return np.where(attn_mask != 0, np.float32(-100.0), np.float32(0.0)).astype(np.float32)


def build_rel_pos_index():
    coords = np.stack(np.meshgrid(np.arange(WINDOW), np.arange(WINDOW), indexing="ij"))
    coords_flatten = coords.reshape(2, -1)
    rel = coords_flatten[:, :, None] - coords_flatten[:, None, :]
    rel = rel.transpose(1, 2, 0).astype(np.int64)
    rel[:, :, 0] += WINDOW - 1
    rel[:, :, 1] += WINDOW - 1
    rel[:, :, 0] *= 2 * WINDOW - 1
    return rel.sum(-1)                                    # (N, N)


def build_token_window_maps():
    """Window id and in-window local index of every raster token under the shift."""
    r = np.arange(H)[:, None]
    c = np.arange(W)[None, :]
    rs = (r - SHIFT) % H
    cs = (c - SHIFT) % W
    wid = (rs // WINDOW) * (W // WINDOW) + (cs // WINDOW)
    li = (rs % WINDOW) * WINDOW + (cs % WINDOW)
    return wid.reshape(-1).astype(np.int32), li.reshape(-1).astype(np.int32)


def build_attn_bias(rel_bias, n_rep=1):
    """Combined (NUM_HEADS, T, T) additive bias in raster-token order:
    rel-pos bias + shift mask within a window, -1e9 across windows, and (when the
    batch is folded, n_rep>1) -1e9 across batch elements.  Shipped as bf16."""
    wid, li = build_token_window_maps()
    shift_mask = build_shift_mask()                       # (nW, N, N)
    same = wid[:, None] == wid[None, :]
    win_mask = np.where(same,
                        shift_mask[wid[:, None], li[:, None], li[None, :]],
                        np.float32(NEG_INF)).astype(np.float32)          # (L, L)
    bias = rel_bias[:, li[:, None], li[None, :]] + jnp.asarray(win_mask)[None]
    if n_rep > 1:                                         # block-diag over batch
        T = n_rep * L_TOK
        full = jnp.full((NUM_HEADS, T, T), jnp.float32(NEG_INF))
        for b in range(n_rep):
            full = full.at[:, b * L_TOK:(b + 1) * L_TOK,
                           b * L_TOK:(b + 1) * L_TOK].set(bias)
        bias = full
    return bias.astype(jnp.bfloat16)


# ---------------------------- params ------------------------------------------
def init_params(key):
    ks = jax.random.split(key, 8)
    table = 0.02 * jax.random.normal(
        ks[0], ((2 * WINDOW - 1) ** 2, NUM_HEADS), jnp.float32)   # trunc_normal(std=.02)
    idx = jnp.asarray(build_rel_pos_index().reshape(-1))
    rel_bias = table[idx].reshape(N_WIN, N_WIN, NUM_HEADS)
    rel_bias = jnp.transpose(rel_bias, (2, 0, 1))                 # (heads, N, N)
    return dict(
        g1=jnp.ones((DIM,), jnp.float32),
        b1=jnp.zeros((DIM,), jnp.float32),
        qkv_w=0.02 * jax.random.normal(ks[1], (DIM, 3 * DIM), jnp.float32),
        qkv_b=0.02 * jax.random.normal(ks[2], (3 * DIM,), jnp.float32),
        rel_bias=rel_bias,
        proj_w=0.02 * jax.random.normal(ks[3], (DIM, DIM), jnp.float32),
        proj_b=jnp.zeros((DIM,), jnp.float32),
        g2=jnp.ones((DIM,), jnp.float32),
        b2=jnp.zeros((DIM,), jnp.float32),
        fc1_w=0.02 * jax.random.normal(ks[4], (DIM, HIDDEN), jnp.float32),
        fc1_b=0.02 * jax.random.normal(ks[5], (HIDDEN,), jnp.float32),
        fc2_w=0.02 * jax.random.normal(ks[6], (HIDDEN, DIM), jnp.float32),
        fc2_b=0.02 * jax.random.normal(ks[7], (DIM,), jnp.float32),
    )


def prepare_params(raw, n_rep=1):
    """Host-side packing: fold LayerNorm affines into the following linears,
    fold the attention scale into the Q columns, build the combined bf16 bias."""
    # norm1 affine -> qkv  (W' = diag(g) @ W, b' = b @ W + bias)
    qkv_w = raw["qkv_w"] * raw["g1"][:, None]                   # (DIM, 3*DIM)
    qkv_b = raw["qkv_b"] + raw["b1"] @ raw["qkv_w"]             # (3*DIM,)
    # fold the attention scale into the Q third
    scale_vec = jnp.concatenate([jnp.full((DIM,), SCALE, jnp.float32),
                                 jnp.ones((2 * DIM,), jnp.float32)])
    wqkv = qkv_w * scale_vec[None, :]
    bqkv = (qkv_b * scale_vec).reshape(1, 3 * DIM)

    # norm2 affine -> fc1
    fc1_w = raw["fc1_w"] * raw["g2"][:, None]
    fc1_b = raw["fc1_b"] + raw["b2"] @ raw["fc1_w"]

    return dict(
        bias=build_attn_bias(raw["rel_bias"], n_rep=n_rep),
        wqkv=wqkv, bqkv=bqkv,
        wp=raw["proj_w"], pb=raw["proj_b"].reshape(1, DIM),
        fc1_w=fc1_w, fc1_b=fc1_b.reshape(1, HIDDEN),
        fc2_w=raw["fc2_w"], fc2_b=raw["fc2_b"].reshape(1, DIM),
    )


# ---------------------------- main ---------------------------------------------
if __name__ == "__main__":
    key = jax.random.PRNGKey(0)
    kx, kp = jax.random.split(key)
    B = 2
    x = jax.random.normal(kx, (B, H * W, DIM), jnp.float32)   # (B, L, C) = (2, 64, 32)

    batch_fold = _single_tensorcore_chip()                    # v5e/v6e: fold, v7x: parallel B
    params = prepare_params(init_params(kp), n_rep=(B if batch_fold else 1))
    params = jax.tree_util.tree_map(jax.block_until_ready, params)

    fwd = jax.jit(lambda xx: swin_block_forward(xx, params, batch_fold))
    y = fwd(x)
    jax.block_until_ready(y)
    assert y.shape == x.shape and y.dtype == x.dtype
    assert bool(jnp.all(jnp.isfinite(y)))
    print("KERNEL_OK")
</pallas_src>

<mosaic_0001>
module attributes {stable_mosaic.version = 11 : i64} {
  func.func @_swin_block_kernel(%arg0: i32, %arg1: memref<1x128x32xf32, #tpu.memory_space<vmem>>, %arg2: memref<4x128x128xbf16, #tpu.memory_space<vmem>>, %arg3: memref<32x96xf32, #tpu.memory_space<vmem>>, %arg4: memref<1x96xf32, #tpu.memory_space<vmem>>, %arg5: memref<32x32xf32, #tpu.memory_space<vmem>>, %arg6: memref<1x32xf32, #tpu.memory_space<vmem>>, %arg7: memref<32x128xf32, #tpu.memory_space<vmem>>, %arg8: memref<1x128xf32, #tpu.memory_space<vmem>>, %arg9: memref<128x32xf32, #tpu.memory_space<vmem>>, %arg10: memref<1x32xf32, #tpu.memory_space<vmem>>, %arg11: memref<1x128x32xf32, #tpu.memory_space<vmem>>) attributes {dimension_semantics = [#tpu.dimension_semantics<arbitrary>], iteration_bounds = array<i64: 1>, scalar_prefetch = 0 : i64, scratch_operands = 0 : i64, tpu.core_type = #tpu.core_type<tc>, window_params = [{pipeline_mode = #tpu.pipeline_mode<synchronous>, transform_indices = @transform_0, window_bounds = array<i64: 1, 128, 32>}, {pipeline_mode = #tpu.pipeline_mode<synchronous>, transform_indices = @transform_1, window_bounds = array<i64: 4, 128, 128>}, {pipeline_mode = #tpu.pipeline_mode<synchronous>, transform_indices = @transform_2, window_bounds = array<i64: 32, 96>}, {pipeline_mode = #tpu.pipeline_mode<synchronous>, transform_indices = @transform_3, window_bounds = array<i64: 1, 96>}, {pipeline_mode = #tpu.pipeline_mode<synchronous>, transform_indices = @transform_4, window_bounds = array<i64: 32, 32>}, {pipeline_mode = #tpu.pipeline_mode<synchronous>, transform_indices = @transform_5, window_bounds = array<i64: 1, 32>}, {pipeline_mode = #tpu.pipeline_mode<synchronous>, transform_indices = @transform_6, window_bounds = array<i64: 32, 128>}, {pipeline_mode = #tpu.pipeline_mode<synchronous>, transform_indices = @transform_7, window_bounds = array<i64: 1, 128>}, {pipeline_mode = #tpu.pipeline_mode<synchronous>, transform_indices = @transform_8, window_bounds = array<i64: 128, 32>}, {pipeline_mode = #tpu.pipeline_mode<synchronous>, transform_indices = @transform_9, window_bounds = array<i64: 1, 32>}, {pipeline_mode = #tpu.pipeline_mode<synchronous>, transform_indices = @transform_10, window_bounds = array<i64: 1, 128, 32>}]} {
    %c0 = arith.constant 0 : index
    %c0_0 = arith.constant 0 : index
    %c0_1 = arith.constant 0 : index
    %0 = vector.load %arg1[%c0, %c0_0, %c0_1] : memref<1x128x32xf32, #tpu.memory_space<vmem>>, vector<1x128x32xf32>
    %1 = vector.shape_cast %0 : vector<1x128x32xf32> to vector<128x32xf32>
    %cst = arith.constant dense<0.000000e+00> : vector<128xf32>
    %2 = vector.multi_reduction <add>, %1, %cst [1] : vector<128x32xf32> to vector<128xf32>
    %3 = vector.shape_cast %2 : vector<128xf32> to vector<128x1xf32>
    %cst_2 = arith.constant 3.200000e+01 : f32
    %4 = vector.broadcast %cst_2 : f32 to vector<128x1xf32>
    %5 = arith.divf %3, %4 : vector<128x1xf32>
    %6 = vector.broadcast %5 : vector<128x1xf32> to vector<128x32xf32>
    %7 = arith.subf %1, %6 : vector<128x32xf32>
    %8 = arith.mulf %7, %7 : vector<128x32xf32>
    %cst_3 = arith.constant dense<0.000000e+00> : vector<128xf32>
    %9 = vector.multi_reduction <add>, %8, %cst_3 [1] : vector<128x32xf32> to vector<128xf32>
    %10 = vector.shape_cast %9 : vector<128xf32> to vector<128x1xf32>
    %cst_4 = arith.constant 3.200000e+01 : f32
    %11 = vector.broadcast %cst_4 : f32 to vector<128x1xf32>
    %12 = arith.divf %10, %11 : vector<128x1xf32>
    %13 = vector.broadcast %5 : vector<128x1xf32> to vector<128x32xf32>
    %14 = arith.subf %1, %13 : vector<128x32xf32>
    %cst_5 = arith.constant 9.99999974E-6 : f32
    %15 = vector.broadcast %cst_5 : f32 to vector<128x1xf32>
    %16 = arith.addf %12, %15 : vector<128x1xf32>
    %17 = math.rsqrt %16 : vector<128x1xf32>
    %18 = vector.broadcast %17 : vector<128x1xf32> to vector<128x32xf32>
    %19 = arith.mulf %14, %18 : vector<128x32xf32>
    %c0_6 = arith.constant 0 : index
    %c0_7 = arith.constant 0 : index
    %20 = vector.load %arg3[%c0_6, %c0_7] : memref<32x96xf32, #tpu.memory_space<vmem>>, vector<32x96xf32>
    %cst_8 = arith.constant dense<0.000000e+00> : vector<128x96xf32>
    %21 = tpu.matmul %19, %20, %cst_8 {dimension_numbers = #tpu.dot_dimension_numbers<[1], [0], [0], [1], [0, 0, 1, 1], [], []>} : vector<128x32xf32>, vector<32x96xf32>, vector<128x96xf32> -> vector<128x96xf32>
    %c0_9 = arith.constant 0 : index
    %c0_10 = arith.constant 0 : index
    %22 = vector.load %arg4[%c0_9, %c0_10] : memref<1x96xf32, #tpu.memory_space<vmem>>, vector<1x96xf32>
    %23 = vector.broadcast %22 : vector<1x96xf32> to vector<128x96xf32>
    %24 = arith.addf %21, %23 : vector<128x96xf32>
    %25 = vector.extract_strided_slice %24 {offsets = [0, 0], sizes = [128, 8], strides = [1, 1]} : vector<128x96xf32> to vector<128x8xf32>
    %26 = vector.extract_strided_slice %24 {offsets = [0, 8], sizes = [128, 8], strides = [1, 1]} : vector<128x96xf32> to vector<128x8xf32>
    %27 = vector.extract_strided_slice %24 {offsets = [0, 16], sizes = [128, 8], strides = [1, 1]} : vector<128x96xf32> to vector<128x8xf32>
    %28 = vector.extract_strided_slice %24 {offsets = [0, 24], sizes = [128, 8], strides = [1, 1]} : vector<128x96xf32> to vector<128x8xf32>
    %29 = vector.shape_cast %25 : vector<128x8xf32> to vector<1x128x8xf32>
    %30 = vector.shape_cast %26 : vector<128x8xf32> to vector<1x128x8xf32>
    %31 = vector.shape_cast %27 : vector<128x8xf32> to vector<1x128x8xf32>
    %32 = vector.shape_cast %28 : vector<128x8xf32> to vector<1x128x8xf32>
    %33 = tpu.concatenate %29, %30, %31, %32 in 0 : vector<1x128x8xf32>, vector<1x128x8xf32>, vector<1x128x8xf32>, vector<1x128x8xf32> -> vector<4x128x8xf32>
    %34 = vector.extract_strided_slice %24 {offsets = [0, 32], sizes = [128, 8], strides = [1, 1]} : vector<128x96xf32> to vector<128x8xf32>
    %35 = vector.extract_strided_slice %24 {offsets = [0, 40], sizes = [128, 8], strides = [1, 1]} : vector<128x96xf32> to vector<128x8xf32>
    %36 = vector.extract_strided_slice %24 {offsets = [0, 48], sizes = [128, 8], strides = [1, 1]} : vector<128x96xf32> to vector<128x8xf32>
    %37 = vector.extract_strided_slice %24 {offsets = [0, 56], sizes = [128, 8], strides = [1, 1]} : vector<128x96xf32> to vector<128x8xf32>
    %38 = vector.shape_cast %34 : vector<128x8xf32> to vector<1x128x8xf32>
    %39 = vector.shape_cast %35 : vector<128x8xf32> to vector<1x128x8xf32>
    %40 = vector.shape_cast %36 : vector<128x8xf32> to vector<1x128x8xf32>
    %41 = vector.shape_cast %37 : vector<128x8xf32> to vector<1x128x8xf32>
    %42 = tpu.concatenate %38, %39, %40, %41 in 0 : vector<1x128x8xf32>, vector<1x128x8xf32>, vector<1x128x8xf32>, vector<1x128x8xf32> -> vector<4x128x8xf32>
    %43 = vector.extract_strided_slice %24 {offsets = [0, 64], sizes = [128, 8], strides = [1, 1]} : vector<128x96xf32> to vector<128x8xf32>
    %44 = vector.extract_strided_slice %24 {offsets = [0, 72], sizes = [128, 8], strides = [1, 1]} : vector<128x96xf32> to vector<128x8xf32>
    %45 = vector.extract_strided_slice %24 {offsets = [0, 80], sizes = [128, 8], strides = [1, 1]} : vector<128x96xf32> to vector<128x8xf32>
    %46 = vector.extract_strided_slice %24 {offsets = [0, 88], sizes = [128, 8], strides = [1, 1]} : vector<128x96xf32> to vector<128x8xf32>
    %47 = vector.shape_cast %43 : vector<128x8xf32> to vector<1x128x8xf32>
    %48 = vector.shape_cast %44 : vector<128x8xf32> to vector<1x128x8xf32>
    %49 = vector.shape_cast %45 : vector<128x8xf32> to vector<1x128x8xf32>
    %50 = vector.shape_cast %46 : vector<128x8xf32> to vector<1x128x8xf32>
    %51 = tpu.concatenate %47, %48, %49, %50 in 0 : vector<1x128x8xf32>, vector<1x128x8xf32>, vector<1x128x8xf32>, vector<1x128x8xf32> -> vector<4x128x8xf32>
    "tpu.trace_start"() <{level = 10 : i32, message = "hqd,hkd->hqk"}> : () -> ()
    %cst_11 = arith.constant dense<0.000000e+00> : vector<4x128x128xf32>
    %52 = tpu.matmul %33, %42, %cst_11 {dimension_numbers = #tpu.dot_dimension_numbers<[2], [2], [1], [1], [0, 0, 0, 1, 1, 1], [0], [0]>} : vector<4x128x8xf32>, vector<4x128x8xf32>, vector<4x128x128xf32> -> vector<4x128x128xf32>
    "tpu.trace_stop"() : () -> ()
    %c0_12 = arith.constant 0 : index
    %c0_13 = arith.constant 0 : index
    %c0_14 = arith.constant 0 : index
    %53 = vector.load %arg2[%c0_12, %c0_13, %c0_14] : memref<4x128x128xbf16, #tpu.memory_space<vmem>>, vector<4x128x128xbf16>
    %54 = arith.extf %53 : vector<4x128x128xbf16> to vector<4x128x128xf32>
    %55 = arith.addf %52, %54 : vector<4x128x128xf32>
    %cst_15 = arith.constant dense<0xFF800000> : vector<4x128xf32>
    %56 = vector.multi_reduction <maximumf>, %55, %cst_15 [2] : vector<4x128x128xf32> to vector<4x128xf32>
    %57 = vector.shape_cast %56 : vector<4x128xf32> to vector<4x128x1xf32>
    %58 = vector.broadcast %57 : vector<4x128x1xf32> to vector<4x128x128xf32>
    %59 = arith.subf %55, %58 : vector<4x128x128xf32>
    %60 = math.exp %59 : vector<4x128x128xf32>
    %cst_16 = arith.constant dense<0.000000e+00> : vector<4x128xf32>
    %61 = vector.multi_reduction <add>, %60, %cst_16 [2] : vector<4x128x128xf32> to vector<4x128xf32>
    %62 = vector.shape_cast %61 : vector<4x128xf32> to vector<4x128x1xf32>
    %63 = vector.broadcast %62 : vector<4x128x1xf32> to vector<4x128x128xf32>
    %64 = arith.divf %60, %63 : vector<4x128x128xf32>
    "tpu.trace_start"() <{level = 10 : i32, message = "hqk,hkd->hqd"}> : () -> ()
    %cst_17 = arith.constant dense<0.000000e+00> : vector<4x128x8xf32>
    %65 = tpu.matmul %64, %51, %cst_17 {dimension_numbers = #tpu.dot_dimension_numbers<[2], [1], [1], [2], [0, 0, 0, 1, 1, 2], [0], [0]>} : vector<4x128x128xf32>, vector<4x128x8xf32>, vector<4x128x8xf32> -> vector<4x128x8xf32>
    "tpu.trace_stop"() : () -> ()
    %66 = vector.extract_strided_slice %65 {offsets = [0, 0, 0], sizes = [1, 128, 8], strides = [1, 1, 1]} : vector<4x128x8xf32> to vector<1x128x8xf32>
    %67 = vector.shape_cast %66 : vector<1x128x8xf32> to vector<128x8xf32>
    %68 = vector.extract_strided_slice %65 {offsets = [1, 0, 0], sizes = [1, 128, 8], strides = [1, 1, 1]} : vector<4x128x8xf32> to vector<1x128x8xf32>
    %69 = vector.shape_cast %68 : vector<1x128x8xf32> to vector<128x8xf32>
    %70 = vector.extract_strided_slice %65 {offsets = [2, 0, 0], sizes = [1, 128, 8], strides = [1, 1, 1]} : vector<4x128x8xf32> to vector<1x128x8xf32>
    %71 = vector.shape_cast %70 : vector<1x128x8xf32> to vector<128x8xf32>
    %72 = vector.extract_strided_slice %65 {offsets = [3, 0, 0], sizes = [1, 128, 8], strides = [1, 1, 1]} : vector<4x128x8xf32> to vector<1x128x8xf32>
    %73 = vector.shape_cast %72 : vector<1x128x8xf32> to vector<128x8xf32>
    %74 = tpu.concatenate %67, %69, %71, %73 in 1 : vector<128x8xf32>, vector<128x8xf32>, vector<128x8xf32>, vector<128x8xf32> -> vector<128x32xf32>
    %c0_18 = arith.constant 0 : index
    %c0_19 = arith.constant 0 : index
    %75 = vector.load %arg5[%c0_18, %c0_19] : memref<32x32xf32, #tpu.memory_space<vmem>>, vector<32x32xf32>
    %cst_20 = arith.constant dense<0.000000e+00> : vector<128x32xf32>
    %76 = tpu.matmul %74, %75, %cst_20 {dimension_numbers = #tpu.dot_dimension_numbers<[1], [0], [0], [1], [0, 0, 1, 1], [], []>} : vector<128x32xf32>, vector<32x32xf32>, vector<128x32xf32> -> vector<128x32xf32>
    %c0_21 = arith.constant 0 : index
    %c0_22 = arith.constant 0 : index
    %77 = vector.load %arg6[%c0_21, %c0_22] : memref<1x32xf32, #tpu.memory_space<vmem>>, vector<1x32xf32>
    %78 = vector.broadcast %77 : vector<1x32xf32> to vector<128x32xf32>
    %79 = arith.addf %76, %78 : vector<128x32xf32>
    %80 = arith.addf %1, %79 : vector<128x32xf32>
    %cst_23 = arith.constant dense<0.000000e+00> : vector<128xf32>
    %81 = vector.multi_reduction <add>, %80, %cst_23 [1] : vector<128x32xf32> to vector<128xf32>
    %82 = vector.shape_cast %81 : vector<128xf32> to vector<128x1xf32>
    %cst_24 = arith.constant 3.200000e+01 : f32
    %83 = vector.broadcast %cst_24 : f32 to vector<128x1xf32>
    %84 = arith.divf %82, %83 : vector<128x1xf32>
    %85 = vector.broadcast %84 : vector<128x1xf32> to vector<128x32xf32>
    %86 = arith.subf %80, %85 : vector<128x32xf32>
    %87 = arith.mulf %86, %86 : vector<128x32xf32>
    %cst_25 = arith.constant dense<0.000000e+00> : vector<128xf32>
    %88 = vector.multi_reduction <add>, %87, %cst_25 [1] : vector<128x32xf32> to vector<128xf32>
    %89 = vector.shape_cast %88 : vector<128xf32> to vector<128x1xf32>
    %cst_26 = arith.constant 3.200000e+01 : f32
    %90 = vector.broadcast %cst_26 : f32 to vector<128x1xf32>
    %91 = arith.divf %89, %90 : vector<128x1xf32>
    %92 = vector.broadcast %84 : vector<128x1xf32> to vector<128x32xf32>
    %93 = arith.subf %80, %92 : vector<128x32xf32>
    %cst_27 = arith.constant 9.99999974E-6 : f32
    %94 = vector.broadcast %cst_27 : f32 to vector<128x1xf32>
    %95 = arith.addf %91, %94 : vector<128x1xf32>
    %96 = math.rsqrt %95 : vector<128x1xf32>
    %97 = vector.broadcast %96 : vector<128x1xf32> to vector<128x32xf32>
    %98 = arith.mulf %93, %97 : vector<128x32xf32>
    %c0_28 = arith.constant 0 : index
    %c0_29 = arith.constant 0 : index
    %99 = vector.load %arg7[%c0_28, %c0_29] : memref<32x128xf32, #tpu.memory_space<vmem>>, vector<32x128xf32>
    %cst_30 = arith.constant dense<0.000000e+00> : vector<128x128xf32>
    %100 = tpu.matmul %98, %99, %cst_30 {dimension_numbers = #tpu.dot_dimension_numbers<[1], [0], [0], [1], [0, 0, 1, 1], [], []>} : vector<128x32xf32>, vector<32x128xf32>, vector<128x128xf32> -> vector<128x128xf32>
    %c0_31 = arith.constant 0 : index
    %c0_32 = arith.constant 0 : index
    %101 = vector.load %arg8[%c0_31, %c0_32] : memref<1x128xf32, #tpu.memory_space<vmem>>, vector<1x128xf32>
    %102 = vector.broadcast %101 : vector<1x128xf32> to vector<128x128xf32>
    %103 = arith.addf %100, %102 : vector<128x128xf32>
    %cst_33 = arith.constant 5.000000e-01 : f32
    %104 = vector.broadcast %cst_33 : f32 to vector<128x128xf32>
    %105 = arith.mulf %104, %103 : vector<128x128xf32>
    %cst_34 = arith.constant 0.707106769 : f32
    %106 = vector.broadcast %cst_34 : f32 to vector<128x128xf32>
    %107 = arith.mulf %103, %106 : vector<128x128xf32>
    %108 = math.erf %107 : vector<128x128xf32>
    %cst_35 = arith.constant 1.000000e+00 : f32
    %109 = vector.broadcast %cst_35 : f32 to vector<128x128xf32>
    %110 = arith.addf %109, %108 : vector<128x128xf32>
    %111 = arith.mulf %105, %110 : vector<128x128xf32>
    %c0_36 = arith.constant 0 : index
    %c0_37 = arith.constant 0 : index
    %112 = vector.load %arg9[%c0_36, %c0_37] : memref<128x32xf32, #tpu.memory_space<vmem>>, vector<128x32xf32>
    %cst_38 = arith.constant dense<0.000000e+00> : vector<128x32xf32>
    %113 = tpu.matmul %111, %112, %cst_38 {dimension_numbers = #tpu.dot_dimension_numbers<[1], [0], [0], [1], [0, 0, 1, 1], [], []>} : vector<128x128xf32>, vector<128x32xf32>, vector<128x32xf32> -> vector<128x32xf32>
    %c0_39 = arith.constant 0 : index
    %c0_40 = arith.constant 0 : index
    %114 = vector.load %arg10[%c0_39, %c0_40] : memref<1x32xf32, #tpu.memory_space<vmem>>, vector<1x32xf32>
    %115 = vector.broadcast %114 : vector<1x32xf32> to vector<128x32xf32>
    %116 = arith.addf %113, %115 : vector<128x32xf32>
    %117 = arith.addf %80, %116 : vector<128x32xf32>
    %c0_41 = arith.constant 0 : index
    %c0_42 = arith.constant 0 : index
    %c0_43 = arith.constant 0 : index
    %118 = vector.load %arg11[%c0_41, %c0_42, %c0_43] : memref<1x128x32xf32, #tpu.memory_space<vmem>>, vector<1x128x32xf32>
    %119 = vector.shape_cast %118 : vector<1x128x32xf32> to vector<128x32xf32>
    %120 = vector.shape_cast %117 : vector<128x32xf32> to vector<1x128x32xf32>
    tpu.vector_store %arg11[%c0_41, %c0_42, %c0_43], %120 {strides = array<i32>} : memref<1x128x32xf32, #tpu.memory_space<vmem>>, vector<1x128x32xf32>,
    return
  }
  func.func @transform_0(%arg0: i32) -> (i32, i32, i32) {
    %c0_i32 = arith.constant 0 : i32
    %c0_i32_0 = arith.constant 0 : i32
    %c0_i32_1 = arith.constant 0 : i32
    %c0_i32_2 = arith.constant 0 : i32
    return %c0_i32, %c0_i32_0, %c0_i32_1 : i32, i32, i32
  }
  func.func @transform_1(%arg0: i32) -> (i32, i32, i32) {
    %c0_i32 = arith.constant 0 : i32
    %c0_i32_0 = arith.constant 0 : i32
    %c0_i32_1 = arith.constant 0 : i32
    %c0_i32_2 = arith.constant 0 : i32
    return %c0_i32, %c0_i32_0, %c0_i32_1 : i32, i32, i32
  }
  func.func @transform_2(%arg0: i32) -> (i32, i32) {
    %c0_i32 = arith.constant 0 : i32
    %c0_i32_0 = arith.constant 0 : i32
    %c0_i32_1 = arith.constant 0 : i32
    return %c0_i32, %c0_i32_0 : i32, i32
  }
  func.func @transform_3(%arg0: i32) -> (i32, i32) {
    %c0_i32 = arith.constant 0 : i32
    %c0_i32_0 = arith.constant 0 : i32
    %c0_i32_1 = arith.constant 0 : i32
    return %c0_i32, %c0_i32_0 : i32, i32
  }
  func.func @transform_4(%arg0: i32) -> (i32, i32) {
    %c0_i32 = arith.constant 0 : i32
    %c0_i32_0 = arith.constant 0 : i32
    %c0_i32_1 = arith.constant 0 : i32
    return %c0_i32, %c0_i32_0 : i32, i32
  }
  func.func @transform_5(%arg0: i32) -> (i32, i32) {
    %c0_i32 = arith.constant 0 : i32
    %c0_i32_0 = arith.constant 0 : i32
    %c0_i32_1 = arith.constant 0 : i32
    return %c0_i32, %c0_i32_0 : i32, i32
  }
  func.func @transform_6(%arg0: i32) -> (i32, i32) {
    %c0_i32 = arith.constant 0 : i32
    %c0_i32_0 = arith.constant 0 : i32
    %c0_i32_1 = arith.constant 0 : i32
    return %c0_i32, %c0_i32_0 : i32, i32
  }
  func.func @transform_7(%arg0: i32) -> (i32, i32) {
    %c0_i32 = arith.constant 0 : i32
    %c0_i32_0 = arith.constant 0 : i32
    %c0_i32_1 = arith.constant 0 : i32
    return %c0_i32, %c0_i32_0 : i32, i32
  }
  func.func @transform_8(%arg0: i32) -> (i32, i32) {
    %c0_i32 = arith.constant 0 : i32
    %c0_i32_0 = arith.constant 0 : i32
    %c0_i32_1 = arith.constant 0 : i32
    return %c0_i32, %c0_i32_0 : i32, i32
  }
  func.func @transform_9(%arg0: i32) -> (i32, i32) {
    %c0_i32 = arith.constant 0 : i32
    %c0_i32_0 = arith.constant 0 : i32
    %c0_i32_1 = arith.constant 0 : i32
    return %c0_i32, %c0_i32_0 : i32, i32
  }
  func.func @transform_10(%arg0: i32) -> (i32, i32, i32) {
    %c0_i32 = arith.constant 0 : i32
    %c0_i32_0 = arith.constant 0 : i32
    %c0_i32_1 = arith.constant 0 : i32
    %c0_i32_2 = arith.constant 0 : i32
    return %c0_i32, %c0_i32_0, %c0_i32_1 : i32, i32, i32
  }
}

</mosaic_0001>

<llo_original>
// kernel: _lambda_.1
$region0: #{_lambda_.1}
  #allocation0 [shape = 'u32[]', space=smem, size = 0x4, offset = 0x4, fixed_abs, tag = 'smem constant byte address 0x4 - core index']
  #allocation1 [shape = 'u32[72,128]{1,0:T(1,128)}', space=vmem, size = 0x9000, scoped, tag = 'internal scratch']
  %s0 = inlined_call_operand.vmem [shape: f32[1,128,32], index: 0, kind: input, shape index: {}]
  %s1 = inlined_call_operand.hbm [shape: bf16[4,128,128], index: 1, kind: input, shape index: {}]
  %s2 = inlined_call_operand.hbm [shape: f32[32,96], index: 2, kind: input, shape index: {}]
  %s3 = inlined_call_operand.vmem [shape: f32[1,96], index: 3, kind: input, shape index: {}]
  %s4 = inlined_call_operand.vmem [shape: f32[32,32], index: 4, kind: input, shape index: {}]
  %s5 = inlined_call_operand.vmem [shape: f32[1,32], index: 5, kind: input, shape index: {}]
  %s6 = inlined_call_operand.vmem [shape: f32[32,128], index: 6, kind: input, shape index: {}]
  %s7 = inlined_call_operand.vmem [shape: f32[1,128], index: 7, kind: input, shape index: {}]
  %s8 = inlined_call_operand.vmem [shape: f32[128,32], index: 8, kind: input, shape index: {}]
  %s9 = inlined_call_operand.vmem [shape: f32[1,32], index: 9, kind: input, shape index: {}]
  %s10 = inlined_call_operand.vmem [shape: f32[1,128,32], index: 10, kind: output, shape index: {}]
  %s11 = sld [smem:[#allocation0]]
  $region58: #{_lambda_.1} parent=0
    _
  %s13 = ssub.s32 1, %s11
  %s14 = scalar_select 0, %s13, %s11
  $region1: #{_lambda_.1} parent=0
    #allocation2 [shape = 'u8[131072]{0}', space=vmem, size = 0x20000, scoped, tag = 'input window, operand 1, single buffered']
    #allocation3 [shape = 's32[1]{0}', space=sflag, size = 0x4, scoped, tag = 'scoped memory for _lambda_.1']
    #allocation4 [shape = 'u8[16384]{0}', space=vmem, size = 0x4000, scoped, tag = 'input window, operand 2, single buffered']
    #allocation5 [shape = 's32[1]{0}', space=sflag, size = 0x4, scoped, tag = 'scoped memory for _lambda_.1']
    %15 = vsyncpa [#allocation3], 0
    %16 = vsyncpa [#allocation5], 0
    // Predicated region
    $region2: #{_lambda_.1} parent=1 // pred_check
      _
    $region3: #{_lambda_.1} parent=1 // pred_check_branch
      %18 = sbr.rel (0) target = $region5
    $region4: #{_lambda_.1} parent=1 // pred_region
      _
    $region5: #{_lambda_.1} parent=1 // pred_fallthru
      _
    // Predicated region
    $region6: #{_lambda_.1} parent=1 // pred_check
      _
    $region7: #{_lambda_.1} parent=1 // pred_check_branch
      %20 = sbr.rel (0) target = $region9
    $region8: #{_lambda_.1} parent=1 // pred_region
      %22 = vsyncadd [#allocation3], 0
      %s23 = sshll.u32 %s1, 4
      %s24 = int_to_ptr.hbm [resolvable:$true] %s23
      %s25 = sshll.u32 [#allocation2], 4
      %s26 = int_to_ptr.vmem [resolvable:$true] %s25
      %31 = dma.hbm_to_vmem [thread:$0]  %s24, 4096, %s26, [#allocation3], 64, 64, 4
    $region9: #{_lambda_.1} parent=1 // pred_fallthru
      _
    // Predicated region
    $region10: #{_lambda_.1} parent=1 // pred_check
      _
    $region11: #{_lambda_.1} parent=1 // pred_check_branch
      %33 = sbr.rel (0) target = $region13
    $region12: #{_lambda_.1} parent=1 // pred_region
      %35 = vsyncadd [#allocation5], 0
      %s36 = sshll.u32 %s2, 4
      %s37 = int_to_ptr.hbm [resolvable:$true] %s36
      %s38 = sshll.u32 [#allocation4], 4
      %s39 = int_to_ptr.vmem [resolvable:$true] %s38
      %44 = dma.hbm_to_vmem [thread:$0]  %s37, 512, %s39, [#allocation5], 128, 128, 8
    $region13: #{_lambda_.1} parent=1 // pred_fallthru
      _
    // Predicated region
    $region14: #{_lambda_.1} parent=1 // pred_check
      _
    $region15: #{_lambda_.1} parent=1 // pred_check_branch
      %46 = sbr.rel (0) target = $region17
    $region16: #{_lambda_.1} parent=1 // pred_region
      _
    $region17: #{_lambda_.1} parent=1 // pred_fallthru
      _
    // Predicated region
    $region18: #{_lambda_.1} parent=1 // pred_check
      _
    $region19: #{_lambda_.1} parent=1 // pred_check_branch
      %48 = sbr.rel (0) target = $region21
    $region20: #{_lambda_.1} parent=1 // pred_region
      _
    $region21: #{_lambda_.1} parent=1 // pred_fallthru
      _
    // Predicated region
    $region22: #{_lambda_.1} parent=1 // pred_check
      _
    $region23: #{_lambda_.1} parent=1 // pred_check_branch
      %50 = sbr.rel (0) target = $region25
    $region24: #{_lambda_.1} parent=1 // pred_region
      _
    $region25: #{_lambda_.1} parent=1 // pred_fallthru
      _
    // Predicated region
    $region26: #{_lambda_.1} parent=1 // pred_check
      _
    $region27: #{_lambda_.1} parent=1 // pred_check_branch
      %52 = sbr.rel (0) target = $region29
    $region28: #{_lambda_.1} parent=1 // pred_region
      _
    $region29: #{_lambda_.1} parent=1 // pred_fallthru
      _
    // Predicated region
    $region30: #{_lambda_.1} parent=1 // pred_check
      _
    $region31: #{_lambda_.1} parent=1 // pred_check_branch
      %54 = sbr.rel (0) target = $region33
    $region32: #{_lambda_.1} parent=1 // pred_region
      _
    $region33: #{_lambda_.1} parent=1 // pred_fallthru
      _
    // Predicated region
    $region34: #{_lambda_.1} parent=1 // pred_check
      _
    $region35: #{_lambda_.1} parent=1 // pred_check_branch
      %56 = sbr.rel (0) target = $region37
    $region36: #{_lambda_.1} parent=1 // pred_region
      _
    $region37: #{_lambda_.1} parent=1 // pred_fallthru
      _
    // Predicated region
    $region38: #{_lambda_.1} parent=1 // pred_check
      _
    $region39: #{_lambda_.1} parent=1 // pred_check_branch
      %58 = sbr.rel (0) target = $region41
    $region40: #{_lambda_.1} parent=1 // pred_region
      _
    $region41: #{_lambda_.1} parent=1 // pred_fallthru
      _
    // Predicated region
    $region42: #{_lambda_.1} parent=1 // pred_check
      _
    $region43: #{_lambda_.1} parent=1 // pred_check_branch
      %60 = sbr.rel (0) target = $region45
    $region44: #{_lambda_.1} parent=1 // pred_region
      %62 = dma.done [#allocation3], 4096
    $region45: #{_lambda_.1} parent=1 // pred_fallthru
      _
    // Predicated region
    $region46: #{_lambda_.1} parent=1 // pred_check
      _
    $region47: #{_lambda_.1} parent=1 // pred_check_branch
      %64 = sbr.rel (0) target = $region49
    $region48: #{_lambda_.1} parent=1 // pred_region
      %66 = dma.done [#allocation5], 512
    $region49: #{_lambda_.1} parent=1 // pred_fallthru
      _
    %v67 = vld [vmem:[%s0] sm:$0xff]
    %v68 = vld [vmem:[%s0 + $0x8] sm:$0xff]
    %v69 = vld [vmem:[%s0 + $0x10] sm:$0xff]
    %v70 = vld [vmem:[%s0 + $0x18] sm:$0xff]
    %v71 = vld [vmem:[%s0 + $0x20] sm:$0xff]
    %v72 = vld [vmem:[%s0 + $0x28] sm:$0xff]
    %v73 = vld [vmem:[%s0 + $0x30] sm:$0xff]
    %v74 = vld [vmem:[%s0 + $0x38] sm:$0xff]
    %v75 = vld [vmem:[%s0 + $0x40] sm:$0xff]
    %v76 = vld [vmem:[%s0 + $0x48] sm:$0xff]
    %v77 = vld [vmem:[%s0 + $0x50] sm:$0xff]
    %v78 = vld [vmem:[%s0 + $0x58] sm:$0xff]
    %v79 = vld [vmem:[%s0 + $0x60] sm:$0xff]
    %v80 = vld [vmem:[%s0 + $0x68] sm:$0xff]
    %v81 = vld [vmem:[%s0 + $0x70] sm:$0xff]
    %v82 = vld [vmem:[%s0 + $0x78] sm:$0xff]
    %vm83 = vcmask 261120
    %v84 = vsel %vm83, %v67, 0.0
    %85 = vadd.xlane.f32.xlu0 %v84
    %v86 = vpop.xlane.xlu0 %85
    %v87 = vsel %vm83, %v68, 0.0
    %88 = vadd.xlane.f32.xlu0 %v87
    %v89 = vpop.xlane.xlu0 %88
    %v90 = vsel %vm83, %v69, 0.0
    %91 = vadd.xlane.f32.xlu0 %v90
    %v92 = vpop.xlane.xlu0 %91
    %v93 = vsel %vm83, %v70, 0.0
    %94 = vadd.xlane.f32.xlu0 %v93
    %v95 = vpop.xlane.xlu0 %94
    %v96 = vsel %vm83, %v71, 0.0
    %97 = vadd.xlane.f32.xlu0 %v96
    %v98 = vpop.xlane.xlu0 %97
    %v99 = vsel %vm83, %v72, 0.0
    %100 = vadd.xlane.f32.xlu0 %v99
    %v101 = vpop.xlane.xlu0 %100
    %v102 = vsel %vm83, %v73, 0.0
    %103 = vadd.xlane.f32.xlu0 %v102
    %v104 = vpop.xlane.xlu0 %103
    %v105 = vsel %vm83, %v74, 0.0
    %106 = vadd.xlane.f32.xlu0 %v105
    %v107 = vpop.xlane.xlu0 %106
    %v108 = vsel %vm83, %v75, 0.0
    %109 = vadd.xlane.f32.xlu0 %v108
    %v110 = vpop.xlane.xlu0 %109
    %v111 = vsel %vm83, %v76, 0.0
    %112 = vadd.xlane.f32.xlu0 %v111
    %v113 = vpop.xlane.xlu0 %112
    %v114 = vsel %vm83, %v77, 0.0
    %115 = vadd.xlane.f32.xlu0 %v114
    %v116 = vpop.xlane.xlu0 %115
    %v117 = vsel %vm83, %v78, 0.0
    %118 = vadd.xlane.f32.xlu0 %v117
    %v119 = vpop.xlane.xlu0 %118
    %v120 = vsel %vm83, %v79, 0.0
    %121 = vadd.xlane.f32.xlu0 %v120
    %v122 = vpop.xlane.xlu0 %121
    %v123 = vsel %vm83, %v80, 0.0
    %124 = vadd.xlane.f32.xlu0 %v123
    %v125 = vpop.xlane.xlu0 %124
    %v126 = vsel %vm83, %v81, 0.0
    %127 = vadd.xlane.f32.xlu0 %v126
    %v128 = vpop.xlane.xlu0 %127
    %v129 = vsel %vm83, %v82, 0.0
    %130 = vadd.xlane.f32.xlu0 %v129
    %v131 = vpop.xlane.xlu0 %130
    %v132 = vrcp.pop 32.0
    %v133 = vmul.f32 32.0, %v132
    %v134 = vsub.f32 1.0, %v133
    %v135 = vmul.f32 %v132, %v134
    %v136 = vadd.f32 %v132, %v135
    %vm137 = vweird.f32 %v132
    %v138 = vsel %vm137, %v132, %v136
    %v139 = vmul.f32 %v86, %v138
    %v140 = vmul.f32 %v89, %v138
    %v141 = vmul.f32 %v92, %v138
    %v142 = vmul.f32 %v95, %v138
    %v143 = vmul.f32 %v98, %v138
    %v144 = vmul.f32 %v101, %v138
    %v145 = vmul.f32 %v104, %v138
    %v146 = vmul.f32 %v107, %v138
    %v147 = vmul.f32 %v110, %v138
    %v148 = vmul.f32 %v113, %v138
    %v149 = vmul.f32 %v116, %v138
    %v150 = vmul.f32 %v119, %v138
    %v151 = vmul.f32 %v122, %v138
    %v152 = vmul.f32 %v125, %v138
    %v153 = vmul.f32 %v128, %v138
    %v154 = vmul.f32 %v131, %v138
    %v155 = vsub.f32 %v67, %v139
    %v156 = vsub.f32 %v68, %v140
    %v157 = vsub.f32 %v69, %v141
    %v158 = vsub.f32 %v70, %v142
    %v159 = vsub.f32 %v71, %v143
    %v160 = vsub.f32 %v72, %v144
    %v161 = vsub.f32 %v73, %v145
    %v162 = vsub.f32 %v74, %v146
    %v163 = vsub.f32 %v75, %v147
    %v164 = vsub.f32 %v76, %v148
    %v165 = vsub.f32 %v77, %v149
    %v166 = vsub.f32 %v78, %v150
    %v167 = vsub.f32 %v79, %v151
    %v168 = vsub.f32 %v80, %v152
    %v169 = vsub.f32 %v81, %v153
    %v170 = vsub.f32 %v82, %v154
    %v171 = vmul.f32 %v155, %v155
    %v172 = vmul.f32 %v156, %v156
    %v173 = vmul.f32 %v157, %v157
    %v174 = vmul.f32 %v158, %v158
    %v175 = vmul.f32 %v159, %v159
    %v176 = vmul.f32 %v160, %v160
    %v177 = vmul.f32 %v161, %v161
    %v178 = vmul.f32 %v162, %v162
    %v179 = vmul.f32 %v163, %v163
    %v180 = vmul.f32 %v164, %v164
    %v181 = vmul.f32 %v165, %v165
    %v182 = vmul.f32 %v166, %v166
    %v183 = vmul.f32 %v167, %v167
    %v184 = vmul.f32 %v168, %v168
    %v185 = vmul.f32 %v169, %v169
    %v186 = vmul.f32 %v170, %v170
    %v187 = vsel %vm83, %v171, 0.0
    %188 = vadd.xlane.f32.xlu0 %v187
    %v189 = vpop.xlane.xlu0 %188
    %v190 = vsel %vm83, %v172, 0.0
    %191 = vadd.xlane.f32.xlu0 %v190
    %v192 = vpop.xlane.xlu0 %191
    %v193 = vsel %vm83, %v173, 0.0
    %194 = vadd.xlane.f32.xlu0 %v193
    %v195 = vpop.xlane.xlu0 %194
    %v196 = vsel %vm83, %v174, 0.0
    %197 = vadd.xlane.f32.xlu0 %v196
    %v198 = vpop.xlane.xlu0 %197
    %v199 = vsel %vm83, %v175, 0.0
    %200 = vadd.xlane.f32.xlu0 %v199
    %v201 = vpop.xlane.xlu0 %200
    %v202 = vsel %vm83, %v176, 0.0
    %203 = vadd.xlane.f32.xlu0 %v202
    %v204 = vpop.xlane.xlu0 %203
    %v205 = vsel %vm83, %v177, 0.0
    %206 = vadd.xlane.f32.xlu0 %v205
    %v207 = vpop.xlane.xlu0 %206
    %v208 = vsel %vm83, %v178, 0.0
    %209 = vadd.xlane.f32.xlu0 %v208
    %v210 = vpop.xlane.xlu0 %209
    %v211 = vsel %vm83, %v179, 0.0
    %212 = vadd.xlane.f32.xlu0 %v211
    %v213 = vpop.xlane.xlu0 %212
    %v214 = vsel %vm83, %v180, 0.0
    %215 = vadd.xlane.f32.xlu0 %v214
    %v216 = vpop.xlane.xlu0 %215
    %v217 = vsel %vm83, %v181, 0.0
    %218 = vadd.xlane.f32.xlu0 %v217
    %v219 = vpop.xlane.xlu0 %218
    %v220 = vsel %vm83, %v182, 0.0
    %221 = vadd.xlane.f32.xlu0 %v220
    %v222 = vpop.xlane.xlu0 %221
    %v223 = vsel %vm83, %v183, 0.0
    %224 = vadd.xlane.f32.xlu0 %v223
    %v225 = vpop.xlane.xlu0 %224
    %v226 = vsel %vm83, %v184, 0.0
    %227 = vadd.xlane.f32.xlu0 %v226
    %v228 = vpop.xlane.xlu0 %227
    %v229 = vsel %vm83, %v185, 0.0
    %230 = vadd.xlane.f32.xlu0 %v229
    %v231 = vpop.xlane.xlu0 %230
    %v232 = vsel %vm83, %v186, 0.0
    %233 = vadd.xlane.f32.xlu0 %v232
    %v234 = vpop.xlane.xlu0 %233
    %v235 = vmul.f32 %v189, %v138
    %v236 = vmul.f32 %v192, %v138
    %v237 = vmul.f32 %v195, %v138
    %v238 = vmul.f32 %v198, %v138
    %v239 = vmul.f32 %v201, %v138
    %v240 = vmul.f32 %v204, %v138
    %v241 = vmul.f32 %v207, %v138
    %v242 = vmul.f32 %v210, %v138
    %v243 = vmul.f32 %v213, %v138
    %v244 = vmul.f32 %v216, %v138
    %v245 = vmul.f32 %v219, %v138
    %v246 = vmul.f32 %v222, %v138
    %v247 = vmul.f32 %v225, %v138
    %v248 = vmul.f32 %v228, %v138
    %v249 = vmul.f32 %v231, %v138
    %v250 = vmul.f32 %v234, %v138
    %v251 = vadd.f32 %v235, 1e-05
    %v252 = vadd.f32 %v236, 1e-05
    %v253 = vadd.f32 %v237, 1e-05
    %v254 = vadd.f32 %v238, 1e-05
    %v255 = vadd.f32 %v239, 1e-05
    %v256 = vadd.f32 %v240, 1e-05
    %v257 = vadd.f32 %v241, 1e-05
    %v258 = vadd.f32 %v242, 1e-05
    %v259 = vadd.f32 %v243, 1e-05
    %v260 = vadd.f32 %v244, 1e-05
    %v261 = vadd.f32 %v245, 1e-05
    %v262 = vadd.f32 %v246, 1e-05
    %v263 = vadd.f32 %v247, 1e-05
    %v264 = vadd.f32 %v248, 1e-05
    %v265 = vadd.f32 %v249, 1e-05
    %v266 = vadd.f32 %v250, 1e-05
    %v267 = vrsqrt.pop %v251
    %v268 = vmul.f32 %v267, %v251
    %v269 = vmul.f32 %v268, %v267
    %v270 = vmul.f32 0.5, %v269
    %v271 = vsub.f32 1.5, %v270
    %v272 = vmul.f32 %v267, %v271
    %vm273 = vweird.f32 %v251
    %vm274 = vweird.f32 %v267
    %vm275 = vmor %vm273, %vm274
    %v276 = vsel %vm275, %v267, %v272
    %v277 = vrsqrt.pop %v252
    %v278 = vmul.f32 %v277, %v252
    %v279 = vmul.f32 %v278, %v277
    %v280 = vmul.f32 0.5, %v279
    %v281 = vsub.f32 1.5, %v280
    %v282 = vmul.f32 %v277, %v281
    %vm283 = vweird.f32 %v252
    %vm284 = vweird.f32 %v277
    %vm285 = vmor %vm283, %vm284
    %v286 = vsel %vm285, %v277, %v282
    %v287 = vrsqrt.pop %v253
    %v288 = vmul.f32 %v287, %v253
    %v289 = vmul.f32 %v288, %v287
    %v290 = vmul.f32 0.5, %v289
    %v291 = vsub.f32 1.5, %v290
    %v292 = vmul.f32 %v287, %v291
    %vm293 = vweird.f32 %v253
    %vm294 = vweird.f32 %v287
    %vm295 = vmor %vm293, %vm294
    %v296 = vsel %vm295, %v287, %v292
    %v297 = vrsqrt.pop %v254
    %v298 = vmul.f32 %v297, %v254
    %v299 = vmul.f32 %v298, %v297
    %v300 = vmul.f32 0.5, %v299
    %v301 = vsub.f32 1.5, %v300
    %v302 = vmul.f32 %v297, %v301
    %vm303 = vweird.f32 %v254
    %vm304 = vweird.f32 %v297
    %vm305 = vmor %vm303, %vm304
    %v306 = vsel %vm305, %v297, %v302
    %v307 = vrsqrt.pop %v255
    %v308 = vmul.f32 %v307, %v255
    %v309 = vmul.f32 %v308, %v307
    %v310 = vmul.f32 0.5, %v309
    %v311 = vsub.f32 1.5, %v310
    %v312 = vmul.f32 %v307, %v311
    %vm313 = vweird.f32 %v255
    %vm314 = vweird.f32 %v307
    %vm315 = vmor %vm313, %vm314
    %v316 = vsel %vm315, %v307, %v312
    %v317 = vrsqrt.pop %v256
    %v318 = vmul.f32 %v317, %v256
    %v319 = vmul.f32 %v318, %v317
    %v320 = vmul.f32 0.5, %v319
    %v321 = vsub.f32 1.5, %v320
    %v322 = vmul.f32 %v317, %v321
    %vm323 = vweird.f32 %v256
    %vm324 = vweird.f32 %v317
    %vm325 = vmor %vm323, %vm324
    %v326 = vsel %vm325, %v317, %v322
    %v327 = vrsqrt.pop %v257
    %v328 = vmul.f32 %v327, %v257
    %v329 = vmul.f32 %v328, %v327
    %v330 = vmul.f32 0.5, %v329
    %v331 = vsub.f32 1.5, %v330
    %v332 = vmul.f32 %v327, %v331
    %vm333 = vweird.f32 %v257
    %vm334 = vweird.f32 %v327
    %vm335 = vmor %vm333, %vm334
    %v336 = vsel %vm335, %v327, %v332
    %v337 = vrsqrt.pop %v258
    %v338 = vmul.f32 %v337, %v258
    %v339 = vmul.f32 %v338, %v337
    %v340 = vmul.f32 0.5, %v339
    %v341 = vsub.f32 1.5, %v340
    %v342 = vmul.f32 %v337, %v341
    %vm343 = vweird.f32 %v258
    %vm344 = vweird.f32 %v337
    %vm345 = vmor %vm343, %vm344
    %v346 = vsel %vm345, %v337, %v342
    %v347 = vrsqrt.pop %v259
    %v348 = vmul.f32 %v347, %v259
    %v349 = vmul.f32 %v348, %v347
    %v350 = vmul.f32 0.5, %v349
    %v351 = vsub.f32 1.5, %v350
    %v352 = vmul.f32 %v347, %v351
    %vm353 = vweird.f32 %v259
    %vm354 = vweird.f32 %v347
    %vm355 = vmor %vm353, %vm354
    %v356 = vsel %vm355, %v347, %v352
    %v357 = vrsqrt.pop %v260
    %v358 = vmul.f32 %v357, %v260
    %v359 = vmul.f32 %v358, %v357
    %v360 = vmul.f32 0.5, %v359
    %v361 = vsub.f32 1.5, %v360
    %v362 = vmul.f32 %v357, %v361
    %vm363 = vweird.f32 %v260
    %vm364 = vweird.f32 %v357
    %vm365 = vmor %vm363, %vm364
    %v366 = vsel %vm365, %v357, %v362
    %v367 = vrsqrt.pop %v261
    %v368 = vmul.f32 %v367, %v261
    %v369 = vmul.f32 %v368, %v367
    %v370 = vmul.f32 0.5, %v369
    %v371 = vsub.f32 1.5, %v370
    %v372 = vmul.f32 %v367, %v371
    %vm373 = vweird.f32 %v261
    %vm374 = vweird.f32 %v367
    %vm375 = vmor %vm373, %vm374
    %v376 = vsel %vm375, %v367, %v372
    %v377 = vrsqrt.pop %v262
    %v378 = vmul.f32 %v377, %v262
    %v379 = vmul.f32 %v378, %v377
    %v380 = vmul.f32 0.5, %v379
    %v381 = vsub.f32 1.5, %v380
    %v382 = vmul.f32 %v377, %v381
    %vm383 = vweird.f32 %v262
    %vm384 = vweird.f32 %v377
    %vm385 = vmor %vm383, %vm384
    %v386 = vsel %vm385, %v377, %v382
    %v387 = vrsqrt.pop %v263
    %v388 = vmul.f32 %v387, %v263
    %v389 = vmul.f32 %v388, %v387
    %v390 = vmul.f32 0.5, %v389
    %v391 = vsub.f32 1.5, %v390
    %v392 = vmul.f32 %v387, %v391
    %vm393 = vweird.f32 %v263
    %vm394 = vweird.f32 %v387
    %vm395 = vmor %vm393, %vm394
    %v396 = vsel %vm395, %v387, %v392
    %v397 = vrsqrt.pop %v264
    %v398 = vmul.f32 %v397, %v264
    %v399 = vmul.f32 %v398, %v397
    %v400 = vmul.f32 0.5, %v399
    %v401 = vsub.f32 1.5, %v400
    %v402 = vmul.f32 %v397, %v401
    %vm403 = vweird.f32 %v264
    %vm404 = vweird.f32 %v397
    %vm405 = vmor %vm403, %vm404
    %v406 = vsel %vm405, %v397, %v402
    %v407 = vrsqrt.pop %v265
    %v408 = vmul.f32 %v407, %v265
    %v409 = vmul.f32 %v408, %v407
    %v410 = vmul.f32 0.5, %v409
    %v411 = vsub.f32 1.5, %v410
    %v412 = vmul.f32 %v407, %v411
    %vm413 = vweird.f32 %v265
    %vm414 = vweird.f32 %v407
    %vm415 = vmor %vm413, %vm414
    %v416 = vsel %vm415, %v407, %v412
    %v417 = vrsqrt.pop %v266
    %v418 = vmul.f32 %v417, %v266
    %v419 = vmul.f32 %v418, %v417
    %v420 = vmul.f32 0.5, %v419
    %v421 = vsub.f32 1.5, %v420
    %v422 = vmul.f32 %v417, %v421
    %vm423 = vweird.f32 %v266
    %vm424 = vweird.f32 %v417
    %vm425 = vmor %vm423, %vm424
    %v426 = vsel %vm425, %v417, %v422
    %v427 = vmul.f32 %v155, %v276
    %v428 = vmul.f32 %v156, %v286
    %v429 = vmul.f32 %v157, %v296
    %v430 = vmul.f32 %v158, %v306
    %v431 = vmul.f32 %v159, %v316
    %v432 = vmul.f32 %v160, %v326
    %v433 = vmul.f32 %v161, %v336
    %v434 = vmul.f32 %v162, %v346
    %v435 = vmul.f32 %v163, %v356
    %v436 = vmul.f32 %v164, %v366
    %v437 = vmul.f32 %v165, %v376
    %v438 = vmul.f32 %v166, %v386
    %v439 = vmul.f32 %v167, %v396
    %v440 = vmul.f32 %v168, %v406
    %v441 = vmul.f32 %v169, %v416
    %v442 = vmul.f32 %v170, %v426
    %v443 = vld [vmem:[#allocation4] sm:$0xff]
    %v444 = vld [vmem:[#allocation4 + $0x8] sm:$0xff]
    %v445 = vld [vmem:[#allocation4 + $0x10] sm:$0xff]
    %v446 = vld [vmem:[#allocation4 + $0x18] sm:$0xff]
    %v447 = vld [vmem:[%s3] sm:$0x1]
    %v449 = vperm.slane %v447, 0
    %v452 = vsel %vm83, %v427, 0
    %v455 = vsel %vm83, %v428, 0
    %v458 = vsel %vm83, %v429, 0
    %v461 = vsel %vm83, %v430, 0
    %v464 = vsel %vm83, %v431, 0
    %v467 = vsel %vm83, %v432, 0
    %v470 = vsel %vm83, %v433, 0
    %v473 = vsel %vm83, %v434, 0
    %v476 = vsel %vm83, %v435, 0
    %v479 = vsel %vm83, %v436, 0
    %v482 = vsel %vm83, %v437, 0
    %v485 = vsel %vm83, %v438, 0
    %v488 = vsel %vm83, %v439, 0
    %v491 = vsel %vm83, %v440, 0
    %v494 = vsel %vm83, %v441, 0
    %v497 = vsel %vm83, %v442, 0
    %499 = vmatpush.msra.mxu0 0.0
    %500 = vmatpush.msra.mxu0 0.0
    %501 = vmatpush.msra.mxu0 0.0
    %502 = vmatpush.msra.mxu0 0.0
    %503 = vmatpush.msra.mxu0 0.0
    %504 = vmatpush.msra.mxu0 0.0
    %505 = vmatpush.msra.mxu0 0.0
    %506 = vmatpush.msra.mxu0 0.0
    %507 = vmatpush.msra.mxu0 0.0
    %508 = vmatpush.msra.mxu0 0.0
    %509 = vmatpush.msra.mxu0 0.0
    %510 = vmatpush.msra.mxu0 0.0
    %511 = vmatpush.msra.mxu0 %v446
    %512 = vmatpush.msra.mxu0 %v445
    %513 = vmatpush.msra.mxu0 %v444
    %514 = vmatpush.msra.mxu0 %v443
    %515 = vmatmul.f32.gmra.mxu0 %v452
    %v516 = vpop.f32.mrf.mxu0
    %v517 = vadd.f32 %v449, %v516
    %518 = vmatmul.f32.gmra.mxu0 %v455
    %v519 = vpop.f32.mrf.mxu0
    %v520 = vadd.f32 %v449, %v519
    %521 = vmatmul.f32.gmra.mxu0 %v458
    %v522 = vpop.f32.mrf.mxu0
    %v523 = vadd.f32 %v449, %v522
    %524 = vmatmul.f32.gmra.mxu0 %v461
    %v525 = vpop.f32.mrf.mxu0
    %v526 = vadd.f32 %v449, %v525
    %527 = vmatmul.f32.gmra.mxu0 %v464
    %v528 = vpop.f32.mrf.mxu0
    %v529 = vadd.f32 %v449, %v528
    %530 = vmatmul.f32.gmra.mxu0 %v467
    %v531 = vpop.f32.mrf.mxu0
    %v532 = vadd.f32 %v449, %v531
    %533 = vmatmul.f32.gmra.mxu0 %v470
    %v534 = vpop.f32.mrf.mxu0
    %v535 = vadd.f32 %v449, %v534
    %536 = vmatmul.f32.gmra.mxu0 %v473
    %v537 = vpop.f32.mrf.mxu0
    %v538 = vadd.f32 %v449, %v537
    %539 = vmatmul.f32.gmra.mxu0 %v476
    %v540 = vpop.f32.mrf.mxu0
    %v541 = vadd.f32 %v449, %v540
    %542 = vmatmul.f32.gmra.mxu0 %v479
    %v543 = vpop.f32.mrf.mxu0
    %v544 = vadd.f32 %v449, %v543
    %545 = vmatmul.f32.gmra.mxu0 %v482
    %v546 = vpop.f32.mrf.mxu0
    %v547 = vadd.f32 %v449, %v546
    %548 = vmatmul.f32.gmra.mxu0 %v485
    %v549 = vpop.f32.mrf.mxu0
    %v550 = vadd.f32 %v449, %v549
    %551 = vmatmul.f32.gmra.mxu0 %v488
    %v552 = vpop.f32.mrf.mxu0
    %v553 = vadd.f32 %v449, %v552
    %554 = vmatmul.f32.gmra.mxu0 %v491
    %v555 = vpop.f32.mrf.mxu0
    %v556 = vadd.f32 %v449, %v555
    %557 = vmatmul.f32.gmra.mxu0 %v494
    %v558 = vpop.f32.mrf.mxu0
    %v559 = vadd.f32 %v449, %v558
    %560 = vmatmul.f32.gmra.mxu0 %v497
    %v561 = vpop.f32.mrf.mxu0
    %v562 = vadd.f32 %v449, %v561
    %563 = vdwg.mxu0
    %580 = vrot.lane.b32.xlu0 %v517, 120
    %v581 = vpop.permute.xlu0 %580
    %582 = vrot.lane.b32.xlu0 %v520, 120
    %v583 = vpop.permute.xlu0 %582
    %584 = vrot.lane.b32.xlu0 %v523, 120
    %v585 = vpop.permute.xlu0 %584
    %586 = vrot.lane.b32.xlu0 %v526, 120
    %v587 = vpop.permute.xlu0 %586
    %588 = vrot.lane.b32.xlu0 %v529, 120
    %v589 = vpop.permute.xlu0 %588
    %590 = vrot.lane.b32.xlu0 %v532, 120
    %v591 = vpop.permute.xlu0 %590
    %592 = vrot.lane.b32.xlu0 %v535, 120
    %v593 = vpop.permute.xlu0 %592
    %594 = vrot.lane.b32.xlu0 %v538, 120
    %v595 = vpop.permute.xlu0 %594
    %596 = vrot.lane.b32.xlu0 %v541, 120
    %v597 = vpop.permute.xlu0 %596
    %598 = vrot.lane.b32.xlu0 %v544, 120
    %v599 = vpop.permute.xlu0 %598
    %600 = vrot.lane.b32.xlu0 %v547, 120
    %v601 = vpop.permute.xlu0 %600
    %602 = vrot.lane.b32.xlu0 %v550, 120
    %v603 = vpop.permute.xlu0 %602
    %604 = vrot.lane.b32.xlu0 %v553, 120
    %v605 = vpop.permute.xlu0 %604
    %606 = vrot.lane.b32.xlu0 %v556, 120
    %v607 = vpop.permute.xlu0 %606
    %608 = vrot.lane.b32.xlu0 %v559, 120
    %v609 = vpop.permute.xlu0 %608
    %610 = vrot.lane.b32.xlu0 %v562, 120
    %v611 = vpop.permute.xlu0 %610
    %612 = vrot.lane.b32.xlu0 %v517, 112
    %v613 = vpop.permute.xlu0 %612
    %614 = vrot.lane.b32.xlu0 %v520, 112
    %v615 = vpop.permute.xlu0 %614
    %616 = vrot.lane.b32.xlu0 %v523, 112
    %v617 = vpop.permute.xlu0 %616
    %618 = vrot.lane.b32.xlu0 %v526, 112
    %v619 = vpop.permute.xlu0 %618
    %620 = vrot.lane.b32.xlu0 %v529, 112
    %v621 = vpop.permute.xlu0 %620
    %622 = vrot.lane.b32.xlu0 %v532, 112
    %v623 = vpop.permute.xlu0 %622
    %624 = vrot.lane.b32.xlu0 %v535, 112
    %v625 = vpop.permute.xlu0 %624
    %626 = vrot.lane.b32.xlu0 %v538, 112
    %v627 = vpop.permute.xlu0 %626
    %628 = vrot.lane.b32.xlu0 %v541, 112
    %v629 = vpop.permute.xlu0 %628
    %630 = vrot.lane.b32.xlu0 %v544, 112
    %v631 = vpop.permute.xlu0 %630
    %632 = vrot.lane.b32.xlu0 %v547, 112
    %v633 = vpop.permute.xlu0 %632
    %634 = vrot.lane.b32.xlu0 %v550, 112
    %v635 = vpop.permute.xlu0 %634
    %636 = vrot.lane.b32.xlu0 %v553, 112
    %v637 = vpop.permute.xlu0 %636
    %638 = vrot.lane.b32.xlu0 %v556, 112
    %v639 = vpop.permute.xlu0 %638
    %640 = vrot.lane.b32.xlu0 %v559, 112
    %v641 = vpop.permute.xlu0 %640
    %642 = vrot.lane.b32.xlu0 %v562, 112
    %v643 = vpop.permute.xlu0 %642
    %644 = vrot.lane.b32.xlu0 %v517, 104
    %v645 = vpop.permute.xlu0 %644
    %646 = vrot.lane.b32.xlu0 %v520, 104
    %v647 = vpop.permute.xlu0 %646
    %648 = vrot.lane.b32.xlu0 %v523, 104
    %v649 = vpop.permute.xlu0 %648
    %650 = vrot.lane.b32.xlu0 %v526, 104
    %v651 = vpop.permute.xlu0 %650
    %652 = vrot.lane.b32.xlu0 %v529, 104
    %v653 = vpop.permute.xlu0 %652
    %654 = vrot.lane.b32.xlu0 %v532, 104
    %v655 = vpop.permute.xlu0 %654
    %656 = vrot.lane.b32.xlu0 %v535, 104
    %v657 = vpop.permute.xlu0 %656
    %658 = vrot.lane.b32.xlu0 %v538, 104
    %v659 = vpop.permute.xlu0 %658
    %660 = vrot.lane.b32.xlu0 %v541, 104
    %v661 = vpop.permute.xlu0 %660
    %662 = vrot.lane.b32.xlu0 %v544, 104
    %v663 = vpop.permute.xlu0 %662
    %664 = vrot.lane.b32.xlu0 %v547, 104
    %v665 = vpop.permute.xlu0 %664
    %666 = vrot.lane.b32.xlu0 %v550, 104
    %v667 = vpop.permute.xlu0 %666
    %668 = vrot.lane.b32.xlu0 %v553, 104
    %v669 = vpop.permute.xlu0 %668
    %670 = vrot.lane.b32.xlu0 %v556, 104
    %v671 = vpop.permute.xlu0 %670
    %672 = vrot.lane.b32.xlu0 %v559, 104
    %v673 = vpop.permute.xlu0 %672
    %674 = vrot.lane.b32.xlu0 %v562, 104
    %v675 = vpop.permute.xlu0 %674
    %v676 = vld [vmem:[#allocation2] sm:$0xf]
    %v677 = vld [vmem:[#allocation2 + $0x4] sm:$0xf]
    %v678 = vld [vmem:[#allocation2 + $0x8] sm:$0xf]
    %v679 = vld [vmem:[#allocation2 + $0xc] sm:$0xf]
    %v680 = vld [vmem:[#allocation2 + $0x10] sm:$0xf]
    %v681 = vld [vmem:[#allocation2 + $0x14] sm:$0xf]
    %v682 = vld [vmem:[#allocation2 + $0x18] sm:$0xf]
    %v683 = vld [vmem:[#allocation2 + $0x1c] sm:$0xf]
    %v684 = vld [vmem:[#allocation2 + $0x20] sm:$0xf]
    %v685 = vld [vmem:[#allocation2 + $0x24] sm:$0xf]
    %v686 = vld [vmem:[#allocation2 + $0x28] sm:$0xf]
    %v687 = vld [vmem:[#allocation2 + $0x2c] sm:$0xf]
    %v688 = vld [vmem:[#allocation2 + $0x30] sm:$0xf]
    %v689 = vld [vmem:[#allocation2 + $0x34] sm:$0xf]
    %v690 = vld [vmem:[#allocation2 + $0x38] sm:$0xf]
    %v691 = vld [vmem:[#allocation2 + $0x3c] sm:$0xf]
    %v692 = vld [vmem:[#allocation2 + $0x40] sm:$0xf]
    %v693 = vld [vmem:[#allocation2 + $0x44] sm:$0xf]
    %v694 = vld [vmem:[#allocation2 + $0x48] sm:$0xf]
    %v695 = vld [vmem:[#allocation2 + $0x4c] sm:$0xf]
    %v696 = vld [vmem:[#allocation2 + $0x50] sm:$0xf]
    %v697 = vld [vmem:[#allocation2 + $0x54] sm:$0xf]
    %v698 = vld [vmem:[#allocation2 + $0x58] sm:$0xf]
    %v699 = vld [vmem:[#allocation2 + $0x5c] sm:$0xf]
    %v700 = vld [vmem:[#allocation2 + $0x60] sm:$0xf]
    %v701 = vld [vmem:[#allocation2 + $0x64] sm:$0xf]
    %v702 = vld [vmem:[#allocation2 + $0x68] sm:$0xf]
    %v703 = vld [vmem:[#allocation2 + $0x6c] sm:$0xf]
    %v704 = vld [vmem:[#allocation2 + $0x70] sm:$0xf]
    %v705 = vld [vmem:[#allocation2 + $0x74] sm:$0xf]
    %v706 = vld [vmem:[#allocation2 + $0x78] sm:$0xf]
    %v707 = vld [vmem:[#allocation2 + $0x7c] sm:$0xf]
    %v708 = vld [vmem:[#allocation2 + $0x80] sm:$0xf]
    %v709 = vld [vmem:[#allocation2 + $0x84] sm:$0xf]
    %v710 = vld [vmem:[#allocation2 + $0x88] sm:$0xf]
    %v711 = vld [vmem:[#allocation2 + $0x8c] sm:$0xf]
    %v712 = vld [vmem:[#allocation2 + $0x90] sm:$0xf]
    %v713 = vld [vmem:[#allocation2 + $0x94] sm:$0xf]
    %v714 = vld [vmem:[#allocation2 + $0x98] sm:$0xf]
    %v715 = vld [vmem:[#allocation2 + $0x9c] sm:$0xf]
    %v716 = vld [vmem:[#allocation2 + $0xa0] sm:$0xf]
    %v717 = vld [vmem:[#allocation2 + $0xa4] sm:$0xf]
    %v718 = vld [vmem:[#allocation2 + $0xa8] sm:$0xf]
    %v719 = vld [vmem:[#allocation2 + $0xac] sm:$0xf]
    %v720 = vld [vmem:[#allocation2 + $0xb0] sm:$0xf]
    %v721 = vld [vmem:[#allocation2 + $0xb4] sm:$0xf]
    %v722 = vld [vmem:[#allocation2 + $0xb8] sm:$0xf]
    %v723 = vld [vmem:[#allocation2 + $0xbc] sm:$0xf]
    %v724 = vld [vmem:[#allocation2 + $0xc0] sm:$0xf]
    %v725 = vld [vmem:[#allocation2 + $0xc4] sm:$0xf]
    %v726 = vld [vmem:[#allocation2 + $0xc8] sm:$0xf]
    %v727 = vld [vmem:[#allocation2 + $0xcc] sm:$0xf]
    %v728 = vld [vmem:[#allocation2 + $0xd0] sm:$0xf]
    %v729 = vld [vmem:[#allocation2 + $0xd4] sm:$0xf]
    %v730 = vld [vmem:[#allocation2 + $0xd8] sm:$0xf]
    %v731 = vld [vmem:[#allocation2 + $0xdc] sm:$0xf]
    %v732 = vld [vmem:[#allocation2 + $0xe0] sm:$0xf]
    %v733 = vld [vmem:[#allocation2 + $0xe4] sm:$0xf]
    %v734 = vld [vmem:[#allocation2 + $0xe8] sm:$0xf]
    %v735 = vld [vmem:[#allocation2 + $0xec] sm:$0xf]
    %v736 = vld [vmem:[#allocation2 + $0xf0] sm:$0xf]
    %v737 = vld [vmem:[#allocation2 + $0xf4] sm:$0xf]
    %v738 = vld [vmem:[#allocation2 + $0xf8] sm:$0xf]
    %v739 = vld [vmem:[#allocation2 + $0xfc] sm:$0xf]
    %v740 = vunpack.c.l.bf16 %v676
    %v741 = vunpack.c.l.bf16 %v677
    %v742 = vunpack.c.l.bf16 %v678
    %v743 = vunpack.c.l.bf16 %v679
    %v744 = vunpack.c.l.bf16 %v680
    %v745 = vunpack.c.l.bf16 %v681
    %v746 = vunpack.c.l.bf16 %v682
    %v747 = vunpack.c.l.bf16 %v683
    %v748 = vunpack.c.l.bf16 %v684
    %v749 = vunpack.c.l.bf16 %v685
    %v750 = vunpack.c.l.bf16 %v686
    %v751 = vunpack.c.l.bf16 %v687
    %v752 = vunpack.c.l.bf16 %v688
    %v753 = vunpack.c.l.bf16 %v689
    %v754 = vunpack.c.l.bf16 %v690
    %v755 = vunpack.c.l.bf16 %v691
    %v756 = vunpack.c.l.bf16 %v692
    %v757 = vunpack.c.l.bf16 %v693
    %v758 = vunpack.c.l.bf16 %v694
    %v759 = vunpack.c.l.bf16 %v695
    %v760 = vunpack.c.l.bf16 %v696
    %v761 = vunpack.c.l.bf16 %v697
    %v762 = vunpack.c.l.bf16 %v698
    %v763 = vunpack.c.l.bf16 %v699
    %v764 = vunpack.c.l.bf16 %v700
    %v765 = vunpack.c.l.bf16 %v701
    %v766 = vunpack.c.l.bf16 %v702
    %v767 = vunpack.c.l.bf16 %v703
    %v768 = vunpack.c.l.bf16 %v704
    %v769 = vunpack.c.l.bf16 %v705
    %v770 = vunpack.c.l.bf16 %v706
    %v771 = vunpack.c.l.bf16 %v707
    %v772 = vunpack.c.l.bf16 %v708
    %v773 = vunpack.c.l.bf16 %v709
    %v774 = vunpack.c.l.bf16 %v710
    %v775 = vunpack.c.l.bf16 %v711
    %v776 = vunpack.c.l.bf16 %v712
    %v777 = vunpack.c.l.bf16 %v713
    %v778 = vunpack.c.l.bf16 %v714
    %v779 = vunpack.c.l.bf16 %v715
    %v780 = vunpack.c.l.bf16 %v716
    %v781 = vunpack.c.l.bf16 %v717
    %v782 = vunpack.c.l.bf16 %v718
    %v783 = vunpack.c.l.bf16 %v719
    %v784 = vunpack.c.l.bf16 %v720
    %v785 = vunpack.c.l.bf16 %v721
    %v786 = vunpack.c.l.bf16 %v722
    %v787 = vunpack.c.l.bf16 %v723
    %v788 = vunpack.c.l.bf16 %v724
    %v789 = vunpack.c.l.bf16 %v725
    %v790 = vunpack.c.l.bf16 %v726
    %v791 = vunpack.c.l.bf16 %v727
    %v792 = vunpack.c.l.bf16 %v728
    %v793 = vunpack.c.l.bf16 %v729
    %v794 = vunpack.c.l.bf16 %v730
    %v795 = vunpack.c.l.bf16 %v731
    %v796 = vunpack.c.l.bf16 %v732
    %v797 = vunpack.c.l.bf16 %v733
    %v798 = vunpack.c.l.bf16 %v734
    %v799 = vunpack.c.l.bf16 %v735
    %v800 = vunpack.c.l.bf16 %v736
    %v801 = vunpack.c.l.bf16 %v737
    %v802 = vunpack.c.l.bf16 %v738
    %v803 = vunpack.c.l.bf16 %v739
    %804 = vrot.lane.b32.xlu0 %v517, 96
    %v805 = vpop.permute.xlu0 %804
    %806 = vrot.lane.b32.xlu0 %v520, 96
    %v807 = vpop.permute.xlu0 %806
    %808 = vrot.lane.b32.xlu0 %v523, 96
    %v809 = vpop.permute.xlu0 %808
    %810 = vrot.lane.b32.xlu0 %v526, 96
    %v811 = vpop.permute.xlu0 %810
    %812 = vrot.lane.b32.xlu0 %v529, 96
    %v813 = vpop.permute.xlu0 %812
    %814 = vrot.lane.b32.xlu0 %v532, 96
    %v815 = vpop.permute.xlu0 %814
    %816 = vrot.lane.b32.xlu0 %v535, 96
    %v817 = vpop.permute.xlu0 %816
    %818 = vrot.lane.b32.xlu0 %v538, 96
    %v819 = vpop.permute.xlu0 %818
    %820 = vrot.lane.b32.xlu0 %v541, 96
    %v821 = vpop.permute.xlu0 %820
    %822 = vrot.lane.b32.xlu0 %v544, 96
    %v823 = vpop.permute.xlu0 %822
    %824 = vrot.lane.b32.xlu0 %v547, 96
    %v825 = vpop.permute.xlu0 %824
    %826 = vrot.lane.b32.xlu0 %v550, 96
    %v827 = vpop.permute.xlu0 %826
    %828 = vrot.lane.b32.xlu0 %v553, 96
    %v829 = vpop.permute.xlu0 %828
    %830 = vrot.lane.b32.xlu0 %v556, 96
    %v831 = vpop.permute.xlu0 %830
    %832 = vrot.lane.b32.xlu0 %v559, 96
    %v833 = vpop.permute.xlu0 %832
    %834 = vrot.lane.b32.xlu0 %v562, 96
    %v835 = vpop.permute.xlu0 %834
    %vm836 = vcmask 64512
    %v837 = vsel %vm836, %v517, 0
    %v839 = vsel %vm836, %v520, 0
    %v841 = vsel %vm836, %v523, 0
    %v843 = vsel %vm836, %v526, 0
    %v845 = vsel %vm836, %v529, 0
    %v847 = vsel %vm836, %v532, 0
    %v849 = vsel %vm836, %v535, 0
    %v851 = vsel %vm836, %v538, 0
    %v853 = vsel %vm836, %v541, 0
    %v855 = vsel %vm836, %v544, 0
    %v857 = vsel %vm836, %v547, 0
    %v859 = vsel %vm836, %v550, 0
    %v861 = vsel %vm836, %v553, 0
    %v863 = vsel %vm836, %v556, 0
    %v865 = vsel %vm836, %v559, 0
    %v867 = vsel %vm836, %v562, 0
    %v869 = vsel %vm836, %v805, 0
    %v871 = vsel %vm836, %v807, 0
    %v873 = vsel %vm836, %v809, 0
    %v875 = vsel %vm836, %v811, 0
    %v877 = vsel %vm836, %v813, 0
    %v879 = vsel %vm836, %v815, 0
    %v881 = vsel %vm836, %v817, 0
    %v883 = vsel %vm836, %v819, 0
    %v885 = vsel %vm836, %v821, 0
    %v887 = vsel %vm836, %v823, 0
    %v889 = vsel %vm836, %v825, 0
    %v891 = vsel %vm836, %v827, 0
    %v893 = vsel %vm836, %v829, 0
    %v895 = vsel %vm836, %v831, 0
    %v897 = vsel %vm836, %v833, 0
    %v899 = vsel %vm836, %v835, 0
    %901 = vmatpush.xpose.msra.mxu0 %v899
    %902 = vmatpush.xpose.msra.mxu0 %v897
    %903 = vmatpush.xpose.msra.mxu0 %v895
    %904 = vmatpush.xpose.msra.mxu0 %v893
    %905 = vmatpush.xpose.msra.mxu0 %v891
    %906 = vmatpush.xpose.msra.mxu0 %v889
    %907 = vmatpush.xpose.msra.mxu0 %v887
    %908 = vmatpush.xpose.msra.mxu0 %v885
    %909 = vmatpush.xpose.msra.mxu0 %v883
    %910 = vmatpush.xpose.msra.mxu0 %v881
    %911 = vmatpush.xpose.msra.mxu0 %v879
    %912 = vmatpush.xpose.msra.mxu0 %v877
    %913 = vmatpush.xpose.msra.mxu0 %v875
    %914 = vmatpush.xpose.msra.mxu0 %v873
    %915 = vmatpush.xpose.msra.mxu0 %v871
    %916 = vmatpush.xpose.msra.mxu0 %v869
    %917 = vmatmul.f32.gmra.mxu0 %v837
    %v918 = vpop.f32.mrf.mxu0
    %v919 = vadd.f32 %v740, %v918
    %920 = vmatmul.f32.gmra.mxu0 %v839
    %v921 = vpop.f32.mrf.mxu0
    %v922 = vadd.f32 %v741, %v921
    %923 = vmatmul.f32.gmra.mxu0 %v841
    %v924 = vpop.f32.mrf.mxu0
    %v925 = vadd.f32 %v742, %v924
    %926 = vmatmul.f32.gmra.mxu0 %v843
    %v927 = vpop.f32.mrf.mxu0
    %v928 = vadd.f32 %v743, %v927
    %929 = vmatmul.f32.gmra.mxu0 %v845
    %v930 = vpop.f32.mrf.mxu0
    %v931 = vadd.f32 %v744, %v930
    %932 = vmatmul.f32.gmra.mxu0 %v847
    %v933 = vpop.f32.mrf.mxu0
    %v934 = vadd.f32 %v745, %v933
    %935 = vmatmul.f32.gmra.mxu0 %v849
    %v936 = vpop.f32.mrf.mxu0
    %v937 = vadd.f32 %v746, %v936
    %938 = vmatmul.f32.gmra.mxu0 %v851
    %v939 = vpop.f32.mrf.mxu0
    %v940 = vadd.f32 %v747, %v939
    %941 = vmatmul.f32.gmra.mxu0 %v853
    %v942 = vpop.f32.mrf.mxu0
    %v943 = vadd.f32 %v748, %v942
    %944 = vmatmul.f32.gmra.mxu0 %v855
    %v945 = vpop.f32.mrf.mxu0
    %v946 = vadd.f32 %v749, %v945
    %947 = vmatmul.f32.gmra.mxu0 %v857
    %v948 = vpop.f32.mrf.mxu0
    %v949 = vadd.f32 %v750, %v948
    %950 = vmatmul.f32.gmra.mxu0 %v859
    %v951 = vpop.f32.mrf.mxu0
    %v952 = vadd.f32 %v751, %v951
    %953 = vmatmul.f32.gmra.mxu0 %v861
    %v954 = vpop.f32.mrf.mxu0
    %v955 = vadd.f32 %v752, %v954
    %956 = vmatmul.f32.gmra.mxu0 %v863
    %v957 = vpop.f32.mrf.mxu0
    %v958 = vadd.f32 %v753, %v957
    %959 = vmatmul.f32.gmra.mxu0 %v865
    %v960 = vpop.f32.mrf.mxu0
    %v961 = vadd.f32 %v754, %v960
    %962 = vmatmul.f32.gmra.mxu0 %v867
    %v963 = vpop.f32.mrf.mxu0
    %v964 = vadd.f32 %v755, %v963
    %965 = vdwg.mxu0
    %966 = vrot.lane.b32.xlu0 %v581, 96
    %v967 = vpop.permute.xlu0 %966
    %968 = vrot.lane.b32.xlu0 %v583, 96
    %v969 = vpop.permute.xlu0 %968
    %970 = vrot.lane.b32.xlu0 %v585, 96
    %v971 = vpop.permute.xlu0 %970
    %972 = vrot.lane.b32.xlu0 %v587, 96
    %v973 = vpop.permute.xlu0 %972
    %974 = vrot.lane.b32.xlu0 %v589, 96
    %v975 = vpop.permute.xlu0 %974
    %976 = vrot.lane.b32.xlu0 %v591, 96
    %v977 = vpop.permute.xlu0 %976
    %978 = vrot.lane.b32.xlu0 %v593, 96
    %v979 = vpop.permute.xlu0 %978
    %980 = vrot.lane.b32.xlu0 %v595, 96
    %v981 = vpop.permute.xlu0 %980
    %982 = vrot.lane.b32.xlu0 %v597, 96
    %v983 = vpop.permute.xlu0 %982
    %984 = vrot.lane.b32.xlu0 %v599, 96
    %v985 = vpop.permute.xlu0 %984
    %986 = vrot.lane.b32.xlu0 %v601, 96
    %v987 = vpop.permute.xlu0 %986
    %988 = vrot.lane.b32.xlu0 %v603, 96
    %v989 = vpop.permute.xlu0 %988
    %990 = vrot.lane.b32.xlu0 %v605, 96
    %v991 = vpop.permute.xlu0 %990
    %992 = vrot.lane.b32.xlu0 %v607, 96
    %v993 = vpop.permute.xlu0 %992
    %994 = vrot.lane.b32.xlu0 %v609, 96
    %v995 = vpop.permute.xlu0 %994
    %996 = vrot.lane.b32.xlu0 %v611, 96
    %v997 = vpop.permute.xlu0 %996
    %v998 = vsel %vm836, %v581, 0
    %v1000 = vsel %vm836, %v583, 0
    %v1002 = vsel %vm836, %v585, 0
    %v1004 = vsel %vm836, %v587, 0
    %v1006 = vsel %vm836, %v589, 0
    %v1008 = vsel %vm836, %v591, 0
    %v1010 = vsel %vm836, %v593, 0
    %v1012 = vsel %vm836, %v595, 0
    %v1014 = vsel %vm836, %v597, 0
    %v1016 = vsel %vm836, %v599, 0
    %v1018 = vsel %vm836, %v601, 0
    %v1020 = vsel %vm836, %v603, 0
    %v1022 = vsel %vm836, %v605, 0
    %v1024 = vsel %vm836, %v607, 0
    %v1026 = vsel %vm836, %v609, 0
    %v1028 = vsel %vm836, %v611, 0
    %v1030 = vsel %vm836, %v967, 0
    %v1032 = vsel %vm836, %v969, 0
    %v1034 = vsel %vm836, %v971, 0
    %v1036 = vsel %vm836, %v973, 0
    %v1038 = vsel %vm836, %v975, 0
    %v1040 = vsel %vm836, %v977, 0
    %v1042 = vsel %vm836, %v979, 0
    %v1044 = vsel %vm836, %v981, 0
    %v1046 = vsel %vm836, %v983, 0
    %v1048 = vsel %vm836, %v985, 0
    %v1050 = vsel %vm836, %v987, 0
    %v1052 = vsel %vm836, %v989, 0
    %v1054 = vsel %vm836, %v991, 0
    %v1056 = vsel %vm836, %v993, 0
    %v1058 = vsel %vm836, %v995, 0
    %v1060 = vsel %vm836, %v997, 0
    %1062 = vmatpush.xpose.msra.mxu0 %v1060
    %1063 = vmatpush.xpose.msra.mxu0 %v1058
    %1064 = vmatpush.xpose.msra.mxu0 %v1056
    %1065 = vmatpush.xpose.msra.mxu0 %v1054
    %1066 = vmatpush.xpose.msra.mxu0 %v1052
    %1067 = vmatpush.xpose.msra.mxu0 %v1050
    %1068 = vmatpush.xpose.msra.mxu0 %v1048
    %1069 = vmatpush.xpose.msra.mxu0 %v1046
    %1070 = vmatpush.xpose.msra.mxu0 %v1044
    %1071 = vmatpush.xpose.msra.mxu0 %v1042
    %1072 = vmatpush.xpose.msra.mxu0 %v1040
    %1073 = vmatpush.xpose.msra.mxu0 %v1038
    %1074 = vmatpush.xpose.msra.mxu0 %v1036
    %1075 = vmatpush.xpose.msra.mxu0 %v1034
    %1076 = vmatpush.xpose.msra.mxu0 %v1032
    %1077 = vmatpush.xpose.msra.mxu0 %v1030
    %1078 = vmatmul.f32.gmra.mxu0 %v998
    %v1079 = vpop.f32.mrf.mxu0
    %v1080 = vadd.f32 %v756, %v1079
    %1081 = vmatmul.f32.gmra.mxu0 %v1000
    %v1082 = vpop.f32.mrf.mxu0
    %v1083 = vadd.f32 %v757, %v1082
    %1084 = vmatmul.f32.gmra.mxu0 %v1002
    %v1085 = vpop.f32.mrf.mxu0
    %v1086 = vadd.f32 %v758, %v1085
    %1087 = vmatmul.f32.gmra.mxu0 %v1004
    %v1088 = vpop.f32.mrf.mxu0
    %v1089 = vadd.f32 %v759, %v1088
    %1090 = vmatmul.f32.gmra.mxu0 %v1006
    %v1091 = vpop.f32.mrf.mxu0
    %v1092 = vadd.f32 %v760, %v1091
    %1093 = vmatmul.f32.gmra.mxu0 %v1008
    %v1094 = vpop.f32.mrf.mxu0
    %v1095 = vadd.f32 %v761, %v1094
    %1096 = vmatmul.f32.gmra.mxu0 %v1010
    %v1097 = vpop.f32.mrf.mxu0
    %v1098 = vadd.f32 %v762, %v1097
    %1099 = vmatmul.f32.gmra.mxu0 %v1012
    %v1100 = vpop.f32.mrf.mxu0
    %v1101 = vadd.f32 %v763, %v1100
    %1102 = vmatmul.f32.gmra.mxu0 %v1014
    %v1103 = vpop.f32.mrf.mxu0
    %v1104 = vadd.f32 %v764, %v1103
    %1105 = vmatmul.f32.gmra.mxu0 %v1016
    %v1106 = vpop.f32.mrf.mxu0
    %v1107 = vadd.f32 %v765, %v1106
    %1108 = vmatmul.f32.gmra.mxu0 %v1018
    %v1109 = vpop.f32.mrf.mxu0
    %v1110 = vadd.f32 %v766, %v1109
    %1111 = vmatmul.f32.gmra.mxu0 %v1020
    %v1112 = vpop.f32.mrf.mxu0
    %v1113 = vadd.f32 %v767, %v1112
    %1114 = vmatmul.f32.gmra.mxu0 %v1022
    %v1115 = vpop.f32.mrf.mxu0
    %v1116 = vadd.f32 %v768, %v1115
    %1117 = vmatmul.f32.gmra.mxu0 %v1024
    %v1118 = vpop.f32.mrf.mxu0
    %v1119 = vadd.f32 %v769, %v1118
    %1120 = vmatmul.f32.gmra.mxu0 %v1026
    %v1121 = vpop.f32.mrf.mxu0
    %v1122 = vadd.f32 %v770, %v1121
    %1123 = vmatmul.f32.gmra.mxu0 %v1028
    %v1124 = vpop.f32.mrf.mxu0
    %v1125 = vadd.f32 %v771, %v1124
    %1126 = vdwg.mxu0
    %1127 = vrot.lane.b32.xlu0 %v613, 96
    %v1128 = vpop.permute.xlu0 %1127
    %1129 = vrot.lane.b32.xlu0 %v615, 96
    %v1130 = vpop.permute.xlu0 %1129
    %1131 = vrot.lane.b32.xlu0 %v617, 96
    %v1132 = vpop.permute.xlu0 %1131
    %1133 = vrot.lane.b32.xlu0 %v619, 96
    %v1134 = vpop.permute.xlu0 %1133
    %1135 = vrot.lane.b32.xlu0 %v621, 96
    %v1136 = vpop.permute.xlu0 %1135
    %1137 = vrot.lane.b32.xlu0 %v623, 96
    %v1138 = vpop.permute.xlu0 %1137
    %1139 = vrot.lane.b32.xlu0 %v625, 96
    %v1140 = vpop.permute.xlu0 %1139
    %1141 = vrot.lane.b32.xlu0 %v627, 96
    %v1142 = vpop.permute.xlu0 %1141
    %1143 = vrot.lane.b32.xlu0 %v629, 96
    %v1144 = vpop.permute.xlu0 %1143
    %1145 = vrot.lane.b32.xlu0 %v631, 96
    %v1146 = vpop.permute.xlu0 %1145
    %1147 = vrot.lane.b32.xlu0 %v633, 96
    %v1148 = vpop.permute.xlu0 %1147
    %1149 = vrot.lane.b32.xlu0 %v635, 96
    %v1150 = vpop.permute.xlu0 %1149
    %1151 = vrot.lane.b32.xlu0 %v637, 96
    %v1152 = vpop.permute.xlu0 %1151
    %1153 = vrot.lane.b32.xlu0 %v639, 96
    %v1154 = vpop.permute.xlu0 %1153
    %1155 = vrot.lane.b32.xlu0 %v641, 96
    %v1156 = vpop.permute.xlu0 %1155
    %1157 = vrot.lane.b32.xlu0 %v643, 96
    %v1158 = vpop.permute.xlu0 %1157
    %v1159 = vsel %vm836, %v613, 0
    %v1161 = vsel %vm836, %v615, 0
    %v1163 = vsel %vm836, %v617, 0
    %v1165 = vsel %vm836, %v619, 0
    %v1167 = vsel %vm836, %v621, 0
    %v1169 = vsel %vm836, %v623, 0
    %v1171 = vsel %vm836, %v625, 0
    %v1173 = vsel %vm836, %v627, 0
    %v1175 = vsel %vm836, %v629, 0
    %v1177 = vsel %vm836, %v631, 0
    %v1179 = vsel %vm836, %v633, 0
    %v1181 = vsel %vm836, %v635, 0
    %v1183 = vsel %vm836, %v637, 0
    %v1185 = vsel %vm836, %v639, 0
    %v1187 = vsel %vm836, %v641, 0
    %v1189 = vsel %vm836, %v643, 0
    %v1191 = vsel %vm836, %v1128, 0
    %v1193 = vsel %vm836, %v1130, 0
    %v1195 = vsel %vm836, %v1132, 0
    %v1197 = vsel %vm836, %v1134, 0
    %v1199 = vsel %vm836, %v1136, 0
    %v1201 = vsel %vm836, %v1138, 0
    %v1203 = vsel %vm836, %v1140, 0
    %v1205 = vsel %vm836, %v1142, 0
    %v1207 = vsel %vm836, %v1144, 0
    %v1209 = vsel %vm836, %v1146, 0
    %v1211 = vsel %vm836, %v1148, 0
    %v1213 = vsel %vm836, %v1150, 0
    %v1215 = vsel %vm836, %v1152, 0
    %v1217 = vsel %vm836, %v1154, 0
    %v1219 = vsel %vm836, %v1156, 0
    %v1221 = vsel %vm836, %v1158, 0
    %1223 = vmatpush.xpose.msra.mxu0 %v1221
    %1224 = vmatpush.xpose.msra.mxu0 %v1219
    %1225 = vmatpush.xpose.msra.mxu0 %v1217
    %1226 = vmatpush.xpose.msra.mxu0 %v1215
    %1227 = vmatpush.xpose.msra.mxu0 %v1213
    %1228 = vmatpush.xpose.msra.mxu0 %v1211
    %1229 = vmatpush.xpose.msra.mxu0 %v1209
    %1230 = vmatpush.xpose.msra.mxu0 %v1207
    %1231 = vmatpush.xpose.msra.mxu0 %v1205
    %1232 = vmatpush.xpose.msra.mxu0 %v1203
    %1233 = vmatpush.xpose.msra.mxu0 %v1201
    %1234 = vmatpush.xpose.msra.mxu0 %v1199
    %1235 = vmatpush.xpose.msra.mxu0 %v1197
    %1236 = vmatpush.xpose.msra.mxu0 %v1195
    %1237 = vmatpush.xpose.msra.mxu0 %v1193
    %1238 = vmatpush.xpose.msra.mxu0 %v1191
    %1239 = vmatmul.f32.gmra.mxu0 %v1159
    %v1240 = vpop.f32.mrf.mxu0
    %v1241 = vadd.f32 %v772, %v1240
    %1242 = vmatmul.f32.gmra.mxu0 %v1161
    %v1243 = vpop.f32.mrf.mxu0
    %v1244 = vadd.f32 %v773, %v1243
    %1245 = vmatmul.f32.gmra.mxu0 %v1163
    %v1246 = vpop.f32.mrf.mxu0
    %v1247 = vadd.f32 %v774, %v1246
    %1248 = vmatmul.f32.gmra.mxu0 %v1165
    %v1249 = vpop.f32.mrf.mxu0
    %v1250 = vadd.f32 %v775, %v1249
    %1251 = vmatmul.f32.gmra.mxu0 %v1167
    %v1252 = vpop.f32.mrf.mxu0
    %v1253 = vadd.f32 %v776, %v1252
    %1254 = vmatmul.f32.gmra.mxu0 %v1169
    %v1255 = vpop.f32.mrf.mxu0
    %v1256 = vadd.f32 %v777, %v1255
    %1257 = vmatmul.f32.gmra.mxu0 %v1171
    %v1258 = vpop.f32.mrf.mxu0
    %v1259 = vadd.f32 %v778, %v1258
    %1260 = vmatmul.f32.gmra.mxu0 %v1173
    %v1261 = vpop.f32.mrf.mxu0
    %v1262 = vadd.f32 %v779, %v1261
    %1263 = vmatmul.f32.gmra.mxu0 %v1175
    %v1264 = vpop.f32.mrf.mxu0
    %v1265 = vadd.f32 %v780, %v1264
    %1266 = vmatmul.f32.gmra.mxu0 %v1177
    %v1267 = vpop.f32.mrf.mxu0
    %v1268 = vadd.f32 %v781, %v1267
    %1269 = vmatmul.f32.gmra.mxu0 %v1179
    %v1270 = vpop.f32.mrf.mxu0
    %v1271 = vadd.f32 %v782, %v1270
    %1272 = vmatmul.f32.gmra.mxu0 %v1181
    %v1273 = vpop.f32.mrf.mxu0
    %v1274 = vadd.f32 %v783, %v1273
    %1275 = vmatmul.f32.gmra.mxu0 %v1183
    %v1276 = vpop.f32.mrf.mxu0
    %v1277 = vadd.f32 %v784, %v1276
    %1278 = vmatmul.f32.gmra.mxu0 %v1185
    %v1279 = vpop.f32.mrf.mxu0
    %v1280 = vadd.f32 %v785, %v1279
    %1281 = vmatmul.f32.gmra.mxu0 %v1187
    %v1282 = vpop.f32.mrf.mxu0
    %v1283 = vadd.f32 %v786, %v1282
    %1284 = vmatmul.f32.gmra.mxu0 %v1189
    %v1285 = vpop.f32.mrf.mxu0
    %v1286 = vadd.f32 %v787, %v1285
    %1287 = vdwg.mxu0
    %1288 = vrot.lane.b32.xlu0 %v645, 96
    %v1289 = vpop.permute.xlu0 %1288
    %1290 = vrot.lane.b32.xlu0 %v647, 96
    %v1291 = vpop.permute.xlu0 %1290
    %1292 = vrot.lane.b32.xlu0 %v649, 96
    %v1293 = vpop.permute.xlu0 %1292
    %1294 = vrot.lane.b32.xlu0 %v651, 96
    %v1295 = vpop.permute.xlu0 %1294
    %1296 = vrot.lane.b32.xlu0 %v653, 96
    %v1297 = vpop.permute.xlu0 %1296
    %1298 = vrot.lane.b32.xlu0 %v655, 96
    %v1299 = vpop.permute.xlu0 %1298
    %1300 = vrot.lane.b32.xlu0 %v657, 96
    %v1301 = vpop.permute.xlu0 %1300
    %1302 = vrot.lane.b32.xlu0 %v659, 96
    %v1303 = vpop.permute.xlu0 %1302
    %1304 = vrot.lane.b32.xlu0 %v661, 96
    %v1305 = vpop.permute.xlu0 %1304
    %1306 = vrot.lane.b32.xlu0 %v663, 96
    %v1307 = vpop.permute.xlu0 %1306
    %1308 = vrot.lane.b32.xlu0 %v665, 96
    %v1309 = vpop.permute.xlu0 %1308
    %1310 = vrot.lane.b32.xlu0 %v667, 96
    %v1311 = vpop.permute.xlu0 %1310
    %1312 = vrot.lane.b32.xlu0 %v669, 96
    %v1313 = vpop.permute.xlu0 %1312
    %1314 = vrot.lane.b32.xlu0 %v671, 96
    %v1315 = vpop.permute.xlu0 %1314
    %1316 = vrot.lane.b32.xlu0 %v673, 96
    %v1317 = vpop.permute.xlu0 %1316
    %1318 = vrot.lane.b32.xlu0 %v675, 96
    %v1319 = vpop.permute.xlu0 %1318
    %v1320 = vsel %vm836, %v645, 0
    %v1322 = vsel %vm836, %v647, 0
    %v1324 = vsel %vm836, %v649, 0
    %v1326 = vsel %vm836, %v651, 0
    %v1328 = vsel %vm836, %v653, 0
    %v1330 = vsel %vm836, %v655, 0
    %v1332 = vsel %vm836, %v657, 0
    %v1334 = vsel %vm836, %v659, 0
    %v1336 = vsel %vm836, %v661, 0
    %v1338 = vsel %vm836, %v663, 0
    %v1340 = vsel %vm836, %v665, 0
    %v1342 = vsel %vm836, %v667, 0
    %v1344 = vsel %vm836, %v669, 0
    %v1346 = vsel %vm836, %v671, 0
    %v1348 = vsel %vm836, %v673, 0
    %v1350 = vsel %vm836, %v675, 0
    %v1352 = vsel %vm836, %v1289, 0
    %v1354 = vsel %vm836, %v1291, 0
    %v1356 = vsel %vm836, %v1293, 0
    %v1358 = vsel %vm836, %v1295, 0
    %v1360 = vsel %vm836, %v1297, 0
    %v1362 = vsel %vm836, %v1299, 0
    %v1364 = vsel %vm836, %v1301, 0
    %v1366 = vsel %vm836, %v1303, 0
    %v1368 = vsel %vm836, %v1305, 0
    %v1370 = vsel %vm836, %v1307, 0
    %v1372 = vsel %vm836, %v1309, 0
    %v1374 = vsel %vm836, %v1311, 0
    %v1376 = vsel %vm836, %v1313, 0
    %v1378 = vsel %vm836, %v1315, 0
    %v1380 = vsel %vm836, %v1317, 0
    %v1382 = vsel %vm836, %v1319, 0
    %1384 = vmatpush.xpose.msra.mxu0 %v1382
    %1385 = vmatpush.xpose.msra.mxu0 %v1380
    %1386 = vmatpush.xpose.msra.mxu0 %v1378
    %1387 = vmatpush.xpose.msra.mxu0 %v1376
    %1388 = vmatpush.xpose.msra.mxu0 %v1374
    %1389 = vmatpush.xpose.msra.mxu0 %v1372
    %1390 = vmatpush.xpose.msra.mxu0 %v1370
    %1391 = vmatpush.xpose.msra.mxu0 %v1368
    %1392 = vmatpush.xpose.msra.mxu0 %v1366
    %1393 = vmatpush.xpose.msra.mxu0 %v1364
    %1394 = vmatpush.xpose.msra.mxu0 %v1362
    %1395 = vmatpush.xpose.msra.mxu0 %v1360
    %1396 = vmatpush.xpose.msra.mxu0 %v1358
    %1397 = vmatpush.xpose.msra.mxu0 %v1356
    %1398 = vmatpush.xpose.msra.mxu0 %v1354
    %1399 = vmatpush.xpose.msra.mxu0 %v1352
    %1400 = vmatmul.f32.gmra.mxu0 %v1320
    %v1401 = vpop.f32.mrf.mxu0
    %v1402 = vadd.f32 %v788, %v1401
    %1403 = vmatmul.f32.gmra.mxu0 %v1322
    %v1404 = vpop.f32.mrf.mxu0
    %v1405 = vadd.f32 %v789, %v1404
    %1406 = vmatmul.f32.gmra.mxu0 %v1324
    %v1407 = vpop.f32.mrf.mxu0
    %v1408 = vadd.f32 %v790, %v1407
    %1409 = vmatmul.f32.gmra.mxu0 %v1326
    %v1410 = vpop.f32.mrf.mxu0
    %v1411 = vadd.f32 %v791, %v1410
    %1412 = vmatmul.f32.gmra.mxu0 %v1328
    %v1413 = vpop.f32.mrf.mxu0
    %v1414 = vadd.f32 %v792, %v1413
    %1415 = vmatmul.f32.gmra.mxu0 %v1330
    %v1416 = vpop.f32.mrf.mxu0
    %v1417 = vadd.f32 %v793, %v1416
    %1418 = vmatmul.f32.gmra.mxu0 %v1332
    %v1419 = vpop.f32.mrf.mxu0
    %v1420 = vadd.f32 %v794, %v1419
    %1421 = vmatmul.f32.gmra.mxu0 %v1334
    %v1422 = vpop.f32.mrf.mxu0
    %v1423 = vadd.f32 %v795, %v1422
    %1424 = vmatmul.f32.gmra.mxu0 %v1336
    %v1425 = vpop.f32.mrf.mxu0
    %v1426 = vadd.f32 %v796, %v1425
    %1427 = vmatmul.f32.gmra.mxu0 %v1338
    %v1428 = vpop.f32.mrf.mxu0
    %v1429 = vadd.f32 %v797, %v1428
    %1430 = vmatmul.f32.gmra.mxu0 %v1340
    %v1431 = vpop.f32.mrf.mxu0
    %v1432 = vadd.f32 %v798, %v1431
    %1433 = vmatmul.f32.gmra.mxu0 %v1342
    %v1434 = vpop.f32.mrf.mxu0
    %v1435 = vadd.f32 %v799, %v1434
    %1436 = vmatmul.f32.gmra.mxu0 %v1344
    %v1437 = vpop.f32.mrf.mxu0
    %v1438 = vadd.f32 %v800, %v1437
    %1439 = vmatmul.f32.gmra.mxu0 %v1346
    %v1440 = vpop.f32.mrf.mxu0
    %v1441 = vadd.f32 %v801, %v1440
    %1442 = vmatmul.f32.gmra.mxu0 %v1348
    %v1443 = vpop.f32.mrf.mxu0
    %v1444 = vadd.f32 %v802, %v1443
    %1445 = vmatmul.f32.gmra.mxu0 %v1350
    %v1446 = vpop.f32.mrf.mxu0
    %v1447 = vadd.f32 %v803, %v1446
    %1448 = vdwg.mxu0
    %1449 = vmax.xlane.f32.xlu0 %v919
    %v1450 = vpop.xlane.xlu0 %1449
    %1451 = vmax.xlane.f32.xlu0 %v922
    %v1452 = vpop.xlane.xlu0 %1451
    %1453 = vmax.xlane.f32.xlu0 %v925
    %v1454 = vpop.xlane.xlu0 %1453
    %1455 = vmax.xlane.f32.xlu0 %v928
    %v1456 = vpop.xlane.xlu0 %1455
    %1457 = vmax.xlane.f32.xlu0 %v931
    %v1458 = vpop.xlane.xlu0 %1457
    %1459 = vmax.xlane.f32.xlu0 %v934
    %v1460 = vpop.xlane.xlu0 %1459
    %1461 = vmax.xlane.f32.xlu0 %v937
    %v1462 = vpop.xlane.xlu0 %1461
    %1463 = vmax.xlane.f32.xlu0 %v940
    %v1464 = vpop.xlane.xlu0 %1463
    %1465 = vmax.xlane.f32.xlu0 %v943
    %v1466 = vpop.xlane.xlu0 %1465
    %1467 = vmax.xlane.f32.xlu0 %v946
    %v1468 = vpop.xlane.xlu0 %1467
    %1469 = vmax.xlane.f32.xlu0 %v949
    %v1470 = vpop.xlane.xlu0 %1469
    %1471 = vmax.xlane.f32.xlu0 %v952
    %v1472 = vpop.xlane.xlu0 %1471
    %1473 = vmax.xlane.f32.xlu0 %v955
    %v1474 = vpop.xlane.xlu0 %1473
    %1475 = vmax.xlane.f32.xlu0 %v958
    %v1476 = vpop.xlane.xlu0 %1475
    %1477 = vmax.xlane.f32.xlu0 %v961
    %v1478 = vpop.xlane.xlu0 %1477
    %1479 = vmax.xlane.f32.xlu0 %v964
    %v1480 = vpop.xlane.xlu0 %1479
    %1481 = vmax.xlane.f32.xlu0 %v1080
    %v1482 = vpop.xlane.xlu0 %1481
    %1483 = vmax.xlane.f32.xlu0 %v1083
    %v1484 = vpop.xlane.xlu0 %1483
    %1485 = vmax.xlane.f32.xlu0 %v1086
    %v1486 = vpop.xlane.xlu0 %1485
    %1487 = vmax.xlane.f32.xlu0 %v1089
    %v1488 = vpop.xlane.xlu0 %1487
    %1489 = vmax.xlane.f32.xlu0 %v1092
    %v1490 = vpop.xlane.xlu0 %1489
    %1491 = vmax.xlane.f32.xlu0 %v1095
    %v1492 = vpop.xlane.xlu0 %1491
    %1493 = vmax.xlane.f32.xlu0 %v1098
    %v1494 = vpop.xlane.xlu0 %1493
    %1495 = vmax.xlane.f32.xlu0 %v1101
    %v1496 = vpop.xlane.xlu0 %1495
    %1497 = vmax.xlane.f32.xlu0 %v1104
    %v1498 = vpop.xlane.xlu0 %1497
    %1499 = vmax.xlane.f32.xlu0 %v1107
    %v1500 = vpop.xlane.xlu0 %1499
    %1501 = vmax.xlane.f32.xlu0 %v1110
    %v1502 = vpop.xlane.xlu0 %1501
    %1503 = vmax.xlane.f32.xlu0 %v1113
    %v1504 = vpop.xlane.xlu0 %1503
    %1505 = vmax.xlane.f32.xlu0 %v1116
    %v1506 = vpop.xlane.xlu0 %1505
    %1507 = vmax.xlane.f32.xlu0 %v1119
    %v1508 = vpop.xlane.xlu0 %1507
    %1509 = vmax.xlane.f32.xlu0 %v1122
    %v1510 = vpop.xlane.xlu0 %1509
    %1511 = vmax.xlane.f32.xlu0 %v1125
    %v1512 = vpop.xlane.xlu0 %1511
    %1513 = vmax.xlane.f32.xlu0 %v1241
    %v1514 = vpop.xlane.xlu0 %1513
    %1515 = vmax.xlane.f32.xlu0 %v1244
    %v1516 = vpop.xlane.xlu0 %1515
    %1517 = vmax.xlane.f32.xlu0 %v1247
    %v1518 = vpop.xlane.xlu0 %1517
    %1519 = vmax.xlane.f32.xlu0 %v1250
    %v1520 = vpop.xlane.xlu0 %1519
    %1521 = vmax.xlane.f32.xlu0 %v1253
    %v1522 = vpop.xlane.xlu0 %1521
    %1523 = vmax.xlane.f32.xlu0 %v1256
    %v1524 = vpop.xlane.xlu0 %1523
    %1525 = vmax.xlane.f32.xlu0 %v1259
    %v1526 = vpop.xlane.xlu0 %1525
    %1527 = vmax.xlane.f32.xlu0 %v1262
    %v1528 = vpop.xlane.xlu0 %1527
    %1529 = vmax.xlane.f32.xlu0 %v1265
    %v1530 = vpop.xlane.xlu0 %1529
    %1531 = vmax.xlane.f32.xlu0 %v1268
    %v1532 = vpop.xlane.xlu0 %1531
    %1533 = vmax.xlane.f32.xlu0 %v1271
    %v1534 = vpop.xlane.xlu0 %1533
    %1535 = vmax.xlane.f32.xlu0 %v1274
    %v1536 = vpop.xlane.xlu0 %1535
    %1537 = vmax.xlane.f32.xlu0 %v1277
    %v1538 = vpop.xlane.xlu0 %1537
    %1539 = vmax.xlane.f32.xlu0 %v1280
    %v1540 = vpop.xlane.xlu0 %1539
    %1541 = vmax.xlane.f32.xlu0 %v1283
    %v1542 = vpop.xlane.xlu0 %1541
    %1543 = vmax.xlane.f32.xlu0 %v1286
    %v1544 = vpop.xlane.xlu0 %1543
    %1545 = vmax.xlane.f32.xlu0 %v1402
    %v1546 = vpop.xlane.xlu0 %1545
    %1547 = vmax.xlane.f32.xlu0 %v1405
    %v1548 = vpop.xlane.xlu0 %1547
    %1549 = vmax.xlane.f32.xlu0 %v1408
    %v1550 = vpop.xlane.xlu0 %1549
    %1551 = vmax.xlane.f32.xlu0 %v1411
    %v1552 = vpop.xlane.xlu0 %1551
    %1553 = vmax.xlane.f32.xlu0 %v1414
    %v1554 = vpop.xlane.xlu0 %1553
    %1555 = vmax.xlane.f32.xlu0 %v1417
    %v1556 = vpop.xlane.xlu0 %1555
    %1557 = vmax.xlane.f32.xlu0 %v1420
    %v1558 = vpop.xlane.xlu0 %1557
    %1559 = vmax.xlane.f32.xlu0 %v1423
    %v1560 = vpop.xlane.xlu0 %1559
    %1561 = vmax.xlane.f32.xlu0 %v1426
    %v1562 = vpop.xlane.xlu0 %1561
    %1563 = vmax.xlane.f32.xlu0 %v1429
    %v1564 = vpop.xlane.xlu0 %1563
    %1565 = vmax.xlane.f32.xlu0 %v1432
    %v1566 = vpop.xlane.xlu0 %1565
    %1567 = vmax.xlane.f32.xlu0 %v1435
    %v1568 = vpop.xlane.xlu0 %1567
    %1569 = vmax.xlane.f32.xlu0 %v1438
    %v1570 = vpop.xlane.xlu0 %1569
    %1571 = vmax.xlane.f32.xlu0 %v1441
    %v1572 = vpop.xlane.xlu0 %1571
    %1573 = vmax.xlane.f32.xlu0 %v1444
    %v1574 = vpop.xlane.xlu0 %1573
    %1575 = vmax.xlane.f32.xlu0 %v1447
    %v1576 = vpop.xlane.xlu0 %1575
    %v1577 = vsub.f32 %v919, %v1450
    %v1578 = vsub.f32 %v922, %v1452
    %v1579 = vsub.f32 %v925, %v1454
    %v1580 = vsub.f32 %v928, %v1456
    %v1581 = vsub.f32 %v931, %v1458
    %v1582 = vsub.f32 %v934, %v1460
    %v1583 = vsub.f32 %v937, %v1462
    %v1584 = vsub.f32 %v940, %v1464
    %v1585 = vsub.f32 %v943, %v1466
    %v1586 = vsub.f32 %v946, %v1468
    %v1587 = vsub.f32 %v949, %v1470
    %v1588 = vsub.f32 %v952, %v1472
    %v1589 = vsub.f32 %v955, %v1474
    %v1590 = vsub.f32 %v958, %v1476
    %v1591 = vsub.f32 %v961, %v1478
    %v1592 = vsub.f32 %v964, %v1480
    %v1593 = vsub.f32 %v1080, %v1482
    %v1594 = vsub.f32 %v1083, %v1484
    %v1595 = vsub.f32 %v1086, %v1486
    %v1596 = vsub.f32 %v1089, %v1488
    %v1597 = vsub.f32 %v1092, %v1490
    %v1598 = vsub.f32 %v1095, %v1492
    %v1599 = vsub.f32 %v1098, %v1494
    %v1600 = vsub.f32 %v1101, %v1496
    %v1601 = vsub.f32 %v1104, %v1498
    %v1602 = vsub.f32 %v1107, %v1500
    %v1603 = vsub.f32 %v1110, %v1502
    %v1604 = vsub.f32 %v1113, %v1504
    %v1605 = vsub.f32 %v1116, %v1506
    %v1606 = vsub.f32 %v1119, %v1508
    %v1607 = vsub.f32 %v1122, %v1510
    %v1608 = vsub.f32 %v1125, %v1512
    %v1609 = vsub.f32 %v1241, %v1514
    %v1610 = vsub.f32 %v1244, %v1516
    %v1611 = vsub.f32 %v1247, %v1518
    %v1612 = vsub.f32 %v1250, %v1520
    %v1613 = vsub.f32 %v1253, %v1522
    %v1614 = vsub.f32 %v1256, %v1524
    %v1615 = vsub.f32 %v1259, %v1526
    %v1616 = vsub.f32 %v1262, %v1528
    %v1617 = vsub.f32 %v1265, %v1530
    %v1618 = vsub.f32 %v1268, %v1532
    %v1619 = vsub.f32 %v1271, %v1534
    %v1620 = vsub.f32 %v1274, %v1536
    %v1621 = vsub.f32 %v1277, %v1538
    %v1622 = vsub.f32 %v1280, %v1540
    %v1623 = vsub.f32 %v1283, %v1542
    %v1624 = vsub.f32 %v1286, %v1544
    %v1625 = vsub.f32 %v1402, %v1546
    %v1626 = vsub.f32 %v1405, %v1548
    %v1627 = vsub.f32 %v1408, %v1550
    %v1628 = vsub.f32 %v1411, %v1552
    %v1629 = vsub.f32 %v1414, %v1554
    %v1630 = vsub.f32 %v1417, %v1556
    %v1631 = vsub.f32 %v1420, %v1558
    %v1632 = vsub.f32 %v1423, %v1560
    %v1633 = vsub.f32 %v1426, %v1562
    %v1634 = vsub.f32 %v1429, %v1564
    %v1635 = vsub.f32 %v1432, %v1566
    %v1636 = vsub.f32 %v1435, %v1568
    %v1637 = vsub.f32 %v1438, %v1570
    %v1638 = vsub.f32 %v1441, %v1572
    %v1639 = vsub.f32 %v1444, %v1574
    %v1640 = vsub.f32 %v1447, %v1576
    %v1641 = vmul.f32 %v1577, 1.442695
    %v1642 = vpow.pop %v1641
    %v1643 = vmul.f32 %v1578, 1.442695
    %v1644 = vpow.pop %v1643
    %v1645 = vmul.f32 %v1579, 1.442695
    %v1646 = vpow.pop %v1645
    %v1647 = vmul.f32 %v1580, 1.442695
    %v1648 = vpow.pop %v1647
    %v1649 = vmul.f32 %v1581, 1.442695
    %v1650 = vpow.pop %v1649
    %v1651 = vmul.f32 %v1582, 1.442695
    %v1652 = vpow.pop %v1651
    %v1653 = vmul.f32 %v1583, 1.442695
    %v1654 = vpow.pop %v1653
    %v1655 = vmul.f32 %v1584, 1.442695
    %v1656 = vpow.pop %v1655
    %v1657 = vmul.f32 %v1585, 1.442695
    %v1658 = vpow.pop %v1657
    %v1659 = vmul.f32 %v1586, 1.442695
    %v1660 = vpow.pop %v1659
    %v1661 = vmul.f32 %v1587, 1.442695
    %v1662 = vpow.pop %v1661
    %v1663 = vmul.f32 %v1588, 1.442695
    %v1664 = vpow.pop %v1663
    %v1665 = vmul.f32 %v1589, 1.442695
    %v1666 = vpow.pop %v1665
    %v1667 = vmul.f32 %v1590, 1.442695
    %v1668 = vpow.pop %v1667
    %v1669 = vmul.f32 %v1591, 1.442695
    %v1670 = vpow.pop %v1669
    %v1671 = vmul.f32 %v1592, 1.442695
    %v1672 = vpow.pop %v1671
    %v1673 = vmul.f32 %v1593, 1.442695
    %v1674 = vpow.pop %v1673
    %v1675 = vmul.f32 %v1594, 1.442695
    %v1676 = vpow.pop %v1675
    %v1677 = vmul.f32 %v1595, 1.442695
    %v1678 = vpow.pop %v1677
    %v1679 = vmul.f32 %v1596, 1.442695
    %v1680 = vpow.pop %v1679
    %v1681 = vmul.f32 %v1597, 1.442695
    %v1682 = vpow.pop %v1681
    %v1683 = vmul.f32 %v1598, 1.442695
    %v1684 = vpow.pop %v1683
    %v1685 = vmul.f32 %v1599, 1.442695
    %v1686 = vpow.pop %v1685
    %v1687 = vmul.f32 %v1600, 1.442695
    %v1688 = vpow.pop %v1687
    %v1689 = vmul.f32 %v1601, 1.442695
    %v1690 = vpow.pop %v1689
    %v1691 = vmul.f32 %v1602, 1.442695
    %v1692 = vpow.pop %v1691
    %v1693 = vmul.f32 %v1603, 1.442695
    %v1694 = vpow.pop %v1693
    %v1695 = vmul.f32 %v1604, 1.442695
    %v1696 = vpow.pop %v1695
    %v1697 = vmul.f32 %v1605, 1.442695
    %v1698 = vpow.pop %v1697
    %v1699 = vmul.f32 %v1606, 1.442695
    %v1700 = vpow.pop %v1699
    %v1701 = vmul.f32 %v1607, 1.442695
    %v1702 = vpow.pop %v1701
    %v1703 = vmul.f32 %v1608, 1.442695
    %v1704 = vpow.pop %v1703
    %v1705 = vmul.f32 %v1609, 1.442695
    %v1706 = vpow.pop %v1705
    %v1707 = vmul.f32 %v1610, 1.442695
    %v1708 = vpow.pop %v1707
    %v1709 = vmul.f32 %v1611, 1.442695
    %v1710 = vpow.pop %v1709
    %v1711 = vmul.f32 %v1612, 1.442695
    %v1712 = vpow.pop %v1711
    %v1713 = vmul.f32 %v1613, 1.442695
    %v1714 = vpow.pop %v1713
    %v1715 = vmul.f32 %v1614, 1.442695
    %v1716 = vpow.pop %v1715
    %v1717 = vmul.f32 %v1615, 1.442695
    %v1718 = vpow.pop %v1717
    %v1719 = vmul.f32 %v1616, 1.442695
    %v1720 = vpow.pop %v1719
    %v1721 = vmul.f32 %v1617, 1.442695
    %v1722 = vpow.pop %v1721
    %v1723 = vmul.f32 %v1618, 1.442695
    %v1724 = vpow.pop %v1723
    %v1725 = vmul.f32 %v1619, 1.442695
    %v1726 = vpow.pop %v1725
    %v1727 = vmul.f32 %v1620, 1.442695
    %v1728 = vpow.pop %v1727
    %v1729 = vmul.f32 %v1621, 1.442695
    %v1730 = vpow.pop %v1729
    %v1731 = vmul.f32 %v1622, 1.442695
    %v1732 = vpow.pop %v1731
    %v1733 = vmul.f32 %v1623, 1.442695
    %v1734 = vpow.pop %v1733
    %v1735 = vmul.f32 %v1624, 1.442695
    %v1736 = vpow.pop %v1735
    %v1737 = vmul.f32 %v1625, 1.442695
    %v1738 = vpow.pop %v1737
    %v1739 = vmul.f32 %v1626, 1.442695
    %v1740 = vpow.pop %v1739
    %v1741 = vmul.f32 %v1627, 1.442695
    %v1742 = vpow.pop %v1741
    %v1743 = vmul.f32 %v1628, 1.442695
    %v1744 = vpow.pop %v1743
    %v1745 = vmul.f32 %v1629, 1.442695
    %v1746 = vpow.pop %v1745
    %v1747 = vmul.f32 %v1630, 1.442695
    %v1748 = vpow.pop %v1747
    %v1749 = vmul.f32 %v1631, 1.442695
    %v1750 = vpow.pop %v1749
    %v1751 = vmul.f32 %v1632, 1.442695
    %v1752 = vpow.pop %v1751
    %v1753 = vmul.f32 %v1633, 1.442695
    %v1754 = vpow.pop %v1753
    %v1755 = vmul.f32 %v1634, 1.442695
    %v1756 = vpow.pop %v1755
    %v1757 = vmul.f32 %v1635, 1.442695
    %v1758 = vpow.pop %v1757
    %v1759 = vmul.f32 %v1636, 1.442695
    %v1760 = vpow.pop %v1759
    %v1761 = vmul.f32 %v1637, 1.442695
    %v1762 = vpow.pop %v1761
    %v1763 = vmul.f32 %v1638, 1.442695
    %v1764 = vpow.pop %v1763
    %v1765 = vmul.f32 %v1639, 1.442695
    %v1766 = vpow.pop %v1765
    %v1767 = vmul.f32 %v1640, 1.442695
    %v1768 = vpow.pop %v1767
    %1769 = vadd.xlane.f32.xlu0 %v1642
    %v1770 = vpop.xlane.xlu0 %1769
    %1771 = vadd.xlane.f32.xlu0 %v1644
    %v1772 = vpop.xlane.xlu0 %1771
    %1773 = vadd.xlane.f32.xlu0 %v1646
    %v1774 = vpop.xlane.xlu0 %1773
    %1775 = vadd.xlane.f32.xlu0 %v1648
    %v1776 = vpop.xlane.xlu0 %1775
    %1777 = vadd.xlane.f32.xlu0 %v1650
    %v1778 = vpop.xlane.xlu0 %1777
    %1779 = vadd.xlane.f32.xlu0 %v1652
    %v1780 = vpop.xlane.xlu0 %1779
    %1781 = vadd.xlane.f32.xlu0 %v1654
    %v1782 = vpop.xlane.xlu0 %1781
    %1783 = vadd.xlane.f32.xlu0 %v1656
    %v1784 = vpop.xlane.xlu0 %1783
    %1785 = vadd.xlane.f32.xlu0 %v1658
    %v1786 = vpop.xlane.xlu0 %1785
    %1787 = vadd.xlane.f32.xlu0 %v1660
    %v1788 = vpop.xlane.xlu0 %1787
    %1789 = vadd.xlane.f32.xlu0 %v1662
    %v1790 = vpop.xlane.xlu0 %1789
    %1791 = vadd.xlane.f32.xlu0 %v1664
    %v1792 = vpop.xlane.xlu0 %1791
    %1793 = vadd.xlane.f32.xlu0 %v1666
    %v1794 = vpop.xlane.xlu0 %1793
    %1795 = vadd.xlane.f32.xlu0 %v1668
    %v1796 = vpop.xlane.xlu0 %1795
    %1797 = vadd.xlane.f32.xlu0 %v1670
    %v1798 = vpop.xlane.xlu0 %1797
    %1799 = vadd.xlane.f32.xlu0 %v1672
    %v1800 = vpop.xlane.xlu0 %1799
    %1801 = vadd.xlane.f32.xlu0 %v1674
    %v1802 = vpop.xlane.xlu0 %1801
    %1803 = vadd.xlane.f32.xlu0 %v1676
    %v1804 = vpop.xlane.xlu0 %1803
    %1805 = vadd.xlane.f32.xlu0 %v1678
    %v1806 = vpop.xlane.xlu0 %1805
    %1807 = vadd.xlane.f32.xlu0 %v1680
    %v1808 = vpop.xlane.xlu0 %1807
    %1809 = vadd.xlane.f32.xlu0 %v1682
    %v1810 = vpop.xlane.xlu0 %1809
    %1811 = vadd.xlane.f32.xlu0 %v1684
    %v1812 = vpop.xlane.xlu0 %1811
    %1813 = vadd.xlane.f32.xlu0 %v1686
    %v1814 = vpop.xlane.xlu0 %1813
    %1815 = vadd.xlane.f32.xlu0 %v1688
    %v1816 = vpop.xlane.xlu0 %1815
    %1817 = vadd.xlane.f32.xlu0 %v1690
    %v1818 = vpop.xlane.xlu0 %1817
    %1819 = vadd.xlane.f32.xlu0 %v1692
    %v1820 = vpop.xlane.xlu0 %1819
    %1821 = vadd.xlane.f32.xlu0 %v1694
    %v1822 = vpop.xlane.xlu0 %1821
    %1823 = vadd.xlane.f32.xlu0 %v1696
    %v1824 = vpop.xlane.xlu0 %1823
    %1825 = vadd.xlane.f32.xlu0 %v1698
    %v1826 = vpop.xlane.xlu0 %1825
    %1827 = vadd.xlane.f32.xlu0 %v1700
    %v1828 = vpop.xlane.xlu0 %1827
    %1829 = vadd.xlane.f32.xlu0 %v1702
    %v1830 = vpop.xlane.xlu0 %1829
    %1831 = vadd.xlane.f32.xlu0 %v1704
    %v1832 = vpop.xlane.xlu0 %1831
    %1833 = vadd.xlane.f32.xlu0 %v1706
    %v1834 = vpop.xlane.xlu0 %1833
    %1835 = vadd.xlane.f32.xlu0 %v1708
    %v1836 = vpop.xlane.xlu0 %1835
    %1837 = vadd.xlane.f32.xlu0 %v1710
    %v1838 = vpop.xlane.xlu0 %1837
    %1839 = vadd.xlane.f32.xlu0 %v1712
    %v1840 = vpop.xlane.xlu0 %1839
    %1841 = vadd.xlane.f32.xlu0 %v1714
    %v1842 = vpop.xlane.xlu0 %1841
    %1843 = vadd.xlane.f32.xlu0 %v1716
    %v1844 = vpop.xlane.xlu0 %1843
    %1845 = vadd.xlane.f32.xlu0 %v1718
    %v1846 = vpop.xlane.xlu0 %1845
    %1847 = vadd.xlane.f32.xlu0 %v1720
    %v1848 = vpop.xlane.xlu0 %1847
    %1849 = vadd.xlane.f32.xlu0 %v1722
    %v1850 = vpop.xlane.xlu0 %1849
    %1851 = vadd.xlane.f32.xlu0 %v1724
    %v1852 = vpop.xlane.xlu0 %1851
    %1853 = vadd.xlane.f32.xlu0 %v1726
    %v1854 = vpop.xlane.xlu0 %1853
    %1855 = vadd.xlane.f32.xlu0 %v1728
    %v1856 = vpop.xlane.xlu0 %1855
    %1857 = vadd.xlane.f32.xlu0 %v1730
    %v1858 = vpop.xlane.xlu0 %1857
    %1859 = vadd.xlane.f32.xlu0 %v1732
    %v1860 = vpop.xlane.xlu0 %1859
    %1861 = vadd.xlane.f32.xlu0 %v1734
    %v1862 = vpop.xlane.xlu0 %1861
    %1863 = vadd.xlane.f32.xlu0 %v1736
    %v1864 = vpop.xlane.xlu0 %1863
    %1865 = vadd.xlane.f32.xlu0 %v1738
    %v1866 = vpop.xlane.xlu0 %1865
    %1867 = vadd.xlane.f32.xlu0 %v1740
    %v1868 = vpop.xlane.xlu0 %1867
    %1869 = vadd.xlane.f32.xlu0 %v1742
    %v1870 = vpop.xlane.xlu0 %1869
    %1871 = vadd.xlane.f32.xlu0 %v1744
    %v1872 = vpop.xlane.xlu0 %1871
    %1873 = vadd.xlane.f32.xlu0 %v1746
    %v1874 = vpop.xlane.xlu0 %1873
    %1875 = vadd.xlane.f32.xlu0 %v1748
    %v1876 = vpop.xlane.xlu0 %1875
    %1877 = vadd.xlane.f32.xlu0 %v1750
    %v1878 = vpop.xlane.xlu0 %1877
    %1879 = vadd.xlane.f32.xlu0 %v1752
    %v1880 = vpop.xlane.xlu0 %1879
    %1881 = vadd.xlane.f32.xlu0 %v1754
    %v1882 = vpop.xlane.xlu0 %1881
    %1883 = vadd.xlane.f32.xlu0 %v1756
    %v1884 = vpop.xlane.xlu0 %1883
    %1885 = vadd.xlane.f32.xlu0 %v1758
    %v1886 = vpop.xlane.xlu0 %1885
    %1887 = vadd.xlane.f32.xlu0 %v1760
    %v1888 = vpop.xlane.xlu0 %1887
    %1889 = vadd.xlane.f32.xlu0 %v1762
    %v1890 = vpop.xlane.xlu0 %1889
    %1891 = vadd.xlane.f32.xlu0 %v1764
    %v1892 = vpop.xlane.xlu0 %1891
    %1893 = vadd.xlane.f32.xlu0 %v1766
    %v1894 = vpop.xlane.xlu0 %1893
    %1895 = vadd.xlane.f32.xlu0 %v1768
    %v1896 = vpop.xlane.xlu0 %1895
    %v1897 = vrcp.pop %v1770
    %v1898 = vmul.f32 %v1770, %v1897
    %v1899 = vsub.f32 1.0, %v1898
    %v1900 = vmul.f32 %v1897, %v1899
    %v1901 = vadd.f32 %v1897, %v1900
    %vm1902 = vweird.f32 %v1770
    %vm1903 = vweird.f32 %v1897
    %vm1904 = vmor %vm1902, %vm1903
    %v1905 = vsel %vm1904, %v1897, %v1901
    %v1906 = vand.u32 2147483647, %v1770
    %vm1907 = vcmp.eq.f32.partialorder %v1906, 8.507059e+37
    %v1908 = vand.u32 %v1770, 2147483648
    %v1909 = vor.u32 1.1754944e-38, %v1908
    %v1910 = vsel %vm1907, %v1909, %v1905
    %v1911 = vmul.f32 %v1642, %v1910
    %v1912 = vrcp.pop %v1772
    %v1913 = vmul.f32 %v1772, %v1912
    %v1914 = vsub.f32 1.0, %v1913
    %v1915 = vmul.f32 %v1912, %v1914
    %v1916 = vadd.f32 %v1912, %v1915
    %vm1917 = vweird.f32 %v1772
    %vm1918 = vweird.f32 %v1912
    %vm1919 = vmor %vm1917, %vm1918
    %v1920 = vsel %vm1919, %v1912, %v1916
    %v1921 = vand.u32 2147483647, %v1772
    %vm1922 = vcmp.eq.f32.partialorder %v1921, 8.507059e+37
    %v1923 = vand.u32 %v1772, 2147483648
    %v1924 = vor.u32 1.1754944e-38, %v1923
    %v1925 = vsel %vm1922, %v1924, %v1920
    %v1926 = vmul.f32 %v1644, %v1925
    %v1927 = vrcp.pop %v1774
    %v1928 = vmul.f32 %v1774, %v1927
    %v1929 = vsub.f32 1.0, %v1928
    %v1930 = vmul.f32 %v1927, %v1929
    %v1931 = vadd.f32 %v1927, %v1930
    %vm1932 = vweird.f32 %v1774
    %vm1933 = vweird.f32 %v1927
    %vm1934 = vmor %vm1932, %vm1933
    %v1935 = vsel %vm1934, %v1927, %v1931
    %v1936 = vand.u32 2147483647, %v1774
    %vm1937 = vcmp.eq.f32.partialorder %v1936, 8.507059e+37
    %v1938 = vand.u32 %v1774, 2147483648
    %v1939 = vor.u32 1.1754944e-38, %v1938
    %v1940 = vsel %vm1937, %v1939, %v1935
    %v1941 = vmul.f32 %v1646, %v1940
    %v1942 = vrcp.pop %v1776
    %v1943 = vmul.f32 %v1776, %v1942
    %v1944 = vsub.f32 1.0, %v1943
    %v1945 = vmul.f32 %v1942, %v1944
    %v1946 = vadd.f32 %v1942, %v1945
    %vm1947 = vweird.f32 %v1776
    %vm1948 = vweird.f32 %v1942
    %vm1949 = vmor %vm1947, %vm1948
    %v1950 = vsel %vm1949, %v1942, %v1946
    %v1951 = vand.u32 2147483647, %v1776
    %vm1952 = vcmp.eq.f32.partialorder %v1951, 8.507059e+37
    %v1953 = vand.u32 %v1776, 2147483648
    %v1954 = vor.u32 1.1754944e-38, %v1953
    %v1955 = vsel %vm1952, %v1954, %v1950
    %v1956 = vmul.f32 %v1648, %v1955
    %v1957 = vrcp.pop %v1778
    %v1958 = vmul.f32 %v1778, %v1957
    %v1959 = vsub.f32 1.0, %v1958
    %v1960 = vmul.f32 %v1957, %v1959
    %v1961 = vadd.f32 %v1957, %v1960
    %vm1962 = vweird.f32 %v1778
    %vm1963 = vweird.f32 %v1957
    %vm1964 = vmor %vm1962, %vm1963
    %v1965 = vsel %vm1964, %v1957, %v1961
    %v1966 = vand.u32 2147483647, %v1778
    %vm1967 = vcmp.eq.f32.partialorder %v1966, 8.507059e+37
    %v1968 = vand.u32 %v1778, 2147483648
    %v1969 = vor.u32 1.1754944e-38, %v1968
    %v1970 = vsel %vm1967, %v1969, %v1965
    %v1971 = vmul.f32 %v1650, %v1970
    %v1972 = vrcp.pop %v1780
    %v1973 = vmul.f32 %v1780, %v1972
    %v1974 = vsub.f32 1.0, %v1973
    %v1975 = vmul.f32 %v1972, %v1974
    %v1976 = vadd.f32 %v1972, %v1975
    %vm1977 = vweird.f32 %v1780
    %vm1978 = vweird.f32 %v1972
    %vm1979 = vmor %vm1977, %vm1978
    %v1980 = vsel %vm1979, %v1972, %v1976
    %v1981 = vand.u32 2147483647, %v1780
    %vm1982 = vcmp.eq.f32.partialorder %v1981, 8.507059e+37
    %v1983 = vand.u32 %v1780, 2147483648
    %v1984 = vor.u32 1.1754944e-38, %v1983
    %v1985 = vsel %vm1982, %v1984, %v1980
    %v1986 = vmul.f32 %v1652, %v1985
    %v1987 = vrcp.pop %v1782
    %v1988 = vmul.f32 %v1782, %v1987
    %v1989 = vsub.f32 1.0, %v1988
    %v1990 = vmul.f32 %v1987, %v1989
    %v1991 = vadd.f32 %v1987, %v1990
    %vm1992 = vweird.f32 %v1782
    %vm1993 = vweird.f32 %v1987
    %vm1994 = vmor %vm1992, %vm1993
    %v1995 = vsel %vm1994, %v1987, %v1991
    %v1996 = vand.u32 2147483647, %v1782
    %vm1997 = vcmp.eq.f32.partialorder %v1996, 8.507059e+37
    %v1998 = vand.u32 %v1782, 2147483648
    %v1999 = vor.u32 1.1754944e-38, %v1998
    %v2000 = vsel %vm1997, %v1999, %v1995
    %v2001 = vmul.f32 %v1654, %v2000
    %v2002 = vrcp.pop %v1784
    %v2003 = vmul.f32 %v1784, %v2002
    %v2004 = vsub.f32 1.0, %v2003
    %v2005 = vmul.f32 %v2002, %v2004
    %v2006 = vadd.f32 %v2002, %v2005
    %vm2007 = vweird.f32 %v1784
    %vm2008 = vweird.f32 %v2002
    %vm2009 = vmor %vm2007, %vm2008
    %v2010 = vsel %vm2009, %v2002, %v2006
    %v2011 = vand.u32 2147483647, %v1784
    %vm2012 = vcmp.eq.f32.partialorder %v2011, 8.507059e+37
    %v2013 = vand.u32 %v1784, 2147483648
    %v2014 = vor.u32 1.1754944e-38, %v2013
    %v2015 = vsel %vm2012, %v2014, %v2010
    %v2016 = vmul.f32 %v1656, %v2015
    %v2017 = vrcp.pop %v1786
    %v2018 = vmul.f32 %v1786, %v2017
    %v2019 = vsub.f32 1.0, %v2018
    %v2020 = vmul.f32 %v2017, %v2019
    %v2021 = vadd.f32 %v2017, %v2020
    %vm2022 = vweird.f32 %v1786
    %vm2023 = vweird.f32 %v2017
    %vm2024 = vmor %vm2022, %vm2023
    %v2025 = vsel %vm2024, %v2017, %v2021
    %v2026 = vand.u32 2147483647, %v1786
    %vm2027 = vcmp.eq.f32.partialorder %v2026, 8.507059e+37
    %v2028 = vand.u32 %v1786, 2147483648
    %v2029 = vor.u32 1.1754944e-38, %v2028
    %v2030 = vsel %vm2027, %v2029, %v2025
    %v2031 = vmul.f32 %v1658, %v2030
    %v2032 = vrcp.pop %v1788
    %v2033 = vmul.f32 %v1788, %v2032
    %v2034 = vsub.f32 1.0, %v2033
    %v2035 = vmul.f32 %v2032, %v2034
    %v2036 = vadd.f32 %v2032, %v2035
    %vm2037 = vweird.f32 %v1788
    %vm2038 = vweird.f32 %v2032
    %vm2039 = vmor %vm2037, %vm2038
    %v2040 = vsel %vm2039, %v2032, %v2036
    %v2041 = vand.u32 2147483647, %v1788
    %vm2042 = vcmp.eq.f32.partialorder %v2041, 8.507059e+37
    %v2043 = vand.u32 %v1788, 2147483648
    %v2044 = vor.u32 1.1754944e-38, %v2043
    %v2045 = vsel %vm2042, %v2044, %v2040
    %v2046 = vmul.f32 %v1660, %v2045
    %v2047 = vrcp.pop %v1790
    %v2048 = vmul.f32 %v1790, %v2047
    %v2049 = vsub.f32 1.0, %v2048
    %v2050 = vmul.f32 %v2047, %v2049
    %v2051 = vadd.f32 %v2047, %v2050
    %vm2052 = vweird.f32 %v1790
    %vm2053 = vweird.f32 %v2047
    %vm2054 = vmor %vm2052, %vm2053
    %v2055 = vsel %vm2054, %v2047, %v2051
    %v2056 = vand.u32 2147483647, %v1790
    %vm2057 = vcmp.eq.f32.partialorder %v2056, 8.507059e+37
    %v2058 = vand.u32 %v1790, 2147483648
    %v2059 = vor.u32 1.1754944e-38, %v2058
    %v2060 = vsel %vm2057, %v2059, %v2055
    %v2061 = vmul.f32 %v1662, %v2060
    %v2062 = vrcp.pop %v1792
    %v2063 = vmul.f32 %v1792, %v2062
    %v2064 = vsub.f32 1.0, %v2063
    %v2065 = vmul.f32 %v2062, %v2064
    %v2066 = vadd.f32 %v2062, %v2065
    %vm2067 = vweird.f32 %v1792
    %vm2068 = vweird.f32 %v2062
    %vm2069 = vmor %vm2067, %vm2068
    %v2070 = vsel %vm2069, %v2062, %v2066
    %v2071 = vand.u32 2147483647, %v1792
    %vm2072 = vcmp.eq.f32.partialorder %v2071, 8.507059e+37
    %v2073 = vand.u32 %v1792, 2147483648
    %v2074 = vor.u32 1.1754944e-38, %v2073
    %v2075 = vsel %vm2072, %v2074, %v2070
    %v2076 = vmul.f32 %v1664, %v2075
    %v2077 = vrcp.pop %v1794
    %v2078 = vmul.f32 %v1794, %v2077
    %v2079 = vsub.f32 1.0, %v2078
    %v2080 = vmul.f32 %v2077, %v2079
    %v2081 = vadd.f32 %v2077, %v2080
    %vm2082 = vweird.f32 %v1794
    %vm2083 = vweird.f32 %v2077
    %vm2084 = vmor %vm2082, %vm2083
    %v2085 = vsel %vm2084, %v2077, %v2081
    %v2086 = vand.u32 2147483647, %v1794
    %vm2087 = vcmp.eq.f32.partialorder %v2086, 8.507059e+37
    %v2088 = vand.u32 %v1794, 2147483648
    %v2089 = vor.u32 1.1754944e-38, %v2088
    %v2090 = vsel %vm2087, %v2089, %v2085
    %v2091 = vmul.f32 %v1666, %v2090
    %v2092 = vrcp.pop %v1796
    %v2093 = vmul.f32 %v1796, %v2092
    %v2094 = vsub.f32 1.0, %v2093
    %v2095 = vmul.f32 %v2092, %v2094
    %v2096 = vadd.f32 %v2092, %v2095
    %vm2097 = vweird.f32 %v1796
    %vm2098 = vweird.f32 %v2092
    %vm2099 = vmor %vm2097, %vm2098
    %v2100 = vsel %vm2099, %v2092, %v2096
    %v2101 = vand.u32 2147483647, %v1796
    %vm2102 = vcmp.eq.f32.partialorder %v2101, 8.507059e+37
    %v2103 = vand.u32 %v1796, 2147483648
    %v2104 = vor.u32 1.1754944e-38, %v2103
    %v2105 = vsel %vm2102, %v2104, %v2100
    %v2106 = vmul.f32 %v1668, %v2105
    %v2107 = vrcp.pop %v1798
    %v2108 = vmul.f32 %v1798, %v2107
    %v2109 = vsub.f32 1.0, %v2108
    %v2110 = vmul.f32 %v2107, %v2109
    %v2111 = vadd.f32 %v2107, %v2110
    %vm2112 = vweird.f32 %v1798
    %vm2113 = vweird.f32 %v2107
    %vm2114 = vmor %vm2112, %vm2113
    %v2115 = vsel %vm2114, %v2107, %v2111
    %v2116 = vand.u32 2147483647, %v1798
    %vm2117 = vcmp.eq.f32.partialorder %v2116, 8.507059e+37
    %v2118 = vand.u32 %v1798, 2147483648
    %v2119 = vor.u32 1.1754944e-38, %v2118
    %v2120 = vsel %vm2117, %v2119, %v2115
    %v2121 = vmul.f32 %v1670, %v2120
    %v2122 = vrcp.pop %v1800
    %v2123 = vmul.f32 %v1800, %v2122
    %v2124 = vsub.f32 1.0, %v2123
    %v2125 = vmul.f32 %v2122, %v2124
    %v2126 = vadd.f32 %v2122, %v2125
    %vm2127 = vweird.f32 %v1800
    %vm2128 = vweird.f32 %v2122
    %vm2129 = vmor %vm2127, %vm2128
    %v2130 = vsel %vm2129, %v2122, %v2126
    %v2131 = vand.u32 2147483647, %v1800
    %vm2132 = vcmp.eq.f32.partialorder %v2131, 8.507059e+37
    %v2133 = vand.u32 %v1800, 2147483648
    %v2134 = vor.u32 1.1754944e-38, %v2133
    %v2135 = vsel %vm2132, %v2134, %v2130
    %v2136 = vmul.f32 %v1672, %v2135
    %v2137 = vrcp.pop %v1802
    %v2138 = vmul.f32 %v1802, %v2137
    %v2139 = vsub.f32 1.0, %v2138
    %v2140 = vmul.f32 %v2137, %v2139
    %v2141 = vadd.f32 %v2137, %v2140
    %vm2142 = vweird.f32 %v1802
    %vm2143 = vweird.f32 %v2137
    %vm2144 = vmor %vm2142, %vm2143
    %v2145 = vsel %vm2144, %v2137, %v2141
    %v2146 = vand.u32 2147483647, %v1802
    %vm2147 = vcmp.eq.f32.partialorder %v2146, 8.507059e+37
    %v2148 = vand.u32 %v1802, 2147483648
    %v2149 = vor.u32 1.1754944e-38, %v2148
    %v2150 = vsel %vm2147, %v2149, %v2145
    %v2151 = vmul.f32 %v1674, %v2150
    %v2152 = vrcp.pop %v1804
    %v2153 = vmul.f32 %v1804, %v2152
    %v2154 = vsub.f32 1.0, %v2153
    %v2155 = vmul.f32 %v2152, %v2154
    %v2156 = vadd.f32 %v2152, %v2155
    %vm2157 = vweird.f32 %v1804
    %vm2158 = vweird.f32 %v2152
    %vm2159 = vmor %vm2157, %vm2158
    %v2160 = vsel %vm2159, %v2152, %v2156
    %v2161 = vand.u32 2147483647, %v1804
    %vm2162 = vcmp.eq.f32.partialorder %v2161, 8.507059e+37
    %v2163 = vand.u32 %v1804, 2147483648
    %v2164 = vor.u32 1.1754944e-38, %v2163
    %v2165 = vsel %vm2162, %v2164, %v2160
    %v2166 = vmul.f32 %v1676, %v2165
    %v2167 = vrcp.pop %v1806
    %v2168 = vmul.f32 %v1806, %v2167
    %v2169 = vsub.f32 1.0, %v2168
    %v2170 = vmul.f32 %v2167, %v2169
    %v2171 = vadd.f32 %v2167, %v2170
    %vm2172 = vweird.f32 %v1806
    %vm2173 = vweird.f32 %v2167
    %vm2174 = vmor %vm2172, %vm2173
    %v2175 = vsel %vm2174, %v2167, %v2171
    %v2176 = vand.u32 2147483647, %v1806
    %vm2177 = vcmp.eq.f32.partialorder %v2176, 8.507059e+37
    %v2178 = vand.u32 %v1806, 2147483648
    %v2179 = vor.u32 1.1754944e-38, %v2178
    %v2180 = vsel %vm2177, %v2179, %v2175
    %v2181 = vmul.f32 %v1678, %v2180
    %v2182 = vrcp.pop %v1808
    %v2183 = vmul.f32 %v1808, %v2182
    %v2184 = vsub.f32 1.0, %v2183
    %v2185 = vmul.f32 %v2182, %v2184
    %v2186 = vadd.f32 %v2182, %v2185
    %vm2187 = vweird.f32 %v1808
    %vm2188 = vweird.f32 %v2182
    %vm2189 = vmor %vm2187, %vm2188
    %v2190 = vsel %vm2189, %v2182, %v2186
    %v2191 = vand.u32 2147483647, %v1808
    %vm2192 = vcmp.eq.f32.partialorder %v2191, 8.507059e+37
    %v2193 = vand.u32 %v1808, 2147483648
    %v2194 = vor.u32 1.1754944e-38, %v2193
    %v2195 = vsel %vm2192, %v2194, %v2190
    %v2196 = vmul.f32 %v1680, %v2195
    %v2197 = vrcp.pop %v1810
    %v2198 = vmul.f32 %v1810, %v2197
    %v2199 = vsub.f32 1.0, %v2198
    %v2200 = vmul.f32 %v2197, %v2199
    %v2201 = vadd.f32 %v2197, %v2200
    %vm2202 = vweird.f32 %v1810
    %vm2203 = vweird.f32 %v2197
    %vm2204 = vmor %vm2202, %vm2203
    %v2205 = vsel %vm2204, %v2197, %v2201
    %v2206 = vand.u32 2147483647, %v1810
    %vm2207 = vcmp.eq.f32.partialorder %v2206, 8.507059e+37
    %v2208 = vand.u32 %v1810, 2147483648
    %v2209 = vor.u32 1.1754944e-38, %v2208
    %v2210 = vsel %vm2207, %v2209, %v2205
    %v2211 = vmul.f32 %v1682, %v2210
    %v2212 = vrcp.pop %v1812
    %v2213 = vmul.f32 %v1812, %v2212
    %v2214 = vsub.f32 1.0, %v2213
    %v2215 = vmul.f32 %v2212, %v2214
    %v2216 = vadd.f32 %v2212, %v2215
    %vm2217 = vweird.f32 %v1812
    %vm2218 = vweird.f32 %v2212
    %vm2219 = vmor %vm2217, %vm2218
    %v2220 = vsel %vm2219, %v2212, %v2216
    %v2221 = vand.u32 2147483647, %v1812
    %vm2222 = vcmp.eq.f32.partialorder %v2221, 8.507059e+37
    %v2223 = vand.u32 %v1812, 2147483648
    %v2224 = vor.u32 1.1754944e-38, %v2223
    %v2225 = vsel %vm2222, %v2224, %v2220
    %v2226 = vmul.f32 %v1684, %v2225
    %v2227 = vrcp.pop %v1814
    %v2228 = vmul.f32 %v1814, %v2227
    %v2229 = vsub.f32 1.0, %v2228
    %v2230 = vmul.f32 %v2227, %v2229
    %v2231 = vadd.f32 %v2227, %v2230
    %vm2232 = vweird.f32 %v1814
    %vm2233 = vweird.f32 %v2227
    %vm2234 = vmor %vm2232, %vm2233
    %v2235 = vsel %vm2234, %v2227, %v2231
    %v2236 = vand.u32 2147483647, %v1814
    %vm2237 = vcmp.eq.f32.partialorder %v2236, 8.507059e+37
    %v2238 = vand.u32 %v1814, 2147483648
    %v2239 = vor.u32 1.1754944e-38, %v2238
    %v2240 = vsel %vm2237, %v2239, %v2235
    %v2241 = vmul.f32 %v1686, %v2240
    %v2242 = vrcp.pop %v1816
    %v2243 = vmul.f32 %v1816, %v2242
    %v2244 = vsub.f32 1.0, %v2243
    %v2245 = vmul.f32 %v2242, %v2244
    %v2246 = vadd.f32 %v2242, %v2245
    %vm2247 = vweird.f32 %v1816
    %vm2248 = vweird.f32 %v2242
    %vm2249 = vmor %vm2247, %vm2248
    %v2250 = vsel %vm2249, %v2242, %v2246
    %v2251 = vand.u32 2147483647, %v1816
    %vm2252 = vcmp.eq.f32.partialorder %v2251, 8.507059e+37
    %v2253 = vand.u32 %v1816, 2147483648
    %v2254 = vor.u32 1.1754944e-38, %v2253
    %v2255 = vsel %vm2252, %v2254, %v2250
    %v2256 = vmul.f32 %v1688, %v2255
    %v2257 = vrcp.pop %v1818
    %v2258 = vmul.f32 %v1818, %v2257
    %v2259 = vsub.f32 1.0, %v2258
    %v2260 = vmul.f32 %v2257, %v2259
    %v2261 = vadd.f32 %v2257, %v2260
    %vm2262 = vweird.f32 %v1818
    %vm2263 = vweird.f32 %v2257
    %vm2264 = vmor %vm2262, %vm2263
    %v2265 = vsel %vm2264, %v2257, %v2261
    %v2266 = vand.u32 2147483647, %v1818
    %vm2267 = vcmp.eq.f32.partialorder %v2266, 8.507059e+37
    %v2268 = vand.u32 %v1818, 2147483648
    %v2269 = vor.u32 1.1754944e-38, %v2268
    %v2270 = vsel %vm2267, %v2269, %v2265
    %v2271 = vmul.f32 %v1690, %v2270
    %v2272 = vrcp.pop %v1820
    %v2273 = vmul.f32 %v1820, %v2272
    %v2274 = vsub.f32 1.0, %v2273
    %v2275 = vmul.f32 %v2272, %v2274
    %v2276 = vadd.f32 %v2272, %v2275
    %vm2277 = vweird.f32 %v1820
    %vm2278 = vweird.f32 %v2272
    %vm2279 = vmor %vm2277, %vm2278
    %v2280 = vsel %vm2279, %v2272, %v2276
    %v2281 = vand.u32 2147483647, %v1820
    %vm2282 = vcmp.eq.f32.partialorder %v2281, 8.507059e+37
    %v2283 = vand.u32 %v1820, 2147483648
    %v2284 = vor.u32 1.1754944e-38, %v2283
    %v2285 = vsel %vm2282, %v2284, %v2280
    %v2286 = vmul.f32 %v1692, %v2285
    %v2287 = vrcp.pop %v1822
    %v2288 = vmul.f32 %v1822, %v2287
    %v2289 = vsub.f32 1.0, %v2288
    %v2290 = vmul.f32 %v2287, %v2289
    %v2291 = vadd.f32 %v2287, %v2290
    %vm2292 = vweird.f32 %v1822
    %vm2293 = vweird.f32 %v2287
    %vm2294 = vmor %vm2292, %vm2293
    %v2295 = vsel %vm2294, %v2287, %v2291
    %v2296 = vand.u32 2147483647, %v1822
    %vm2297 = vcmp.eq.f32.partialorder %v2296, 8.507059e+37
    %v2298 = vand.u32 %v1822, 2147483648
    %v2299 = vor.u32 1.1754944e-38, %v2298
    %v2300 = vsel %vm2297, %v2299, %v2295
    %v2301 = vmul.f32 %v1694, %v2300
    %v2302 = vrcp.pop %v1824
    %v2303 = vmul.f32 %v1824, %v2302
    %v2304 = vsub.f32 1.0, %v2303
    %v2305 = vmul.f32 %v2302, %v2304
    %v2306 = vadd.f32 %v2302, %v2305
    %vm2307 = vweird.f32 %v1824
    %vm2308 = vweird.f32 %v2302
    %vm2309 = vmor %vm2307, %vm2308
    %v2310 = vsel %vm2309, %v2302, %v2306
    %v2311 = vand.u32 2147483647, %v1824
    %vm2312 = vcmp.eq.f32.partialorder %v2311, 8.507059e+37
    %v2313 = vand.u32 %v1824, 2147483648
    %v2314 = vor.u32 1.1754944e-38, %v2313
    %v2315 = vsel %vm2312, %v2314, %v2310
    %v2316 = vmul.f32 %v1696, %v2315
    %v2317 = vrcp.pop %v1826
    %v2318 = vmul.f32 %v1826, %v2317
    %v2319 = vsub.f32 1.0, %v2318
    %v2320 = vmul.f32 %v2317, %v2319
    %v2321 = vadd.f32 %v2317, %v2320
    %vm2322 = vweird.f32 %v1826
    %vm2323 = vweird.f32 %v2317
    %vm2324 = vmor %vm2322, %vm2323
    %v2325 = vsel %vm2324, %v2317, %v2321
    %v2326 = vand.u32 2147483647, %v1826
    %vm2327 = vcmp.eq.f32.partialorder %v2326, 8.507059e+37
    %v2328 = vand.u32 %v1826, 2147483648
    %v2329 = vor.u32 1.1754944e-38, %v2328
    %v2330 = vsel %vm2327, %v2329, %v2325
    %v2331 = vmul.f32 %v1698, %v2330
    %v2332 = vrcp.pop %v1828
    %v2333 = vmul.f32 %v1828, %v2332
    %v2334 = vsub.f32 1.0, %v2333
    %v2335 = vmul.f32 %v2332, %v2334
    %v2336 = vadd.f32 %v2332, %v2335
    %vm2337 = vweird.f32 %v1828
    %vm2338 = vweird.f32 %v2332
    %vm2339 = vmor %vm2337, %vm2338
    %v2340 = vsel %vm2339, %v2332, %v2336
    %v2341 = vand.u32 2147483647, %v1828
    %vm2342 = vcmp.eq.f32.partialorder %v2341, 8.507059e+37
    %v2343 = vand.u32 %v1828, 2147483648
    %v2344 = vor.u32 1.1754944e-38, %v2343
    %v2345 = vsel %vm2342, %v2344, %v2340
    %v2346 = vmul.f32 %v1700, %v2345
    %v2347 = vrcp.pop %v1830
    %v2348 = vmul.f32 %v1830, %v2347
    %v2349 = vsub.f32 1.0, %v2348
    %v2350 = vmul.f32 %v2347, %v2349
    %v2351 = vadd.f32 %v2347, %v2350
    %vm2352 = vweird.f32 %v1830
    %vm2353 = vweird.f32 %v2347
    %vm2354 = vmor %vm2352, %vm2353
    %v2355 = vsel %vm2354, %v2347, %v2351
    %v2356 = vand.u32 2147483647, %v1830
    %vm2357 = vcmp.eq.f32.partialorder %v2356, 8.507059e+37
    %v2358 = vand.u32 %v1830, 2147483648
    %v2359 = vor.u32 1.1754944e-38, %v2358
    %v2360 = vsel %vm2357, %v2359, %v2355
    %v2361 = vmul.f32 %v1702, %v2360
    %v2362 = vrcp.pop %v1832
    %v2363 = vmul.f32 %v1832, %v2362
    %v2364 = vsub.f32 1.0, %v2363
    %v2365 = vmul.f32 %v2362, %v2364
    %v2366 = vadd.f32 %v2362, %v2365
    %vm2367 = vweird.f32 %v1832
    %vm2368 = vweird.f32 %v2362
    %vm2369 = vmor %vm2367, %vm2368
    %v2370 = vsel %vm2369, %v2362, %v2366
    %v2371 = vand.u32 2147483647, %v1832
    %vm2372 = vcmp.eq.f32.partialorder %v2371, 8.507059e+37
    %v2373 = vand.u32 %v1832, 2147483648
    %v2374 = vor.u32 1.1754944e-38, %v2373
    %v2375 = vsel %vm2372, %v2374, %v2370
    %v2376 = vmul.f32 %v1704, %v2375
    %v2377 = vrcp.pop %v1834
    %v2378 = vmul.f32 %v1834, %v2377
    %v2379 = vsub.f32 1.0, %v2378
    %v2380 = vmul.f32 %v2377, %v2379
    %v2381 = vadd.f32 %v2377, %v2380
    %vm2382 = vweird.f32 %v1834
    %vm2383 = vweird.f32 %v2377
    %vm2384 = vmor %vm2382, %vm2383
    %v2385 = vsel %vm2384, %v2377, %v2381
    %v2386 = vand.u32 2147483647, %v1834
    %vm2387 = vcmp.eq.f32.partialorder %v2386, 8.507059e+37
    %v2388 = vand.u32 %v1834, 2147483648
    %v2389 = vor.u32 1.1754944e-38, %v2388
    %v2390 = vsel %vm2387, %v2389, %v2385
    %v2391 = vmul.f32 %v1706, %v2390
    %v2392 = vrcp.pop %v1836
    %v2393 = vmul.f32 %v1836, %v2392
    %v2394 = vsub.f32 1.0, %v2393
    %v2395 = vmul.f32 %v2392, %v2394
    %v2396 = vadd.f32 %v2392, %v2395
    %vm2397 = vweird.f32 %v1836
    %vm2398 = vweird.f32 %v2392
    %vm2399 = vmor %vm2397, %vm2398
    %v2400 = vsel %vm2399, %v2392, %v2396
    %v2401 = vand.u32 2147483647, %v1836
    %vm2402 = vcmp.eq.f32.partialorder %v2401, 8.507059e+37
    %v2403 = vand.u32 %v1836, 2147483648
    %v2404 = vor.u32 1.1754944e-38, %v2403
    %v2405 = vsel %vm2402, %v2404, %v2400
    %v2406 = vmul.f32 %v1708, %v2405
    %v2407 = vrcp.pop %v1838
    %v2408 = vmul.f32 %v1838, %v2407
    %v2409 = vsub.f32 1.0, %v2408
    %v2410 = vmul.f32 %v2407, %v2409
    %v2411 = vadd.f32 %v2407, %v2410
    %vm2412 = vweird.f32 %v1838
    %vm2413 = vweird.f32 %v2407
    %vm2414 = vmor %vm2412, %vm2413
    %v2415 = vsel %vm2414, %v2407, %v2411
    %v2416 = vand.u32 2147483647, %v1838
    %vm2417 = vcmp.eq.f32.partialorder %v2416, 8.507059e+37
    %v2418 = vand.u32 %v1838, 2147483648
    %v2419 = vor.u32 1.1754944e-38, %v2418
    %v2420 = vsel %vm2417, %v2419, %v2415
    %v2421 = vmul.f32 %v1710, %v2420
    %v2422 = vrcp.pop %v1840
    %v2423 = vmul.f32 %v1840, %v2422
    %v2424 = vsub.f32 1.0, %v2423
    %v2425 = vmul.f32 %v2422, %v2424
    %v2426 = vadd.f32 %v2422, %v2425
    %vm2427 = vweird.f32 %v1840
    %vm2428 = vweird.f32 %v2422
    %vm2429 = vmor %vm2427, %vm2428
    %v2430 = vsel %vm2429, %v2422, %v2426
    %v2431 = vand.u32 2147483647, %v1840
    %vm2432 = vcmp.eq.f32.partialorder %v2431, 8.507059e+37
    %v2433 = vand.u32 %v1840, 2147483648
    %v2434 = vor.u32 1.1754944e-38, %v2433
    %v2435 = vsel %vm2432, %v2434, %v2430
    %v2436 = vmul.f32 %v1712, %v2435
    %v2437 = vrcp.pop %v1842
    %v2438 = vmul.f32 %v1842, %v2437
    %v2439 = vsub.f32 1.0, %v2438
    %v2440 = vmul.f32 %v2437, %v2439
    %v2441 = vadd.f32 %v2437, %v2440
    %vm2442 = vweird.f32 %v1842
    %vm2443 = vweird.f32 %v2437
    %vm2444 = vmor %vm2442, %vm2443
    %v2445 = vsel %vm2444, %v2437, %v2441
    %v2446 = vand.u32 2147483647, %v1842
    %vm2447 = vcmp.eq.f32.partialorder %v2446, 8.507059e+37
    %v2448 = vand.u32 %v1842, 2147483648
    %v2449 = vor.u32 1.1754944e-38, %v2448
    %v2450 = vsel %vm2447, %v2449, %v2445
    %v2451 = vmul.f32 %v1714, %v2450
    %v2452 = vrcp.pop %v1844
    %v2453 = vmul.f32 %v1844, %v2452
    %v2454 = vsub.f32 1.0, %v2453
    %v2455 = vmul.f32 %v2452, %v2454
    %v2456 = vadd.f32 %v2452, %v2455
    %vm2457 = vweird.f32 %v1844
    %vm2458 = vweird.f32 %v2452
    %vm2459 = vmor %vm2457, %vm2458
    %v2460 = vsel %vm2459, %v2452, %v2456
    %v2461 = vand.u32 2147483647, %v1844
    %vm2462 = vcmp.eq.f32.partialorder %v2461, 8.507059e+37
    %v2463 = vand.u32 %v1844, 2147483648
    %v2464 = vor.u32 1.1754944e-38, %v2463
    %v2465 = vsel %vm2462, %v2464, %v2460
    %v2466 = vmul.f32 %v1716, %v2465
    %v2467 = vrcp.pop %v1846
    %v2468 = vmul.f32 %v1846, %v2467
    %v2469 = vsub.f32 1.0, %v2468
    %v2470 = vmul.f32 %v2467, %v2469
    %v2471 = vadd.f32 %v2467, %v2470
    %vm2472 = vweird.f32 %v1846
    %vm2473 = vweird.f32 %v2467
    %vm2474 = vmor %vm2472, %vm2473
    %v2475 = vsel %vm2474, %v2467, %v2471
    %v2476 = vand.u32 2147483647, %v1846
    %vm2477 = vcmp.eq.f32.partialorder %v2476, 8.507059e+37
    %v2478 = vand.u32 %v1846, 2147483648
    %v2479 = vor.u32 1.1754944e-38, %v2478
    %v2480 = vsel %vm2477, %v2479, %v2475
    %v2481 = vmul.f32 %v1718, %v2480
    %v2482 = vrcp.pop %v1848
    %v2483 = vmul.f32 %v1848, %v2482
    %v2484 = vsub.f32 1.0, %v2483
    %v2485 = vmul.f32 %v2482, %v2484
    %v2486 = vadd.f32 %v2482, %v2485
    %vm2487 = vweird.f32 %v1848
    %vm2488 = vweird.f32 %v2482
    %vm2489 = vmor %vm2487, %vm2488
    %v2490 = vsel %vm2489, %v2482, %v2486
    %v2491 = vand.u32 2147483647, %v1848
    %vm2492 = vcmp.eq.f32.partialorder %v2491, 8.507059e+37
    %v2493 = vand.u32 %v1848, 2147483648
    %v2494 = vor.u32 1.1754944e-38, %v2493
    %v2495 = vsel %vm2492, %v2494, %v2490
    %v2496 = vmul.f32 %v1720, %v2495
    %v2497 = vrcp.pop %v1850
    %v2498 = vmul.f32 %v1850, %v2497
    %v2499 = vsub.f32 1.0, %v2498
    %v2500 = vmul.f32 %v2497, %v2499
    %v2501 = vadd.f32 %v2497, %v2500
    %vm2502 = vweird.f32 %v1850
    %vm2503 = vweird.f32 %v2497
    %vm2504 = vmor %vm2502, %vm2503
    %v2505 = vsel %vm2504, %v2497, %v2501
    %v2506 = vand.u32 2147483647, %v1850
    %vm2507 = vcmp.eq.f32.partialorder %v2506, 8.507059e+37
    %v2508 = vand.u32 %v1850, 2147483648
    %v2509 = vor.u32 1.1754944e-38, %v2508
    %v2510 = vsel %vm2507, %v2509, %v2505
    %v2511 = vmul.f32 %v1722, %v2510
    %v2512 = vrcp.pop %v1852
    %v2513 = vmul.f32 %v1852, %v2512
    %v2514 = vsub.f32 1.0, %v2513
    %v2515 = vmul.f32 %v2512, %v2514
    %v2516 = vadd.f32 %v2512, %v2515
    %vm2517 = vweird.f32 %v1852
    %vm2518 = vweird.f32 %v2512
    %vm2519 = vmor %vm2517, %vm2518
    %v2520 = vsel %vm2519, %v2512, %v2516
    %v2521 = vand.u32 2147483647, %v1852
    %vm2522 = vcmp.eq.f32.partialorder %v2521, 8.507059e+37
    %v2523 = vand.u32 %v1852, 2147483648
    %v2524 = vor.u32 1.1754944e-38, %v2523
    %v2525 = vsel %vm2522, %v2524, %v2520
    %v2526 = vmul.f32 %v1724, %v2525
    %v2527 = vrcp.pop %v1854
    %v2528 = vmul.f32 %v1854, %v2527
    %v2529 = vsub.f32 1.0, %v2528
    %v2530 = vmul.f32 %v2527, %v2529
    %v2531 = vadd.f32 %v2527, %v2530
    %vm2532 = vweird.f32 %v1854
    %vm2533 = vweird.f32 %v2527
    %vm2534 = vmor %vm2532, %vm2533
    %v2535 = vsel %vm2534, %v2527, %v2531
    %v2536 = vand.u32 2147483647, %v1854
    %vm2537 = vcmp.eq.f32.partialorder %v2536, 8.507059e+37
    %v2538 = vand.u32 %v1854, 2147483648
    %v2539 = vor.u32 1.1754944e-38, %v2538
    %v2540 = vsel %vm2537, %v2539, %v2535
    %v2541 = vmul.f32 %v1726, %v2540
    %v2542 = vrcp.pop %v1856
    %v2543 = vmul.f32 %v1856, %v2542
    %v2544 = vsub.f32 1.0, %v2543
    %v2545 = vmul.f32 %v2542, %v2544
    %v2546 = vadd.f32 %v2542, %v2545
    %vm2547 = vweird.f32 %v1856
    %vm2548 = vweird.f32 %v2542
    %vm2549 = vmor %vm2547, %vm2548
    %v2550 = vsel %vm2549, %v2542, %v2546
    %v2551 = vand.u32 2147483647, %v1856
    %vm2552 = vcmp.eq.f32.partialorder %v2551, 8.507059e+37
    %v2553 = vand.u32 %v1856, 2147483648
    %v2554 = vor.u32 1.1754944e-38, %v2553
    %v2555 = vsel %vm2552, %v2554, %v2550
    %v2556 = vmul.f32 %v1728, %v2555
    %v2557 = vrcp.pop %v1858
    %v2558 = vmul.f32 %v1858, %v2557
    %v2559 = vsub.f32 1.0, %v2558
    %v2560 = vmul.f32 %v2557, %v2559
    %v2561 = vadd.f32 %v2557, %v2560
    %vm2562 = vweird.f32 %v1858
    %vm2563 = vweird.f32 %v2557
    %vm2564 = vmor %vm2562, %vm2563
    %v2565 = vsel %vm2564, %v2557, %v2561
    %v2566 = vand.u32 2147483647, %v1858
    %vm2567 = vcmp.eq.f32.partialorder %v2566, 8.507059e+37
    %v2568 = vand.u32 %v1858, 2147483648
    %v2569 = vor.u32 1.1754944e-38, %v2568
    %v2570 = vsel %vm2567, %v2569, %v2565
    %v2571 = vmul.f32 %v1730, %v2570
    %v2572 = vrcp.pop %v1860
    %v2573 = vmul.f32 %v1860, %v2572
    %v2574 = vsub.f32 1.0, %v2573
    %v2575 = vmul.f32 %v2572, %v2574
    %v2576 = vadd.f32 %v2572, %v2575
    %vm2577 = vweird.f32 %v1860
    %vm2578 = vweird.f32 %v2572
    %vm2579 = vmor %vm2577, %vm2578
    %v2580 = vsel %vm2579, %v2572, %v2576
    %v2581 = vand.u32 2147483647, %v1860
    %vm2582 = vcmp.eq.f32.partialorder %v2581, 8.507059e+37
    %v2583 = vand.u32 %v1860, 2147483648
    %v2584 = vor.u32 1.1754944e-38, %v2583
    %v2585 = vsel %vm2582, %v2584, %v2580
    %v2586 = vmul.f32 %v1732, %v2585
    %v2587 = vrcp.pop %v1862
    %v2588 = vmul.f32 %v1862, %v2587
    %v2589 = vsub.f32 1.0, %v2588
    %v2590 = vmul.f32 %v2587, %v2589
    %v2591 = vadd.f32 %v2587, %v2590
    %vm2592 = vweird.f32 %v1862
    %vm2593 = vweird.f32 %v2587
    %vm2594 = vmor %vm2592, %vm2593
    %v2595 = vsel %vm2594, %v2587, %v2591
    %v2596 = vand.u32 2147483647, %v1862
    %vm2597 = vcmp.eq.f32.partialorder %v2596, 8.507059e+37
    %v2598 = vand.u32 %v1862, 2147483648
    %v2599 = vor.u32 1.1754944e-38, %v2598
    %v2600 = vsel %vm2597, %v2599, %v2595
    %v2601 = vmul.f32 %v1734, %v2600
    %v2602 = vrcp.pop %v1864
    %v2603 = vmul.f32 %v1864, %v2602
    %v2604 = vsub.f32 1.0, %v2603
    %v2605 = vmul.f32 %v2602, %v2604
    %v2606 = vadd.f32 %v2602, %v2605
    %vm2607 = vweird.f32 %v1864
    %vm2608 = vweird.f32 %v2602
    %vm2609 = vmor %vm2607, %vm2608
    %v2610 = vsel %vm2609, %v2602, %v2606
    %v2611 = vand.u32 2147483647, %v1864
    %vm2612 = vcmp.eq.f32.partialorder %v2611, 8.507059e+37
    %v2613 = vand.u32 %v1864, 2147483648
    %v2614 = vor.u32 1.1754944e-38, %v2613
    %v2615 = vsel %vm2612, %v2614, %v2610
    %v2616 = vmul.f32 %v1736, %v2615
    %v2617 = vrcp.pop %v1866
    %v2618 = vmul.f32 %v1866, %v2617
    %v2619 = vsub.f32 1.0, %v2618
    %v2620 = vmul.f32 %v2617, %v2619
    %v2621 = vadd.f32 %v2617, %v2620
    %vm2622 = vweird.f32 %v1866
    %vm2623 = vweird.f32 %v2617
    %vm2624 = vmor %vm2622, %vm2623
    %v2625 = vsel %vm2624, %v2617, %v2621
    %v2626 = vand.u32 2147483647, %v1866
    %vm2627 = vcmp.eq.f32.partialorder %v2626, 8.507059e+37
    %v2628 = vand.u32 %v1866, 2147483648
    %v2629 = vor.u32 1.1754944e-38, %v2628
    %v2630 = vsel %vm2627, %v2629, %v2625
    %v2631 = vmul.f32 %v1738, %v2630
    %v2632 = vrcp.pop %v1868
    %v2633 = vmul.f32 %v1868, %v2632
    %v2634 = vsub.f32 1.0, %v2633
    %v2635 = vmul.f32 %v2632, %v2634
    %v2636 = vadd.f32 %v2632, %v2635
    %vm2637 = vweird.f32 %v1868
    %vm2638 = vweird.f32 %v2632
    %vm2639 = vmor %vm2637, %vm2638
    %v2640 = vsel %vm2639, %v2632, %v2636
    %v2641 = vand.u32 2147483647, %v1868
    %vm2642 = vcmp.eq.f32.partialorder %v2641, 8.507059e+37
    %v2643 = vand.u32 %v1868, 2147483648
    %v2644 = vor.u32 1.1754944e-38, %v2643
    %v2645 = vsel %vm2642, %v2644, %v2640
    %v2646 = vmul.f32 %v1740, %v2645
    %v2647 = vrcp.pop %v1870
    %v2648 = vmul.f32 %v1870, %v2647
    %v2649 = vsub.f32 1.0, %v2648
    %v2650 = vmul.f32 %v2647, %v2649
    %v2651 = vadd.f32 %v2647, %v2650
    %vm2652 = vweird.f32 %v1870
    %vm2653 = vweird.f32 %v2647
    %vm2654 = vmor %vm2652, %vm2653
    %v2655 = vsel %vm2654, %v2647, %v2651
    %v2656 = vand.u32 2147483647, %v1870
    %vm2657 = vcmp.eq.f32.partialorder %v2656, 8.507059e+37
    %v2658 = vand.u32 %v1870, 2147483648
    %v2659 = vor.u32 1.1754944e-38, %v2658
    %v2660 = vsel %vm2657, %v2659, %v2655
    %v2661 = vmul.f32 %v1742, %v2660
    %v2662 = vrcp.pop %v1872
    %v2663 = vmul.f32 %v1872, %v2662
    %v2664 = vsub.f32 1.0, %v2663
    %v2665 = vmul.f32 %v2662, %v2664
    %v2666 = vadd.f32 %v2662, %v2665
    %vm2667 = vweird.f32 %v1872
    %vm2668 = vweird.f32 %v2662
    %vm2669 = vmor %vm2667, %vm2668
    %v2670 = vsel %vm2669, %v2662, %v2666
    %v2671 = vand.u32 2147483647, %v1872
    %vm2672 = vcmp.eq.f32.partialorder %v2671, 8.507059e+37
    %v2673 = vand.u32 %v1872, 2147483648
    %v2674 = vor.u32 1.1754944e-38, %v2673
    %v2675 = vsel %vm2672, %v2674, %v2670
    %v2676 = vmul.f32 %v1744, %v2675
    %v2677 = vrcp.pop %v1874
    %v2678 = vmul.f32 %v1874, %v2677
    %v2679 = vsub.f32 1.0, %v2678
    %v2680 = vmul.f32 %v2677, %v2679
    %v2681 = vadd.f32 %v2677, %v2680
    %vm2682 = vweird.f32 %v1874
    %vm2683 = vweird.f32 %v2677
    %vm2684 = vmor %vm2682, %vm2683
    %v2685 = vsel %vm2684, %v2677, %v2681
    %v2686 = vand.u32 2147483647, %v1874
    %vm2687 = vcmp.eq.f32.partialorder %v2686, 8.507059e+37
    %v2688 = vand.u32 %v1874, 2147483648
    %v2689 = vor.u32 1.1754944e-38, %v2688
    %v2690 = vsel %vm2687, %v2689, %v2685
    %v2691 = vmul.f32 %v1746, %v2690
    %v2692 = vrcp.pop %v1876
    %v2693 = vmul.f32 %v1876, %v2692
    %v2694 = vsub.f32 1.0, %v2693
    %v2695 = vmul.f32 %v2692, %v2694
    %v2696 = vadd.f32 %v2692, %v2695
    %vm2697 = vweird.f32 %v1876
    %vm2698 = vweird.f32 %v2692
    %vm2699 = vmor %vm2697, %vm2698
    %v2700 = vsel %vm2699, %v2692, %v2696
    %v2701 = vand.u32 2147483647, %v1876
    %vm2702 = vcmp.eq.f32.partialorder %v2701, 8.507059e+37
    %v2703 = vand.u32 %v1876, 2147483648
    %v2704 = vor.u32 1.1754944e-38, %v2703
    %v2705 = vsel %vm2702, %v2704, %v2700
    %v2706 = vmul.f32 %v1748, %v2705
    %v2707 = vrcp.pop %v1878
    %v2708 = vmul.f32 %v1878, %v2707
    %v2709 = vsub.f32 1.0, %v2708
    %v2710 = vmul.f32 %v2707, %v2709
    %v2711 = vadd.f32 %v2707, %v2710
    %vm2712 = vweird.f32 %v1878
    %vm2713 = vweird.f32 %v2707
    %vm2714 = vmor %vm2712, %vm2713
    %v2715 = vsel %vm2714, %v2707, %v2711
    %v2716 = vand.u32 2147483647, %v1878
    %vm2717 = vcmp.eq.f32.partialorder %v2716, 8.507059e+37
    %v2718 = vand.u32 %v1878, 2147483648
    %v2719 = vor.u32 1.1754944e-38, %v2718
    %v2720 = vsel %vm2717, %v2719, %v2715
    %v2721 = vmul.f32 %v1750, %v2720
    %v2722 = vrcp.pop %v1880
    %v2723 = vmul.f32 %v1880, %v2722
    %v2724 = vsub.f32 1.0, %v2723
    %v2725 = vmul.f32 %v2722, %v2724
    %v2726 = vadd.f32 %v2722, %v2725
    %vm2727 = vweird.f32 %v1880
    %vm2728 = vweird.f32 %v2722
    %vm2729 = vmor %vm2727, %vm2728
    %v2730 = vsel %vm2729, %v2722, %v2726
    %v2731 = vand.u32 2147483647, %v1880
    %vm2732 = vcmp.eq.f32.partialorder %v2731, 8.507059e+37
    %v2733 = vand.u32 %v1880, 2147483648
    %v2734 = vor.u32 1.1754944e-38, %v2733
    %v2735 = vsel %vm2732, %v2734, %v2730
    %v2736 = vmul.f32 %v1752, %v2735
    %v2737 = vrcp.pop %v1882
    %v2738 = vmul.f32 %v1882, %v2737
    %v2739 = vsub.f32 1.0, %v2738
    %v2740 = vmul.f32 %v2737, %v2739
    %v2741 = vadd.f32 %v2737, %v2740
    %vm2742 = vweird.f32 %v1882
    %vm2743 = vweird.f32 %v2737
    %vm2744 = vmor %vm2742, %vm2743
    %v2745 = vsel %vm2744, %v2737, %v2741
    %v2746 = vand.u32 2147483647, %v1882
    %vm2747 = vcmp.eq.f32.partialorder %v2746, 8.507059e+37
    %v2748 = vand.u32 %v1882, 2147483648
    %v2749 = vor.u32 1.1754944e-38, %v2748
    %v2750 = vsel %vm2747, %v2749, %v2745
    %v2751 = vmul.f32 %v1754, %v2750
    %v2752 = vrcp.pop %v1884
    %v2753 = vmul.f32 %v1884, %v2752
    %v2754 = vsub.f32 1.0, %v2753
    %v2755 = vmul.f32 %v2752, %v2754
    %v2756 = vadd.f32 %v2752, %v2755
    %vm2757 = vweird.f32 %v1884
    %vm2758 = vweird.f32 %v2752
    %vm2759 = vmor %vm2757, %vm2758
    %v2760 = vsel %vm2759, %v2752, %v2756
    %v2761 = vand.u32 2147483647, %v1884
    %vm2762 = vcmp.eq.f32.partialorder %v2761, 8.507059e+37
    %v2763 = vand.u32 %v1884, 2147483648
    %v2764 = vor.u32 1.1754944e-38, %v2763
    %v2765 = vsel %vm2762, %v2764, %v2760
    %v2766 = vmul.f32 %v1756, %v2765
    %v2767 = vrcp.pop %v1886
    %v2768 = vmul.f32 %v1886, %v2767
    %v2769 = vsub.f32 1.0, %v2768
    %v2770 = vmul.f32 %v2767, %v2769
    %v2771 = vadd.f32 %v2767, %v2770
    %vm2772 = vweird.f32 %v1886
    %vm2773 = vweird.f32 %v2767
    %vm2774 = vmor %vm2772, %vm2773
    %v2775 = vsel %vm2774, %v2767, %v2771
    %v2776 = vand.u32 2147483647, %v1886
    %vm2777 = vcmp.eq.f32.partialorder %v2776, 8.507059e+37
    %v2778 = vand.u32 %v1886, 2147483648
    %v2779 = vor.u32 1.1754944e-38, %v2778
    %v2780 = vsel %vm2777, %v2779, %v2775
    %v2781 = vmul.f32 %v1758, %v2780
    %v2782 = vrcp.pop %v1888
    %v2783 = vmul.f32 %v1888, %v2782
    %v2784 = vsub.f32 1.0, %v2783
    %v2785 = vmul.f32 %v2782, %v2784
    %v2786 = vadd.f32 %v2782, %v2785
    %vm2787 = vweird.f32 %v1888
    %vm2788 = vweird.f32 %v2782
    %vm2789 = vmor %vm2787, %vm2788
    %v2790 = vsel %vm2789, %v2782, %v2786
    %v2791 = vand.u32 2147483647, %v1888
    %vm2792 = vcmp.eq.f32.partialorder %v2791, 8.507059e+37
    %v2793 = vand.u32 %v1888, 2147483648
    %v2794 = vor.u32 1.1754944e-38, %v2793
    %v2795 = vsel %vm2792, %v2794, %v2790
    %v2796 = vmul.f32 %v1760, %v2795
    %v2797 = vrcp.pop %v1890
    %v2798 = vmul.f32 %v1890, %v2797
    %v2799 = vsub.f32 1.0, %v2798
    %v2800 = vmul.f32 %v2797, %v2799
    %v2801 = vadd.f32 %v2797, %v2800
    %vm2802 = vweird.f32 %v1890
    %vm2803 = vweird.f32 %v2797
    %vm2804 = vmor %vm2802, %vm2803
    %v2805 = vsel %vm2804, %v2797, %v2801
    %v2806 = vand.u32 2147483647, %v1890
    %vm2807 = vcmp.eq.f32.partialorder %v2806, 8.507059e+37
    %v2808 = vand.u32 %v1890, 2147483648
    %v2809 = vor.u32 1.1754944e-38, %v2808
    %v2810 = vsel %vm2807, %v2809, %v2805
    %v2811 = vmul.f32 %v1762, %v2810
    %v2812 = vrcp.pop %v1892
    %v2813 = vmul.f32 %v1892, %v2812
    %v2814 = vsub.f32 1.0, %v2813
    %v2815 = vmul.f32 %v2812, %v2814
    %v2816 = vadd.f32 %v2812, %v2815
    %vm2817 = vweird.f32 %v1892
    %vm2818 = vweird.f32 %v2812
    %vm2819 = vmor %vm2817, %vm2818
    %v2820 = vsel %vm2819, %v2812, %v2816
    %v2821 = vand.u32 2147483647, %v1892
    %vm2822 = vcmp.eq.f32.partialorder %v2821, 8.507059e+37
    %v2823 = vand.u32 %v1892, 2147483648
    %v2824 = vor.u32 1.1754944e-38, %v2823
    %v2825 = vsel %vm2822, %v2824, %v2820
    %v2826 = vmul.f32 %v1764, %v2825
    %v2827 = vrcp.pop %v1894
    %v2828 = vmul.f32 %v1894, %v2827
    %v2829 = vsub.f32 1.0, %v2828
    %v2830 = vmul.f32 %v2827, %v2829
    %v2831 = vadd.f32 %v2827, %v2830
    %vm2832 = vweird.f32 %v1894
    %vm2833 = vweird.f32 %v2827
    %vm2834 = vmor %vm2832, %vm2833
    %v2835 = vsel %vm2834, %v2827, %v2831
    %v2836 = vand.u32 2147483647, %v1894
    %vm2837 = vcmp.eq.f32.partialorder %v2836, 8.507059e+37
    %v2838 = vand.u32 %v1894, 2147483648
    %v2839 = vor.u32 1.1754944e-38, %v2838
    %v2840 = vsel %vm2837, %v2839, %v2835
    %v2841 = vmul.f32 %v1766, %v2840
    %v2842 = vrcp.pop %v1896
    %v2843 = vmul.f32 %v1896, %v2842
    %v2844 = vsub.f32 1.0, %v2843
    %v2845 = vmul.f32 %v2842, %v2844
    %v2846 = vadd.f32 %v2842, %v2845
    %vm2847 = vweird.f32 %v1896
    %vm2848 = vweird.f32 %v2842
    %vm2849 = vmor %vm2847, %vm2848
    %v2850 = vsel %vm2849, %v2842, %v2846
    %v2851 = vand.u32 2147483647, %v1896
    %vm2852 = vcmp.eq.f32.partialorder %v2851, 8.507059e+37
    %v2853 = vand.u32 %v1896, 2147483648
    %v2854 = vor.u32 1.1754944e-38, %v2853
    %v2855 = vsel %vm2852, %v2854, %v2850
    %v2856 = vmul.f32 %v1768, %v2855
    %2857 = vrot.lane.b32.xlu0 %v517, 64
    %v2858 = vpop.permute.xlu0 %2857
    %2859 = vrot.lane.b32.xlu0 %v520, 64
    %v2860 = vpop.permute.xlu0 %2859
    %2861 = vrot.lane.b32.xlu0 %v523, 64
    %v2862 = vpop.permute.xlu0 %2861
    %2863 = vrot.lane.b32.xlu0 %v526, 64
    %v2864 = vpop.permute.xlu0 %2863
    %2865 = vrot.lane.b32.xlu0 %v529, 64
    %v2866 = vpop.permute.xlu0 %2865
    %2867 = vrot.lane.b32.xlu0 %v532, 64
    %v2868 = vpop.permute.xlu0 %2867
    %2869 = vrot.lane.b32.xlu0 %v535, 64
    %v2870 = vpop.permute.xlu0 %2869
    %2871 = vrot.lane.b32.xlu0 %v538, 64
    %v2872 = vpop.permute.xlu0 %2871
    %2873 = vrot.lane.b32.xlu0 %v541, 64
    %v2874 = vpop.permute.xlu0 %2873
    %2875 = vrot.lane.b32.xlu0 %v544, 64
    %v2876 = vpop.permute.xlu0 %2875
    %2877 = vrot.lane.b32.xlu0 %v547, 64
    %v2878 = vpop.permute.xlu0 %2877
    %2879 = vrot.lane.b32.xlu0 %v550, 64
    %v2880 = vpop.permute.xlu0 %2879
    %2881 = vrot.lane.b32.xlu0 %v553, 64
    %v2882 = vpop.permute.xlu0 %2881
    %2883 = vrot.lane.b32.xlu0 %v556, 64
    %v2884 = vpop.permute.xlu0 %2883
    %2885 = vrot.lane.b32.xlu0 %v559, 64
    %v2886 = vpop.permute.xlu0 %2885
    %2887 = vrot.lane.b32.xlu0 %v562, 64
    %v2888 = vpop.permute.xlu0 %2887
    %2905 = vmatpush.msra.mxu0 %v2888
    %2906 = vmatpush.msra.mxu0 %v2886
    %2907 = vmatpush.msra.mxu0 %v2884
    %2908 = vmatpush.msra.mxu0 %v2882
    %2909 = vmatpush.msra.mxu0 %v2880
    %2910 = vmatpush.msra.mxu0 %v2878
    %2911 = vmatpush.msra.mxu0 %v2876
    %2912 = vmatpush.msra.mxu0 %v2874
    %2913 = vmatpush.msra.mxu0 %v2872
    %2914 = vmatpush.msra.mxu0 %v2870
    %2915 = vmatpush.msra.mxu0 %v2868
    %2916 = vmatpush.msra.mxu0 %v2866
    %2917 = vmatpush.msra.mxu0 %v2864
    %2918 = vmatpush.msra.mxu0 %v2862
    %2919 = vmatpush.msra.mxu0 %v2860
    %2920 = vmatpush.msra.mxu0 %v2858
    %2921 = vmatmul.f32.gmra.mxu0 %v1911
    %v2922 = vpop.f32.mrf.mxu0
    %v2923 = vadd.f32 0.0, %v2922
    %2924 = vmatmul.f32.gmra.mxu0 %v1926
    %v2925 = vpop.f32.mrf.mxu0
    %v2926 = vadd.f32 0.0, %v2925
    %2927 = vmatmul.f32.gmra.mxu0 %v1941
    %v2928 = vpop.f32.mrf.mxu0
    %v2929 = vadd.f32 0.0, %v2928
    %2930 = vmatmul.f32.gmra.mxu0 %v1956
    %v2931 = vpop.f32.mrf.mxu0
    %v2932 = vadd.f32 0.0, %v2931
    %2933 = vmatmul.f32.gmra.mxu0 %v1971
    %v2934 = vpop.f32.mrf.mxu0
    %v2935 = vadd.f32 0.0, %v2934
    %2936 = vmatmul.f32.gmra.mxu0 %v1986
    %v2937 = vpop.f32.mrf.mxu0
    %v2938 = vadd.f32 0.0, %v2937
    %2939 = vmatmul.f32.gmra.mxu0 %v2001
    %v2940 = vpop.f32.mrf.mxu0
    %v2941 = vadd.f32 0.0, %v2940
    %2942 = vmatmul.f32.gmra.mxu0 %v2016
    %v2943 = vpop.f32.mrf.mxu0
    %v2944 = vadd.f32 0.0, %v2943
    %2945 = vmatmul.f32.gmra.mxu0 %v2031
    %v2946 = vpop.f32.mrf.mxu0
    %v2947 = vadd.f32 0.0, %v2946
    %2948 = vmatmul.f32.gmra.mxu0 %v2046
    %v2949 = vpop.f32.mrf.mxu0
    %v2950 = vadd.f32 0.0, %v2949
    %2951 = vmatmul.f32.gmra.mxu0 %v2061
    %v2952 = vpop.f32.mrf.mxu0
    %v2953 = vadd.f32 0.0, %v2952
    %2954 = vmatmul.f32.gmra.mxu0 %v2076
    %v2955 = vpop.f32.mrf.mxu0
    %v2956 = vadd.f32 0.0, %v2955
    %2957 = vmatmul.f32.gmra.mxu0 %v2091
    %v2958 = vpop.f32.mrf.mxu0
    %v2959 = vadd.f32 0.0, %v2958
    %2960 = vmatmul.f32.gmra.mxu0 %v2106
    %v2961 = vpop.f32.mrf.mxu0
    %v2962 = vadd.f32 0.0, %v2961
    %2963 = vmatmul.f32.gmra.mxu0 %v2121
    %v2964 = vpop.f32.mrf.mxu0
    %v2965 = vadd.f32 0.0, %v2964
    %2966 = vmatmul.f32.gmra.mxu0 %v2136
    %v2967 = vpop.f32.mrf.mxu0
    %v2968 = vadd.f32 0.0, %v2967
    %2969 = vdwg.mxu0
    %2970 = vrot.lane.b32.xlu0 %v581, 64
    %v2971 = vpop.permute.xlu0 %2970
    %2972 = vrot.lane.b32.xlu0 %v583, 64
    %v2973 = vpop.permute.xlu0 %2972
    %2974 = vrot.lane.b32.xlu0 %v585, 64
    %v2975 = vpop.permute.xlu0 %2974
    %2976 = vrot.lane.b32.xlu0 %v587, 64
    %v2977 = vpop.permute.xlu0 %2976
    %2978 = vrot.lane.b32.xlu0 %v589, 64
    %v2979 = vpop.permute.xlu0 %2978
    %2980 = vrot.lane.b32.xlu0 %v591, 64
    %v2981 = vpop.permute.xlu0 %2980
    %2982 = vrot.lane.b32.xlu0 %v593, 64
    %v2983 = vpop.permute.xlu0 %2982
    %2984 = vrot.lane.b32.xlu0 %v595, 64
    %v2985 = vpop.permute.xlu0 %2984
    %2986 = vrot.lane.b32.xlu0 %v597, 64
    %v2987 = vpop.permute.xlu0 %2986
    %2988 = vrot.lane.b32.xlu0 %v599, 64
    %v2989 = vpop.permute.xlu0 %2988
    %2990 = vrot.lane.b32.xlu0 %v601, 64
    %v2991 = vpop.permute.xlu0 %2990
    %2992 = vrot.lane.b32.xlu0 %v603, 64
    %v2993 = vpop.permute.xlu0 %2992
    %2994 = vrot.lane.b32.xlu0 %v605, 64
    %v2995 = vpop.permute.xlu0 %2994
    %2996 = vrot.lane.b32.xlu0 %v607, 64
    %v2997 = vpop.permute.xlu0 %2996
    %2998 = vrot.lane.b32.xlu0 %v609, 64
    %v2999 = vpop.permute.xlu0 %2998
    %3000 = vrot.lane.b32.xlu0 %v611, 64
    %v3001 = vpop.permute.xlu0 %3000
    %3018 = vmatpush.msra.mxu0 %v3001
    %3019 = vmatpush.msra.mxu0 %v2999
    %3020 = vmatpush.msra.mxu0 %v2997
    %3021 = vmatpush.msra.mxu0 %v2995
    %3022 = vmatpush.msra.mxu0 %v2993
    %3023 = vmatpush.msra.mxu0 %v2991
    %3024 = vmatpush.msra.mxu0 %v2989
    %3025 = vmatpush.msra.mxu0 %v2987
    %3026 = vmatpush.msra.mxu0 %v2985
    %3027 = vmatpush.msra.mxu0 %v2983
    %3028 = vmatpush.msra.mxu0 %v2981
    %3029 = vmatpush.msra.mxu0 %v2979
    %3030 = vmatpush.msra.mxu0 %v2977
    %3031 = vmatpush.msra.mxu0 %v2975
    %3032 = vmatpush.msra.mxu0 %v2973
    %3033 = vmatpush.msra.mxu0 %v2971
    %3034 = vmatmul.f32.gmra.mxu0 %v2151
    %v3035 = vpop.f32.mrf.mxu0
    %v3036 = vadd.f32 0.0, %v3035
    %3037 = vmatmul.f32.gmra.mxu0 %v2166
    %v3038 = vpop.f32.mrf.mxu0
    %v3039 = vadd.f32 0.0, %v3038
    %3040 = vmatmul.f32.gmra.mxu0 %v2181
    %v3041 = vpop.f32.mrf.mxu0
    %v3042 = vadd.f32 0.0, %v3041
    %3043 = vmatmul.f32.gmra.mxu0 %v2196
    %v3044 = vpop.f32.mrf.mxu0
    %v3045 = vadd.f32 0.0, %v3044
    %3046 = vmatmul.f32.gmra.mxu0 %v2211
    %v3047 = vpop.f32.mrf.mxu0
    %v3048 = vadd.f32 0.0, %v3047
    %3049 = vmatmul.f32.gmra.mxu0 %v2226
    %v3050 = vpop.f32.mrf.mxu0
    %v3051 = vadd.f32 0.0, %v3050
    %3052 = vmatmul.f32.gmra.mxu0 %v2241
    %v3053 = vpop.f32.mrf.mxu0
    %v3054 = vadd.f32 0.0, %v3053
    %3055 = vmatmul.f32.gmra.mxu0 %v2256
    %v3056 = vpop.f32.mrf.mxu0
    %v3057 = vadd.f32 0.0, %v3056
    %3058 = vmatmul.f32.gmra.mxu0 %v2271
    %v3059 = vpop.f32.mrf.mxu0
    %v3060 = vadd.f32 0.0, %v3059
    %3061 = vmatmul.f32.gmra.mxu0 %v2286
    %v3062 = vpop.f32.mrf.mxu0
    %v3063 = vadd.f32 0.0, %v3062
    %3064 = vmatmul.f32.gmra.mxu0 %v2301
    %v3065 = vpop.f32.mrf.mxu0
    %v3066 = vadd.f32 0.0, %v3065
    %3067 = vmatmul.f32.gmra.mxu0 %v2316
    %v3068 = vpop.f32.mrf.mxu0
    %v3069 = vadd.f32 0.0, %v3068
    %3070 = vmatmul.f32.gmra.mxu0 %v2331
    %v3071 = vpop.f32.mrf.mxu0
    %v3072 = vadd.f32 0.0, %v3071
    %3073 = vmatmul.f32.gmra.mxu0 %v2346
    %v3074 = vpop.f32.mrf.mxu0
    %v3075 = vadd.f32 0.0, %v3074
    %3076 = vmatmul.f32.gmra.mxu0 %v2361
    %v3077 = vpop.f32.mrf.mxu0
    %v3078 = vadd.f32 0.0, %v3077
    %3079 = vmatmul.f32.gmra.mxu0 %v2376
    %v3080 = vpop.f32.mrf.mxu0
    %v3081 = vadd.f32 0.0, %v3080
    %3082 = vdwg.mxu0
    %3083 = vrot.lane.b32.xlu0 %v613, 64
    %v3084 = vpop.permute.xlu0 %3083
    %3085 = vrot.lane.b32.xlu0 %v615, 64
    %v3086 = vpop.permute.xlu0 %3085
    %3087 = vrot.lane.b32.xlu0 %v617, 64
    %v3088 = vpop.permute.xlu0 %3087
    %3089 = vrot.lane.b32.xlu0 %v619, 64
    %v3090 = vpop.permute.xlu0 %3089
    %3091 = vrot.lane.b32.xlu0 %v621, 64
    %v3092 = vpop.permute.xlu0 %3091
    %3093 = vrot.lane.b32.xlu0 %v623, 64
    %v3094 = vpop.permute.xlu0 %3093
    %3095 = vrot.lane.b32.xlu0 %v625, 64
    %v3096 = vpop.permute.xlu0 %3095
    %3097 = vrot.lane.b32.xlu0 %v627, 64
    %v3098 = vpop.permute.xlu0 %3097
    %3099 = vrot.lane.b32.xlu0 %v629, 64
    %v3100 = vpop.permute.xlu0 %3099
    %3101 = vrot.lane.b32.xlu0 %v631, 64
    %v3102 = vpop.permute.xlu0 %3101
    %3103 = vrot.lane.b32.xlu0 %v633, 64
    %v3104 = vpop.permute.xlu0 %3103
    %3105 = vrot.lane.b32.xlu0 %v635, 64
    %v3106 = vpop.permute.xlu0 %3105
    %3107 = vrot.lane.b32.xlu0 %v637, 64
    %v3108 = vpop.permute.xlu0 %3107
    %3109 = vrot.lane.b32.xlu0 %v639, 64
    %v3110 = vpop.permute.xlu0 %3109
    %3111 = vrot.lane.b32.xlu0 %v641, 64
    %v3112 = vpop.permute.xlu0 %3111
    %3113 = vrot.lane.b32.xlu0 %v643, 64
    %v3114 = vpop.permute.xlu0 %3113
    %3131 = vmatpush.msra.mxu0 %v3114
    %3132 = vmatpush.msra.mxu0 %v3112
    %3133 = vmatpush.msra.mxu0 %v3110
    %3134 = vmatpush.msra.mxu0 %v3108
    %3135 = vmatpush.msra.mxu0 %v3106
    %3136 = vmatpush.msra.mxu0 %v3104
    %3137 = vmatpush.msra.mxu0 %v3102
    %3138 = vmatpush.msra.mxu0 %v3100
    %3139 = vmatpush.msra.mxu0 %v3098
    %3140 = vmatpush.msra.mxu0 %v3096
    %3141 = vmatpush.msra.mxu0 %v3094
    %3142 = vmatpush.msra.mxu0 %v3092
    %3143 = vmatpush.msra.mxu0 %v3090
    %3144 = vmatpush.msra.mxu0 %v3088
    %3145 = vmatpush.msra.mxu0 %v3086
    %3146 = vmatpush.msra.mxu0 %v3084
    %3147 = vmatmul.f32.gmra.mxu0 %v2391
    %v3148 = vpop.f32.mrf.mxu0
    %v3149 = vadd.f32 0.0, %v3148
    %3150 = vmatmul.f32.gmra.mxu0 %v2406
    %v3151 = vpop.f32.mrf.mxu0
    %v3152 = vadd.f32 0.0, %v3151
    %3153 = vmatmul.f32.gmra.mxu0 %v2421
    %v3154 = vpop.f32.mrf.mxu0
    %v3155 = vadd.f32 0.0, %v3154
    %3156 = vmatmul.f32.gmra.mxu0 %v2436
    %v3157 = vpop.f32.mrf.mxu0
    %v3158 = vadd.f32 0.0, %v3157
    %3159 = vmatmul.f32.gmra.mxu0 %v2451
    %v3160 = vpop.f32.mrf.mxu0
    %v3161 = vadd.f32 0.0, %v3160
    %3162 = vmatmul.f32.gmra.mxu0 %v2466
    %v3163 = vpop.f32.mrf.mxu0
    %v3164 = vadd.f32 0.0, %v3163
    %3165 = vmatmul.f32.gmra.mxu0 %v2481
    %v3166 = vpop.f32.mrf.mxu0
    %v3167 = vadd.f32 0.0, %v3166
    %3168 = vmatmul.f32.gmra.mxu0 %v2496
    %v3169 = vpop.f32.mrf.mxu0
    %v3170 = vadd.f32 0.0, %v3169
    %3171 = vmatmul.f32.gmra.mxu0 %v2511
    %v3172 = vpop.f32.mrf.mxu0
    %v3173 = vadd.f32 0.0, %v3172
    %3174 = vmatmul.f32.gmra.mxu0 %v2526
    %v3175 = vpop.f32.mrf.mxu0
    %v3176 = vadd.f32 0.0, %v3175
    %3177 = vmatmul.f32.gmra.mxu0 %v2541
    %v3178 = vpop.f32.mrf.mxu0
    %v3179 = vadd.f32 0.0, %v3178
    %3180 = vmatmul.f32.gmra.mxu0 %v2556
    %v3181 = vpop.f32.mrf.mxu0
    %v3182 = vadd.f32 0.0, %v3181
    %3183 = vmatmul.f32.gmra.mxu0 %v2571
    %v3184 = vpop.f32.mrf.mxu0
    %v3185 = vadd.f32 0.0, %v3184
    %3186 = vmatmul.f32.gmra.mxu0 %v2586
    %v3187 = vpop.f32.mrf.mxu0
    %v3188 = vadd.f32 0.0, %v3187
    %3189 = vmatmul.f32.gmra.mxu0 %v2601
    %v3190 = vpop.f32.mrf.mxu0
    %v3191 = vadd.f32 0.0, %v3190
    %3192 = vmatmul.f32.gmra.mxu0 %v2616
    %v3193 = vpop.f32.mrf.mxu0
    %v3194 = vadd.f32 0.0, %v3193
    %3195 = vdwg.mxu0
    %3196 = vrot.lane.b32.xlu0 %v645, 64
    %v3197 = vpop.permute.xlu0 %3196
    %3198 = vrot.lane.b32.xlu0 %v647, 64
    %v3199 = vpop.permute.xlu0 %3198
    %3200 = vrot.lane.b32.xlu0 %v649, 64
    %v3201 = vpop.permute.xlu0 %3200
    %3202 = vrot.lane.b32.xlu0 %v651, 64
    %v3203 = vpop.permute.xlu0 %3202
    %3204 = vrot.lane.b32.xlu0 %v653, 64
    %v3205 = vpop.permute.xlu0 %3204
    %3206 = vrot.lane.b32.xlu0 %v655, 64
    %v3207 = vpop.permute.xlu0 %3206
    %3208 = vrot.lane.b32.xlu0 %v657, 64
    %v3209 = vpop.permute.xlu0 %3208
    %3210 = vrot.lane.b32.xlu0 %v659, 64
    %v3211 = vpop.permute.xlu0 %3210
    %3212 = vrot.lane.b32.xlu0 %v661, 64
    %v3213 = vpop.permute.xlu0 %3212
    %3214 = vrot.lane.b32.xlu0 %v663, 64
    %v3215 = vpop.permute.xlu0 %3214
    %3216 = vrot.lane.b32.xlu0 %v665, 64
    %v3217 = vpop.permute.xlu0 %3216
    %3218 = vrot.lane.b32.xlu0 %v667, 64
    %v3219 = vpop.permute.xlu0 %3218
    %3220 = vrot.lane.b32.xlu0 %v669, 64
    %v3221 = vpop.permute.xlu0 %3220
    %3222 = vrot.lane.b32.xlu0 %v671, 64
    %v3223 = vpop.permute.xlu0 %3222
    %3224 = vrot.lane.b32.xlu0 %v673, 64
    %v3225 = vpop.permute.xlu0 %3224
    %3226 = vrot.lane.b32.xlu0 %v675, 64
    %v3227 = vpop.permute.xlu0 %3226
    %3244 = vmatpush.msra.mxu0 %v3227
    %3245 = vmatpush.msra.mxu0 %v3225
    %3246 = vmatpush.msra.mxu0 %v3223
    %3247 = vmatpush.msra.mxu0 %v3221
    %3248 = vmatpush.msra.mxu0 %v3219
    %3249 = vmatpush.msra.mxu0 %v3217
    %3250 = vmatpush.msra.mxu0 %v3215
    %3251 = vmatpush.msra.mxu0 %v3213
    %3252 = vmatpush.msra.mxu0 %v3211
    %3253 = vmatpush.msra.mxu0 %v3209
    %3254 = vmatpush.msra.mxu0 %v3207
    %3255 = vmatpush.msra.mxu0 %v3205
    %3256 = vmatpush.msra.mxu0 %v3203
    %3257 = vmatpush.msra.mxu0 %v3201
    %3258 = vmatpush.msra.mxu0 %v3199
    %3259 = vmatpush.msra.mxu0 %v3197
    %3260 = vmatmul.f32.gmra.mxu0 %v2631
    %v3261 = vpop.f32.mrf.mxu0
    %v3262 = vadd.f32 0.0, %v3261
    %3263 = vmatmul.f32.gmra.mxu0 %v2646
    %v3264 = vpop.f32.mrf.mxu0
    %v3265 = vadd.f32 0.0, %v3264
    %3266 = vmatmul.f32.gmra.mxu0 %v2661
    %v3267 = vpop.f32.mrf.mxu0
    %v3268 = vadd.f32 0.0, %v3267
    %3269 = vmatmul.f32.gmra.mxu0 %v2676
    %v3270 = vpop.f32.mrf.mxu0
    %v3271 = vadd.f32 0.0, %v3270
    %3272 = vmatmul.f32.gmra.mxu0 %v2691
    %v3273 = vpop.f32.mrf.mxu0
    %v3274 = vadd.f32 0.0, %v3273
    %3275 = vmatmul.f32.gmra.mxu0 %v2706
    %v3276 = vpop.f32.mrf.mxu0
    %v3277 = vadd.f32 0.0, %v3276
    %3278 = vmatmul.f32.gmra.mxu0 %v2721
    %v3279 = vpop.f32.mrf.mxu0
    %v3280 = vadd.f32 0.0, %v3279
    %3281 = vmatmul.f32.gmra.mxu0 %v2736
    %v3282 = vpop.f32.mrf.mxu0
    %v3283 = vadd.f32 0.0, %v3282
    %3284 = vmatmul.f32.gmra.mxu0 %v2751
    %v3285 = vpop.f32.mrf.mxu0
    %v3286 = vadd.f32 0.0, %v3285
    %3287 = vmatmul.f32.gmra.mxu0 %v2766
    %v3288 = vpop.f32.mrf.mxu0
    %v3289 = vadd.f32 0.0, %v3288
    %3290 = vmatmul.f32.gmra.mxu0 %v2781
    %v3291 = vpop.f32.mrf.mxu0
    %v3292 = vadd.f32 0.0, %v3291
    %3293 = vmatmul.f32.gmra.mxu0 %v2796
    %v3294 = vpop.f32.mrf.mxu0
    %v3295 = vadd.f32 0.0, %v3294
    %3296 = vmatmul.f32.gmra.mxu0 %v2811
    %v3297 = vpop.f32.mrf.mxu0
    %v3298 = vadd.f32 0.0, %v3297
    %3299 = vmatmul.f32.gmra.mxu0 %v2826
    %v3300 = vpop.f32.mrf.mxu0
    %v3301 = vadd.f32 0.0, %v3300
    %3302 = vmatmul.f32.gmra.mxu0 %v2841
    %v3303 = vpop.f32.mrf.mxu0
    %v3304 = vadd.f32 0.0, %v3303
    %3305 = vmatmul.f32.gmra.mxu0 %v2856
    %v3306 = vpop.f32.mrf.mxu0
    %v3307 = vadd.f32 0.0, %v3306
    %3308 = vdwg.mxu0
    %3325 = vrot.lane.b32.xlu0 %v3036, 8
    %v3326 = vpop.permute.xlu0 %3325
    %3327 = vrot.lane.b32.xlu0 %v3039, 8
    %v3328 = vpop.permute.xlu0 %3327
    %3329 = vrot.lane.b32.xlu0 %v3042, 8
    %v3330 = vpop.permute.xlu0 %3329
    %3331 = vrot.lane.b32.xlu0 %v3045, 8
    %v3332 = vpop.permute.xlu0 %3331
    %3333 = vrot.lane.b32.xlu0 %v3048, 8
    %v3334 = vpop.permute.xlu0 %3333
    %3335 = vrot.lane.b32.xlu0 %v3051, 8
    %v3336 = vpop.permute.xlu0 %3335
    %3337 = vrot.lane.b32.xlu0 %v3054, 8
    %v3338 = vpop.permute.xlu0 %3337
    %3339 = vrot.lane.b32.xlu0 %v3057, 8
    %v3340 = vpop.permute.xlu0 %3339
    %3341 = vrot.lane.b32.xlu0 %v3060, 8
    %v3342 = vpop.permute.xlu0 %3341
    %3343 = vrot.lane.b32.xlu0 %v3063, 8
    %v3344 = vpop.permute.xlu0 %3343
    %3345 = vrot.lane.b32.xlu0 %v3066, 8
    %v3346 = vpop.permute.xlu0 %3345
    %3347 = vrot.lane.b32.xlu0 %v3069, 8
    %v3348 = vpop.permute.xlu0 %3347
    %3349 = vrot.lane.b32.xlu0 %v3072, 8
    %v3350 = vpop.permute.xlu0 %3349
    %3351 = vrot.lane.b32.xlu0 %v3075, 8
    %v3352 = vpop.permute.xlu0 %3351
    %3353 = vrot.lane.b32.xlu0 %v3078, 8
    %v3354 = vpop.permute.xlu0 %3353
    %3355 = vrot.lane.b32.xlu0 %v3081, 8
    %v3356 = vpop.permute.xlu0 %3355
    %3389 = vrot.lane.b32.xlu0 %v3149, 16
    %v3390 = vpop.permute.xlu0 %3389
    %3391 = vrot.lane.b32.xlu0 %v3152, 16
    %v3392 = vpop.permute.xlu0 %3391
    %3393 = vrot.lane.b32.xlu0 %v3155, 16
    %v3394 = vpop.permute.xlu0 %3393
    %3395 = vrot.lane.b32.xlu0 %v3158, 16
    %v3396 = vpop.permute.xlu0 %3395
    %3397 = vrot.lane.b32.xlu0 %v3161, 16
    %v3398 = vpop.permute.xlu0 %3397
    %3399 = vrot.lane.b32.xlu0 %v3164, 16
    %v3400 = vpop.permute.xlu0 %3399
    %3401 = vrot.lane.b32.xlu0 %v3167, 16
    %v3402 = vpop.permute.xlu0 %3401
    %3403 = vrot.lane.b32.xlu0 %v3170, 16
    %v3404 = vpop.permute.xlu0 %3403
    %3405 = vrot.lane.b32.xlu0 %v3173, 16
    %v3406 = vpop.permute.xlu0 %3405
    %3407 = vrot.lane.b32.xlu0 %v3176, 16
    %v3408 = vpop.permute.xlu0 %3407
    %3409 = vrot.lane.b32.xlu0 %v3179, 16
    %v3410 = vpop.permute.xlu0 %3409
    %3411 = vrot.lane.b32.xlu0 %v3182, 16
    %v3412 = vpop.permute.xlu0 %3411
    %3413 = vrot.lane.b32.xlu0 %v3185, 16
    %v3414 = vpop.permute.xlu0 %3413
    %3415 = vrot.lane.b32.xlu0 %v3188, 16
    %v3416 = vpop.permute.xlu0 %3415
    %3417 = vrot.lane.b32.xlu0 %v3191, 16
    %v3418 = vpop.permute.xlu0 %3417
    %3419 = vrot.lane.b32.xlu0 %v3194, 16
    %v3420 = vpop.permute.xlu0 %3419
    %3453 = vrot.lane.b32.xlu0 %v3262, 24
    %v3454 = vpop.permute.xlu0 %3453
    %3455 = vrot.lane.b32.xlu0 %v3265, 24
    %v3456 = vpop.permute.xlu0 %3455
    %3457 = vrot.lane.b32.xlu0 %v3268, 24
    %v3458 = vpop.permute.xlu0 %3457
    %3459 = vrot.lane.b32.xlu0 %v3271, 24
    %v3460 = vpop.permute.xlu0 %3459
    %3461 = vrot.lane.b32.xlu0 %v3274, 24
    %v3462 = vpop.permute.xlu0 %3461
    %3463 = vrot.lane.b32.xlu0 %v3277, 24
    %v3464 = vpop.permute.xlu0 %3463
    %3465 = vrot.lane.b32.xlu0 %v3280, 24
    %v3466 = vpop.permute.xlu0 %3465
    %3467 = vrot.lane.b32.xlu0 %v3283, 24
    %v3468 = vpop.permute.xlu0 %3467
    %3469 = vrot.lane.b32.xlu0 %v3286, 24
    %v3470 = vpop.permute.xlu0 %3469
    %3471 = vrot.lane.b32.xlu0 %v3289, 24
    %v3472 = vpop.permute.xlu0 %3471
    %3473 = vrot.lane.b32.xlu0 %v3292, 24
    %v3474 = vpop.permute.xlu0 %3473
    %3475 = vrot.lane.b32.xlu0 %v3295, 24
    %v3476 = vpop.permute.xlu0 %3475
    %3477 = vrot.lane.b32.xlu0 %v3298, 24
    %v3478 = vpop.permute.xlu0 %3477
    %3479 = vrot.lane.b32.xlu0 %v3301, 24
    %v3480 = vpop.permute.xlu0 %3479
    %3481 = vrot.lane.b32.xlu0 %v3304, 24
    %v3482 = vpop.permute.xlu0 %3481
    %3483 = vrot.lane.b32.xlu0 %v3307, 24
    %v3484 = vpop.permute.xlu0 %3483
    %v3501 = vsel %vm836, %v2923, %v3326
    %v3502 = vsel %vm836, %v2926, %v3328
    %v3503 = vsel %vm836, %v2929, %v3330
    %v3504 = vsel %vm836, %v2932, %v3332
    %v3505 = vsel %vm836, %v2935, %v3334
    %v3506 = vsel %vm836, %v2938, %v3336
    %v3507 = vsel %vm836, %v2941, %v3338
    %v3508 = vsel %vm836, %v2944, %v3340
    %v3509 = vsel %vm836, %v2947, %v3342
    %v3510 = vsel %vm836, %v2950, %v3344
    %v3511 = vsel %vm836, %v2953, %v3346
    %v3512 = vsel %vm836, %v2956, %v3348
    %v3513 = vsel %vm836, %v2959, %v3350
    %v3514 = vsel %vm836, %v2962, %v3352
    %v3515 = vsel %vm836, %v2965, %v3354
    %v3516 = vsel %vm836, %v2968, %v3356
    %vm3517 = vcmask 130048
    %v3518 = vsel %vm3517, %v3501, %v3390
    %v3519 = vsel %vm3517, %v3502, %v3392
    %v3520 = vsel %vm3517, %v3503, %v3394
    %v3521 = vsel %vm3517, %v3504, %v3396
    %v3522 = vsel %vm3517, %v3505, %v3398
    %v3523 = vsel %vm3517, %v3506, %v3400
    %v3524 = vsel %vm3517, %v3507, %v3402
    %v3525 = vsel %vm3517, %v3508, %v3404
    %v3526 = vsel %vm3517, %v3509, %v3406
    %v3527 = vsel %vm3517, %v3510, %v3408
    %v3528 = vsel %vm3517, %v3511, %v3410
    %v3529 = vsel %vm3517, %v3512, %v3412
    %v3530 = vsel %vm3517, %v3513, %v3414
    %v3531 = vsel %vm3517, %v3514, %v3416
    %v3532 = vsel %vm3517, %v3515, %v3418
    %v3533 = vsel %vm3517, %v3516, %v3420
    %vm3534 = vcmask 195584
    %v3535 = vsel %vm3534, %v3518, %v3454
    %v3536 = vsel %vm3534, %v3519, %v3456
    %v3537 = vsel %vm3534, %v3520, %v3458
    %v3538 = vsel %vm3534, %v3521, %v3460
    %v3539 = vsel %vm3534, %v3522, %v3462
    %v3540 = vsel %vm3534, %v3523, %v3464
    %v3541 = vsel %vm3534, %v3524, %v3466
    %v3542 = vsel %vm3534, %v3525, %v3468
    %v3543 = vsel %vm3534, %v3526, %v3470
    %v3544 = vsel %vm3534, %v3527, %v3472
    %v3545 = vsel %vm3534, %v3528, %v3474
    %v3546 = vsel %vm3534, %v3529, %v3476
    %v3547 = vsel %vm3534, %v3530, %v3478
    %v3548 = vsel %vm3534, %v3531, %v3480
    %v3549 = vsel %vm3534, %v3532, %v3482
    %v3550 = vsel %vm3534, %v3533, %v3484
    %v3551 = vld [vmem:[%s4] sm:$0xff]
    %v3552 = vld [vmem:[%s4 + $0x8] sm:$0xff]
    %v3553 = vld [vmem:[%s4 + $0x10] sm:$0xff]
    %v3554 = vld [vmem:[%s4 + $0x18] sm:$0xff]
    %v3555 = vld [vmem:[%s5] sm:$0x1]
    %v3557 = vperm.slane %v3555, 0
    %v3560 = vsel %vm83, %v3535, 0
    %v3563 = vsel %vm83, %v3536, 0
    %v3566 = vsel %vm83, %v3537, 0
    %v3569 = vsel %vm83, %v3538, 0
    %v3572 = vsel %vm83, %v3539, 0
    %v3575 = vsel %vm83, %v3540, 0
    %v3578 = vsel %vm83, %v3541, 0
    %v3581 = vsel %vm83, %v3542, 0
    %v3584 = vsel %vm83, %v3543, 0
    %v3587 = vsel %vm83, %v3544, 0
    %v3590 = vsel %vm83, %v3545, 0
    %v3593 = vsel %vm83, %v3546, 0
    %v3596 = vsel %vm83, %v3547, 0
    %v3599 = vsel %vm83, %v3548, 0
    %v3602 = vsel %vm83, %v3549, 0
    %v3605 = vsel %vm83, %v3550, 0
    %3607 = vmatpush.msra.mxu0 0.0
    %3608 = vmatpush.msra.mxu0 0.0
    %3609 = vmatpush.msra.mxu0 0.0
    %3610 = vmatpush.msra.mxu0 0.0
    %3611 = vmatpush.msra.mxu0 0.0
    %3612 = vmatpush.msra.mxu0 0.0
    %3613 = vmatpush.msra.mxu0 0.0
    %3614 = vmatpush.msra.mxu0 0.0
    %3615 = vmatpush.msra.mxu0 0.0
    %3616 = vmatpush.msra.mxu0 0.0
    %3617 = vmatpush.msra.mxu0 0.0
    %3618 = vmatpush.msra.mxu0 0.0
    %3619 = vmatpush.msra.mxu0 %v3554
    %3620 = vmatpush.msra.mxu0 %v3553
    %3621 = vmatpush.msra.mxu0 %v3552
    %3622 = vmatpush.msra.mxu0 %v3551
    %3623 = vmatmul.f32.gmra.mxu0 %v3560
    %v3624 = vpop.f32.mrf.mxu0
    %v3625 = vadd.f32 %v3557, %v3624
    %3626 = vmatmul.f32.gmra.mxu0 %v3563
    %v3627 = vpop.f32.mrf.mxu0
    %v3628 = vadd.f32 %v3557, %v3627
    %3629 = vmatmul.f32.gmra.mxu0 %v3566
    %v3630 = vpop.f32.mrf.mxu0
    %v3631 = vadd.f32 %v3557, %v3630
    %3632 = vmatmul.f32.gmra.mxu0 %v3569
    %v3633 = vpop.f32.mrf.mxu0
    %v3634 = vadd.f32 %v3557, %v3633
    %3635 = vmatmul.f32.gmra.mxu0 %v3572
    %v3636 = vpop.f32.mrf.mxu0
    %v3637 = vadd.f32 %v3557, %v3636
    %3638 = vmatmul.f32.gmra.mxu0 %v3575
    %v3639 = vpop.f32.mrf.mxu0
    %v3640 = vadd.f32 %v3557, %v3639
    %3641 = vmatmul.f32.gmra.mxu0 %v3578
    %v3642 = vpop.f32.mrf.mxu0
    %v3643 = vadd.f32 %v3557, %v3642
    %3644 = vmatmul.f32.gmra.mxu0 %v3581
    %v3645 = vpop.f32.mrf.mxu0
    %v3646 = vadd.f32 %v3557, %v3645
    %3647 = vmatmul.f32.gmra.mxu0 %v3584
    %v3648 = vpop.f32.mrf.mxu0
    %v3649 = vadd.f32 %v3557, %v3648
    %3650 = vmatmul.f32.gmra.mxu0 %v3587
    %v3651 = vpop.f32.mrf.mxu0
    %v3652 = vadd.f32 %v3557, %v3651
    %3653 = vmatmul.f32.gmra.mxu0 %v3590
    %v3654 = vpop.f32.mrf.mxu0
    %v3655 = vadd.f32 %v3557, %v3654
    %3656 = vmatmul.f32.gmra.mxu0 %v3593
    %v3657 = vpop.f32.mrf.mxu0
    %v3658 = vadd.f32 %v3557, %v3657
    %3659 = vmatmul.f32.gmra.mxu0 %v3596
    %v3660 = vpop.f32.mrf.mxu0
    %v3661 = vadd.f32 %v3557, %v3660
    %3662 = vmatmul.f32.gmra.mxu0 %v3599
    %v3663 = vpop.f32.mrf.mxu0
    %v3664 = vadd.f32 %v3557, %v3663
    %3665 = vmatmul.f32.gmra.mxu0 %v3602
    %v3666 = vpop.f32.mrf.mxu0
    %v3667 = vadd.f32 %v3557, %v3666
    %3668 = vmatmul.f32.gmra.mxu0 %v3605
    %v3669 = vpop.f32.mrf.mxu0
    %v3670 = vadd.f32 %v3557, %v3669
    %3671 = vdwg.mxu0
    %v3672 = vadd.f32 %v67, %v3625
    %v3673 = vadd.f32 %v68, %v3628
    %v3674 = vadd.f32 %v69, %v3631
    %v3675 = vadd.f32 %v70, %v3634
    %v3676 = vadd.f32 %v71, %v3637
    %v3677 = vadd.f32 %v72, %v3640
    %v3678 = vadd.f32 %v73, %v3643
    %v3679 = vadd.f32 %v74, %v3646
    %v3680 = vadd.f32 %v75, %v3649
    %v3681 = vadd.f32 %v76, %v3652
    %v3682 = vadd.f32 %v77, %v3655
    %v3683 = vadd.f32 %v78, %v3658
    %v3684 = vadd.f32 %v79, %v3661
    %v3685 = vadd.f32 %v80, %v3664
    %v3686 = vadd.f32 %v81, %v3667
    %v3687 = vadd.f32 %v82, %v3670
    %v3688 = vsel %vm83, %v3672, 0.0
    %3689 = vadd.xlane.f32.xlu0 %v3688
    %v3690 = vpop.xlane.xlu0 %3689
    %v3691 = vsel %vm83, %v3673, 0.0
    %3692 = vadd.xlane.f32.xlu0 %v3691
    %v3693 = vpop.xlane.xlu0 %3692
    %v3694 = vsel %vm83, %v3674, 0.0
    %3695 = vadd.xlane.f32.xlu0 %v3694
    %v3696 = vpop.xlane.xlu0 %3695
    %v3697 = vsel %vm83, %v3675, 0.0
    %3698 = vadd.xlane.f32.xlu0 %v3697
    %v3699 = vpop.xlane.xlu0 %3698
    %v3700 = vsel %vm83, %v3676, 0.0
    %3701 = vadd.xlane.f32.xlu0 %v3700
    %v3702 = vpop.xlane.xlu0 %3701
    %v3703 = vsel %vm83, %v3677, 0.0
    %3704 = vadd.xlane.f32.xlu0 %v3703
    %v3705 = vpop.xlane.xlu0 %3704
    %v3706 = vsel %vm83, %v3678, 0.0
    %3707 = vadd.xlane.f32.xlu0 %v3706
    %v3708 = vpop.xlane.xlu0 %3707
    %v3709 = vsel %vm83, %v3679, 0.0
    %3710 = vadd.xlane.f32.xlu0 %v3709
    %v3711 = vpop.xlane.xlu0 %3710
    %v3712 = vsel %vm83, %v3680, 0.0
    %3713 = vadd.xlane.f32.xlu0 %v3712
    %v3714 = vpop.xlane.xlu0 %3713
    %v3715 = vsel %vm83, %v3681, 0.0
    %3716 = vadd.xlane.f32.xlu0 %v3715
    %v3717 = vpop.xlane.xlu0 %3716
    %v3718 = vsel %vm83, %v3682, 0.0
    %3719 = vadd.xlane.f32.xlu0 %v3718
    %v3720 = vpop.xlane.xlu0 %3719
    %v3721 = vsel %vm83, %v3683, 0.0
    %3722 = vadd.xlane.f32.xlu0 %v3721
    %v3723 = vpop.xlane.xlu0 %3722
    %v3724 = vsel %vm83, %v3684, 0.0
    %3725 = vadd.xlane.f32.xlu0 %v3724
    %v3726 = vpop.xlane.xlu0 %3725
    %v3727 = vsel %vm83, %v3685, 0.0
    %3728 = vadd.xlane.f32.xlu0 %v3727
    %v3729 = vpop.xlane.xlu0 %3728
    %v3730 = vsel %vm83, %v3686, 0.0
    %3731 = vadd.xlane.f32.xlu0 %v3730
    %v3732 = vpop.xlane.xlu0 %3731
    %v3733 = vsel %vm83, %v3687, 0.0
    %3734 = vadd.xlane.f32.xlu0 %v3733
    %v3735 = vpop.xlane.xlu0 %3734
    %v3736 = vmul.f32 %v3690, %v138
    %v3737 = vmul.f32 %v3693, %v138
    %v3738 = vmul.f32 %v3696, %v138
    %v3739 = vmul.f32 %v3699, %v138
    %v3740 = vmul.f32 %v3702, %v138
    %v3741 = vmul.f32 %v3705, %v138
    %v3742 = vmul.f32 %v3708, %v138
    %v3743 = vmul.f32 %v3711, %v138
    %v3744 = vmul.f32 %v3714, %v138
    %v3745 = vmul.f32 %v3717, %v138
    %v3746 = vmul.f32 %v3720, %v138
    %v3747 = vmul.f32 %v3723, %v138
    %v3748 = vmul.f32 %v3726, %v138
    %v3749 = vmul.f32 %v3729, %v138
    %v3750 = vmul.f32 %v3732, %v138
    %v3751 = vmul.f32 %v3735, %v138
    %v3752 = vsub.f32 %v3672, %v3736
    %v3753 = vsub.f32 %v3673, %v3737
    %v3754 = vsub.f32 %v3674, %v3738
    %v3755 = vsub.f32 %v3675, %v3739
    %v3756 = vsub.f32 %v3676, %v3740
    %v3757 = vsub.f32 %v3677, %v3741
    %v3758 = vsub.f32 %v3678, %v3742
    %v3759 = vsub.f32 %v3679, %v3743
    %v3760 = vsub.f32 %v3680, %v3744
    %v3761 = vsub.f32 %v3681, %v3745
    %v3762 = vsub.f32 %v3682, %v3746
    %v3763 = vsub.f32 %v3683, %v3747
    %v3764 = vsub.f32 %v3684, %v3748
    %v3765 = vsub.f32 %v3685, %v3749
    %v3766 = vsub.f32 %v3686, %v3750
    %v3767 = vsub.f32 %v3687, %v3751
    %v3768 = vmul.f32 %v3752, %v3752
    %v3769 = vmul.f32 %v3753, %v3753
    %v3770 = vmul.f32 %v3754, %v3754
    %v3771 = vmul.f32 %v3755, %v3755
    %v3772 = vmul.f32 %v3756, %v3756
    %v3773 = vmul.f32 %v3757, %v3757
    %v3774 = vmul.f32 %v3758, %v3758
    %v3775 = vmul.f32 %v3759, %v3759
    %v3776 = vmul.f32 %v3760, %v3760
    %v3777 = vmul.f32 %v3761, %v3761
    %v3778 = vmul.f32 %v3762, %v3762
    %v3779 = vmul.f32 %v3763, %v3763
    %v3780 = vmul.f32 %v3764, %v3764
    %v3781 = vmul.f32 %v3765, %v3765
    %v3782 = vmul.f32 %v3766, %v3766
    %v3783 = vmul.f32 %v3767, %v3767
    %v3784 = vsel %vm83, %v3768, 0.0
    %3785 = vadd.xlane.f32.xlu0 %v3784
    %v3786 = vpop.xlane.xlu0 %3785
    %v3787 = vsel %vm83, %v3769, 0.0
    %3788 = vadd.xlane.f32.xlu0 %v3787
    %v3789 = vpop.xlane.xlu0 %3788
    %v3790 = vsel %vm83, %v3770, 0.0
    %3791 = vadd.xlane.f32.xlu0 %v3790
    %v3792 = vpop.xlane.xlu0 %3791
    %v3793 = vsel %vm83, %v3771, 0.0
    %3794 = vadd.xlane.f32.xlu0 %v3793
    %v3795 = vpop.xlane.xlu0 %3794
    %v3796 = vsel %vm83, %v3772, 0.0
    %3797 = vadd.xlane.f32.xlu0 %v3796
    %v3798 = vpop.xlane.xlu0 %3797
    %v3799 = vsel %vm83, %v3773, 0.0
    %3800 = vadd.xlane.f32.xlu0 %v3799
    %v3801 = vpop.xlane.xlu0 %3800
    %v3802 = vsel %vm83, %v3774, 0.0
    %3803 = vadd.xlane.f32.xlu0 %v3802
    %v3804 = vpop.xlane.xlu0 %3803
    %v3805 = vsel %vm83, %v3775, 0.0
    %3806 = vadd.xlane.f32.xlu0 %v3805
    %v3807 = vpop.xlane.xlu0 %3806
    %v3808 = vsel %vm83, %v3776, 0.0
    %3809 = vadd.xlane.f32.xlu0 %v3808
    %v3810 = vpop.xlane.xlu0 %3809
    %v3811 = vsel %vm83, %v3777, 0.0
    %3812 = vadd.xlane.f32.xlu0 %v3811
    %v3813 = vpop.xlane.xlu0 %3812
    %v3814 = vsel %vm83, %v3778, 0.0
    %3815 = vadd.xlane.f32.xlu0 %v3814
    %v3816 = vpop.xlane.xlu0 %3815
    %v3817 = vsel %vm83, %v3779, 0.0
    %3818 = vadd.xlane.f32.xlu0 %v3817
    %v3819 = vpop.xlane.xlu0 %3818
    %v3820 = vsel %vm83, %v3780, 0.0
    %3821 = vadd.xlane.f32.xlu0 %v3820
    %v3822 = vpop.xlane.xlu0 %3821
    %v3823 = vsel %vm83, %v3781, 0.0
    %3824 = vadd.xlane.f32.xlu0 %v3823
    %v3825 = vpop.xlane.xlu0 %3824
    %v3826 = vsel %vm83, %v3782, 0.0
    %3827 = vadd.xlane.f32.xlu0 %v3826
    %v3828 = vpop.xlane.xlu0 %3827
    %v3829 = vsel %vm83, %v3783, 0.0
    %3830 = vadd.xlane.f32.xlu0 %v3829
    %v3831 = vpop.xlane.xlu0 %3830
    %v3832 = vmul.f32 %v3786, %v138
    %v3833 = vmul.f32 %v3789, %v138
    %v3834 = vmul.f32 %v3792, %v138
    %v3835 = vmul.f32 %v3795, %v138
    %v3836 = vmul.f32 %v3798, %v138
    %v3837 = vmul.f32 %v3801, %v138
    %v3838 = vmul.f32 %v3804, %v138
    %v3839 = vmul.f32 %v3807, %v138
    %v3840 = vmul.f32 %v3810, %v138
    %v3841 = vmul.f32 %v3813, %v138
    %v3842 = vmul.f32 %v3816, %v138
    %v3843 = vmul.f32 %v3819, %v138
    %v3844 = vmul.f32 %v3822, %v138
    %v3845 = vmul.f32 %v3825, %v138
    %v3846 = vmul.f32 %v3828, %v138
    %v3847 = vmul.f32 %v3831, %v138
    %v3848 = vadd.f32 %v3832, 1e-05
    %v3849 = vadd.f32 %v3833, 1e-05
    %v3850 = vadd.f32 %v3834, 1e-05
    %v3851 = vadd.f32 %v3835, 1e-05
    %v3852 = vadd.f32 %v3836, 1e-05
    %v3853 = vadd.f32 %v3837, 1e-05
    %v3854 = vadd.f32 %v3838, 1e-05
    %v3855 = vadd.f32 %v3839, 1e-05
    %v3856 = vadd.f32 %v3840, 1e-05
    %v3857 = vadd.f32 %v3841, 1e-05
    %v3858 = vadd.f32 %v3842, 1e-05
    %v3859 = vadd.f32 %v3843, 1e-05
    %v3860 = vadd.f32 %v3844, 1e-05
    %v3861 = vadd.f32 %v3845, 1e-05
    %v3862 = vadd.f32 %v3846, 1e-05
    %v3863 = vadd.f32 %v3847, 1e-05
    %v3864 = vrsqrt.pop %v3848
    %v3865 = vmul.f32 %v3864, %v3848
    %v3866 = vmul.f32 %v3865, %v3864
    %v3867 = vmul.f32 0.5, %v3866
    %v3868 = vsub.f32 1.5, %v3867
    %v3869 = vmul.f32 %v3864, %v3868
    %vm3870 = vweird.f32 %v3848
    %vm3871 = vweird.f32 %v3864
    %vm3872 = vmor %vm3870, %vm3871
    %v3873 = vsel %vm3872, %v3864, %v3869
    %v3874 = vrsqrt.pop %v3849
    %v3875 = vmul.f32 %v3874, %v3849
    %v3876 = vmul.f32 %v3875, %v3874
    %v3877 = vmul.f32 0.5, %v3876
    %v3878 = vsub.f32 1.5, %v3877
    %v3879 = vmul.f32 %v3874, %v3878
    %vm3880 = vweird.f32 %v3849
    %vm3881 = vweird.f32 %v3874
    %vm3882 = vmor %vm3880, %vm3881
    %v3883 = vsel %vm3882, %v3874, %v3879
    %v3884 = vrsqrt.pop %v3850
    %v3885 = vmul.f32 %v3884, %v3850
    %v3886 = vmul.f32 %v3885, %v3884
    %v3887 = vmul.f32 0.5, %v3886
    %v3888 = vsub.f32 1.5, %v3887
    %v3889 = vmul.f32 %v3884, %v3888
    %vm3890 = vweird.f32 %v3850
    %vm3891 = vweird.f32 %v3884
    %vm3892 = vmor %vm3890, %vm3891
    %v3893 = vsel %vm3892, %v3884, %v3889
    %v3894 = vrsqrt.pop %v3851
    %v3895 = vmul.f32 %v3894, %v3851
    %v3896 = vmul.f32 %v3895, %v3894
    %v3897 = vmul.f32 0.5, %v3896
    %v3898 = vsub.f32 1.5, %v3897
    %v3899 = vmul.f32 %v3894, %v3898
    %vm3900 = vweird.f32 %v3851
    %vm3901 = vweird.f32 %v3894
    %vm3902 = vmor %vm3900, %vm3901
    %v3903 = vsel %vm3902, %v3894, %v3899
    %v3904 = vrsqrt.pop %v3852
    %v3905 = vmul.f32 %v3904, %v3852
    %v3906 = vmul.f32 %v3905, %v3904
    %v3907 = vmul.f32 0.5, %v3906
    %v3908 = vsub.f32 1.5, %v3907
    %v3909 = vmul.f32 %v3904, %v3908
    %vm3910 = vweird.f32 %v3852
    %vm3911 = vweird.f32 %v3904
    %vm3912 = vmor %vm3910, %vm3911
    %v3913 = vsel %vm3912, %v3904, %v3909
    %v3914 = vrsqrt.pop %v3853
    %v3915 = vmul.f32 %v3914, %v3853
    %v3916 = vmul.f32 %v3915, %v3914
    %v3917 = vmul.f32 0.5, %v3916
    %v3918 = vsub.f32 1.5, %v3917
    %v3919 = vmul.f32 %v3914, %v3918
    %vm3920 = vweird.f32 %v3853
    %vm3921 = vweird.f32 %v3914
    %vm3922 = vmor %vm3920, %vm3921
    %v3923 = vsel %vm3922, %v3914, %v3919
    %v3924 = vrsqrt.pop %v3854
    %v3925 = vmul.f32 %v3924, %v3854
    %v3926 = vmul.f32 %v3925, %v3924
    %v3927 = vmul.f32 0.5, %v3926
    %v3928 = vsub.f32 1.5, %v3927
    %v3929 = vmul.f32 %v3924, %v3928
    %vm3930 = vweird.f32 %v3854
    %vm3931 = vweird.f32 %v3924
    %vm3932 = vmor %vm3930, %vm3931
    %v3933 = vsel %vm3932, %v3924, %v3929
    %v3934 = vrsqrt.pop %v3855
    %v3935 = vmul.f32 %v3934, %v3855
    %v3936 = vmul.f32 %v3935, %v3934
    %v3937 = vmul.f32 0.5, %v3936
    %v3938 = vsub.f32 1.5, %v3937
    %v3939 = vmul.f32 %v3934, %v3938
    %vm3940 = vweird.f32 %v3855
    %vm3941 = vweird.f32 %v3934
    %vm3942 = vmor %vm3940, %vm3941
    %v3943 = vsel %vm3942, %v3934, %v3939
    %v3944 = vrsqrt.pop %v3856
    %v3945 = vmul.f32 %v3944, %v3856
    %v3946 = vmul.f32 %v3945, %v3944
    %v3947 = vmul.f32 0.5, %v3946
    %v3948 = vsub.f32 1.5, %v3947
    %v3949 = vmul.f32 %v3944, %v3948
    %vm3950 = vweird.f32 %v3856
    %vm3951 = vweird.f32 %v3944
    %vm3952 = vmor %vm3950, %vm3951
    %v3953 = vsel %vm3952, %v3944, %v3949
    %v3954 = vrsqrt.pop %v3857
    %v3955 = vmul.f32 %v3954, %v3857
    %v3956 = vmul.f32 %v3955, %v3954
    %v3957 = vmul.f32 0.5, %v3956
    %v3958 = vsub.f32 1.5, %v3957
    %v3959 = vmul.f32 %v3954, %v3958
    %vm3960 = vweird.f32 %v3857
    %vm3961 = vweird.f32 %v3954
    %vm3962 = vmor %vm3960, %vm3961
    %v3963 = vsel %vm3962, %v3954, %v3959
    %v3964 = vrsqrt.pop %v3858
    %v3965 = vmul.f32 %v3964, %v3858
    %v3966 = vmul.f32 %v3965, %v3964
    %v3967 = vmul.f32 0.5, %v3966
    %v3968 = vsub.f32 1.5, %v3967
    %v3969 = vmul.f32 %v3964, %v3968
    %vm3970 = vweird.f32 %v3858
    %vm3971 = vweird.f32 %v3964
    %vm3972 = vmor %vm3970, %vm3971
    %v3973 = vsel %vm3972, %v3964, %v3969
    %v3974 = vrsqrt.pop %v3859
    %v3975 = vmul.f32 %v3974, %v3859
    %v3976 = vmul.f32 %v3975, %v3974
    %v3977 = vmul.f32 0.5, %v3976
    %v3978 = vsub.f32 1.5, %v3977
    %v3979 = vmul.f32 %v3974, %v3978
    %vm3980 = vweird.f32 %v3859
    %vm3981 = vweird.f32 %v3974
    %vm3982 = vmor %vm3980, %vm3981
    %v3983 = vsel %vm3982, %v3974, %v3979
    %v3984 = vrsqrt.pop %v3860
    %v3985 = vmul.f32 %v3984, %v3860
    %v3986 = vmul.f32 %v3985, %v3984
    %v3987 = vmul.f32 0.5, %v3986
    %v3988 = vsub.f32 1.5, %v3987
    %v3989 = vmul.f32 %v3984, %v3988
    %vm3990 = vweird.f32 %v3860
    %vm3991 = vweird.f32 %v3984
    %vm3992 = vmor %vm3990, %vm3991
    %v3993 = vsel %vm3992, %v3984, %v3989
    %v3994 = vrsqrt.pop %v3861
    %v3995 = vmul.f32 %v3994, %v3861
    %v3996 = vmul.f32 %v3995, %v3994
    %v3997 = vmul.f32 0.5, %v3996
    %v3998 = vsub.f32 1.5, %v3997
    %v3999 = vmul.f32 %v3994, %v3998
    %vm4000 = vweird.f32 %v3861
    %vm4001 = vweird.f32 %v3994
    %vm4002 = vmor %vm4000, %vm4001
    %v4003 = vsel %vm4002, %v3994, %v3999
    %v4004 = vrsqrt.pop %v3862
    %v4005 = vmul.f32 %v4004, %v3862
    %v4006 = vmul.f32 %v4005, %v4004
    %v4007 = vmul.f32 0.5, %v4006
    %v4008 = vsub.f32 1.5, %v4007
    %v4009 = vmul.f32 %v4004, %v4008
    %vm4010 = vweird.f32 %v3862
    %vm4011 = vweird.f32 %v4004
    %vm4012 = vmor %vm4010, %vm4011
    %v4013 = vsel %vm4012, %v4004, %v4009
    %v4014 = vrsqrt.pop %v3863
    %v4015 = vmul.f32 %v4014, %v3863
    %v4016 = vmul.f32 %v4015, %v4014
    %v4017 = vmul.f32 0.5, %v4016
    %v4018 = vsub.f32 1.5, %v4017
    %v4019 = vmul.f32 %v4014, %v4018
    %vm4020 = vweird.f32 %v3863
    %vm4021 = vweird.f32 %v4014
    %vm4022 = vmor %vm4020, %vm4021
    %v4023 = vsel %vm4022, %v4014, %v4019
    %v4024 = vmul.f32 %v3752, %v3873
    %v4025 = vmul.f32 %v3753, %v3883
    %v4026 = vmul.f32 %v3754, %v3893
    %v4027 = vmul.f32 %v3755, %v3903
    %v4028 = vmul.f32 %v3756, %v3913
    %v4029 = vmul.f32 %v3757, %v3923
    %v4030 = vmul.f32 %v3758, %v3933
    %v4031 = vmul.f32 %v3759, %v3943
    %v4032 = vmul.f32 %v3760, %v3953
    %v4033 = vmul.f32 %v3761, %v3963
    %v4034 = vmul.f32 %v3762, %v3973
    %v4035 = vmul.f32 %v3763, %v3983
    %v4036 = vmul.f32 %v3764, %v3993
    %v4037 = vmul.f32 %v3765, %v4003
    %v4038 = vmul.f32 %v3766, %v4013
    %v4039 = vmul.f32 %v3767, %v4023
    %v4040 = vld [vmem:[%s6] sm:$0xff]
    %v4041 = vld [vmem:[%s6 + $0x8] sm:$0xff]
    %v4042 = vld [vmem:[%s6 + $0x10] sm:$0xff]
    %v4043 = vld [vmem:[%s6 + $0x18] sm:$0xff]
    %v4044 = vld [vmem:[%s7] sm:$0x1]
    %v4046 = vperm.slane %v4044, 0
    %v4049 = vsel %vm83, %v4024, 0
    %v4052 = vsel %vm83, %v4025, 0
    %v4055 = vsel %vm83, %v4026, 0
    %v4058 = vsel %vm83, %v4027, 0
    %v4061 = vsel %vm83, %v4028, 0
    %v4064 = vsel %vm83, %v4029, 0
    %v4067 = vsel %vm83, %v4030, 0
    %v4070 = vsel %vm83, %v4031, 0
    %v4073 = vsel %vm83, %v4032, 0
    %v4076 = vsel %vm83, %v4033, 0
    %v4079 = vsel %vm83, %v4034, 0
    %v4082 = vsel %vm83, %v4035, 0
    %v4085 = vsel %vm83, %v4036, 0
    %v4088 = vsel %vm83, %v4037, 0
    %v4091 = vsel %vm83, %v4038, 0
    %v4094 = vsel %vm83, %v4039, 0
    %4096 = vmatpush.msra.mxu0 0.0
    %4097 = vmatpush.msra.mxu0 0.0
    %4098 = vmatpush.msra.mxu0 0.0
    %4099 = vmatpush.msra.mxu0 0.0
    %4100 = vmatpush.msra.mxu0 0.0
    %4101 = vmatpush.msra.mxu0 0.0
    %4102 = vmatpush.msra.mxu0 0.0
    %4103 = vmatpush.msra.mxu0 0.0
    %4104 = vmatpush.msra.mxu0 0.0
    %4105 = vmatpush.msra.mxu0 0.0
    %4106 = vmatpush.msra.mxu0 0.0
    %4107 = vmatpush.msra.mxu0 0.0
    %4108 = vmatpush.msra.mxu0 %v4043
    %4109 = vmatpush.msra.mxu0 %v4042
    %4110 = vmatpush.msra.mxu0 %v4041
    %4111 = vmatpush.msra.mxu0 %v4040
    %4112 = vmatmul.f32.gmra.mxu0 %v4049
    %v4113 = vpop.f32.mrf.mxu0
    %v4114 = vadd.f32 %v4046, %v4113
    %4115 = vmatmul.f32.gmra.mxu0 %v4052
    %v4116 = vpop.f32.mrf.mxu0
    %v4117 = vadd.f32 %v4046, %v4116
    %4118 = vmatmul.f32.gmra.mxu0 %v4055
    %v4119 = vpop.f32.mrf.mxu0
    %v4120 = vadd.f32 %v4046, %v4119
    %4121 = vmatmul.f32.gmra.mxu0 %v4058
    %v4122 = vpop.f32.mrf.mxu0
    %v4123 = vadd.f32 %v4046, %v4122
    %4124 = vmatmul.f32.gmra.mxu0 %v4061
    %v4125 = vpop.f32.mrf.mxu0
    %v4126 = vadd.f32 %v4046, %v4125
    %4127 = vmatmul.f32.gmra.mxu0 %v4064
    %v4128 = vpop.f32.mrf.mxu0
    %v4129 = vadd.f32 %v4046, %v4128
    %4130 = vmatmul.f32.gmra.mxu0 %v4067
    %v4131 = vpop.f32.mrf.mxu0
    %v4132 = vadd.f32 %v4046, %v4131
    %4133 = vmatmul.f32.gmra.mxu0 %v4070
    %v4134 = vpop.f32.mrf.mxu0
    %v4135 = vadd.f32 %v4046, %v4134
    %4136 = vmatmul.f32.gmra.mxu0 %v4073
    %v4137 = vpop.f32.mrf.mxu0
    %v4138 = vadd.f32 %v4046, %v4137
    %4139 = vmatmul.f32.gmra.mxu0 %v4076
    %v4140 = vpop.f32.mrf.mxu0
    %v4141 = vadd.f32 %v4046, %v4140
    %4142 = vmatmul.f32.gmra.mxu0 %v4079
    %v4143 = vpop.f32.mrf.mxu0
    %v4144 = vadd.f32 %v4046, %v4143
    %4145 = vmatmul.f32.gmra.mxu0 %v4082
    %v4146 = vpop.f32.mrf.mxu0
    %v4147 = vadd.f32 %v4046, %v4146
    %4148 = vmatmul.f32.gmra.mxu0 %v4085
    %v4149 = vpop.f32.mrf.mxu0
    %v4150 = vadd.f32 %v4046, %v4149
    %4151 = vmatmul.f32.gmra.mxu0 %v4088
    %v4152 = vpop.f32.mrf.mxu0
    %v4153 = vadd.f32 %v4046, %v4152
    %4154 = vmatmul.f32.gmra.mxu0 %v4091
    %v4155 = vpop.f32.mrf.mxu0
    %v4156 = vadd.f32 %v4046, %v4155
    %4157 = vmatmul.f32.gmra.mxu0 %v4094
    %v4158 = vpop.f32.mrf.mxu0
    %v4159 = vadd.f32 %v4046, %v4158
    %4160 = vdwg.mxu0
    %v4161 = vmul.f32 %v4114, 0.5
    %v4162 = vmul.f32 %v4117, 0.5
    %v4163 = vmul.f32 %v4120, 0.5
    %v4164 = vmul.f32 %v4123, 0.5
    %v4165 = vmul.f32 %v4126, 0.5
    %v4166 = vmul.f32 %v4129, 0.5
    %v4167 = vmul.f32 %v4132, 0.5
    %v4168 = vmul.f32 %v4135, 0.5
    %v4169 = vmul.f32 %v4138, 0.5
    %v4170 = vmul.f32 %v4141, 0.5
    %v4171 = vmul.f32 %v4144, 0.5
    %v4172 = vmul.f32 %v4147, 0.5
    %v4173 = vmul.f32 %v4150, 0.5
    %v4174 = vmul.f32 %v4153, 0.5
    %v4175 = vmul.f32 %v4156, 0.5
    %v4176 = vmul.f32 %v4159, 0.5
    %v4177 = vmul.f32 %v4114, 0.70710677
    %v4178 = vmul.f32 %v4117, 0.70710677
    %v4179 = vmul.f32 %v4120, 0.70710677
    %v4180 = vmul.f32 %v4123, 0.70710677
    %v4181 = vmul.f32 %v4126, 0.70710677
    %v4182 = vmul.f32 %v4129, 0.70710677
    %v4183 = vmul.f32 %v4132, 0.70710677
    %v4184 = vmul.f32 %v4135, 0.70710677
    %v4185 = vmul.f32 %v4138, 0.70710677
    %v4186 = vmul.f32 %v4141, 0.70710677
    %v4187 = vmul.f32 %v4144, 0.70710677
    %v4188 = vmul.f32 %v4147, 0.70710677
    %v4189 = vmul.f32 %v4150, 0.70710677
    %v4190 = vmul.f32 %v4153, 0.70710677
    %v4191 = vmul.f32 %v4156, 0.70710677
    %v4192 = vmul.f32 %v4159, 0.70710677
    %v4193 = vmul.f32 %v4177, %v4177
    %v4194 = vmin.f32 16.0, %v4193
    %v4195 = vmul.f32 %v4194, 2.1237322e-06
    %v4196 = vadd.f32 %v4195, 0.00028619796
    %v4197 = vmul.f32 %v4194, %v4196
    %v4198 = vadd.f32 %v4197, 0.0036580483
    %v4199 = vmul.f32 %v4194, %v4198
    %v4200 = vadd.f32 %v4199, 0.05243302
    %v4201 = vmul.f32 %v4194, %v4200
    %v4202 = vadd.f32 %v4201, 0.18741608
    %v4203 = vmul.f32 %v4194, %v4202
    %v4204 = vadd.f32 %v4203, 1.1283791
    %v4205 = vmul.f32 %v4177, %v4204
    %v4206 = vmul.f32 %v4194, 3.8918573e-05
    %v4207 = vadd.f32 %v4206, 0.001143296
    %v4208 = vmul.f32 %v4194, %v4207
    %v4209 = vadd.f32 %v4208, 0.014752088
    %v4210 = vmul.f32 %v4194, %v4209
    %v4211 = vadd.f32 %v4210, 0.112945676
    %v4212 = vmul.f32 %v4194, %v4211
    %v4213 = vadd.f32 %v4212, 0.4994258
    %v4214 = vmul.f32 %v4194, %v4213
    %v4215 = vadd.f32 %v4214, 1.0
    %v4216 = vrcp.pop %v4215
    %v4217 = vmul.f32 %v4215, %v4216
    %v4218 = vsub.f32 1.0, %v4217
    %v4219 = vmul.f32 %v4216, %v4218
    %v4220 = vadd.f32 %v4216, %v4219
    %vm4221 = vweird.f32 %v4215
    %vm4222 = vweird.f32 %v4216
    %vm4223 = vmor %vm4221, %vm4222
    %v4224 = vsel %vm4223, %v4216, %v4220
    %v4225 = vand.u32 2147483647, %v4215
    %vm4226 = vcmp.eq.f32.partialorder %v4225, 8.507059e+37
    %v4227 = vand.u32 %v4215, 2147483648
    %v4228 = vor.u32 1.1754944e-38, %v4227
    %v4229 = vsel %vm4226, %v4228, %v4224
    %v4230 = vmul.f32 %v4205, %v4229
    %v4231 = vmin.f32 %v4230, 1.0
    %v4232 = vmax.f32 %v4231, -1.0
    %v4233 = vmul.f32 %v4178, %v4178
    %v4234 = vmin.f32 16.0, %v4233
    %v4235 = vmul.f32 %v4234, 2.1237322e-06
    %v4236 = vadd.f32 %v4235, 0.00028619796
    %v4237 = vmul.f32 %v4234, %v4236
    %v4238 = vadd.f32 %v4237, 0.0036580483
    %v4239 = vmul.f32 %v4234, %v4238
    %v4240 = vadd.f32 %v4239, 0.05243302
    %v4241 = vmul.f32 %v4234, %v4240
    %v4242 = vadd.f32 %v4241, 0.18741608
    %v4243 = vmul.f32 %v4234, %v4242
    %v4244 = vadd.f32 %v4243, 1.1283791
    %v4245 = vmul.f32 %v4178, %v4244
    %v4246 = vmul.f32 %v4234, 3.8918573e-05
    %v4247 = vadd.f32 %v4246, 0.001143296
    %v4248 = vmul.f32 %v4234, %v4247
    %v4249 = vadd.f32 %v4248, 0.014752088
    %v4250 = vmul.f32 %v4234, %v4249
    %v4251 = vadd.f32 %v4250, 0.112945676
    %v4252 = vmul.f32 %v4234, %v4251
    %v4253 = vadd.f32 %v4252, 0.4994258
    %v4254 = vmul.f32 %v4234, %v4253
    %v4255 = vadd.f32 %v4254, 1.0
    %v4256 = vrcp.pop %v4255
    %v4257 = vmul.f32 %v4255, %v4256
    %v4258 = vsub.f32 1.0, %v4257
    %v4259 = vmul.f32 %v4256, %v4258
    %v4260 = vadd.f32 %v4256, %v4259
    %vm4261 = vweird.f32 %v4255
    %vm4262 = vweird.f32 %v4256
    %vm4263 = vmor %vm4261, %vm4262
    %v4264 = vsel %vm4263, %v4256, %v4260
    %v4265 = vand.u32 2147483647, %v4255
    %vm4266 = vcmp.eq.f32.partialorder %v4265, 8.507059e+37
    %v4267 = vand.u32 %v4255, 2147483648
    %v4268 = vor.u32 1.1754944e-38, %v4267
    %v4269 = vsel %vm4266, %v4268, %v4264
    %v4270 = vmul.f32 %v4245, %v4269
    %v4271 = vmin.f32 %v4270, 1.0
    %v4272 = vmax.f32 %v4271, -1.0
    %v4273 = vmul.f32 %v4179, %v4179
    %v4274 = vmin.f32 16.0, %v4273
    %v4275 = vmul.f32 %v4274, 2.1237322e-06
    %v4276 = vadd.f32 %v4275, 0.00028619796
    %v4277 = vmul.f32 %v4274, %v4276
    %v4278 = vadd.f32 %v4277, 0.0036580483
    %v4279 = vmul.f32 %v4274, %v4278
    %v4280 = vadd.f32 %v4279, 0.05243302
    %v4281 = vmul.f32 %v4274, %v4280
    %v4282 = vadd.f32 %v4281, 0.18741608
    %v4283 = vmul.f32 %v4274, %v4282
    %v4284 = vadd.f32 %v4283, 1.1283791
    %v4285 = vmul.f32 %v4179, %v4284
    %v4286 = vmul.f32 %v4274, 3.8918573e-05
    %v4287 = vadd.f32 %v4286, 0.001143296
    %v4288 = vmul.f32 %v4274, %v4287
    %v4289 = vadd.f32 %v4288, 0.014752088
    %v4290 = vmul.f32 %v4274, %v4289
    %v4291 = vadd.f32 %v4290, 0.112945676
    %v4292 = vmul.f32 %v4274, %v4291
    %v4293 = vadd.f32 %v4292, 0.4994258
    %v4294 = vmul.f32 %v4274, %v4293
    %v4295 = vadd.f32 %v4294, 1.0
    %v4296 = vrcp.pop %v4295
    %v4297 = vmul.f32 %v4295, %v4296
    %v4298 = vsub.f32 1.0, %v4297
    %v4299 = vmul.f32 %v4296, %v4298
    %v4300 = vadd.f32 %v4296, %v4299
    %vm4301 = vweird.f32 %v4295
    %vm4302 = vweird.f32 %v4296
    %vm4303 = vmor %vm4301, %vm4302
    %v4304 = vsel %vm4303, %v4296, %v4300
    %v4305 = vand.u32 2147483647, %v4295
    %vm4306 = vcmp.eq.f32.partialorder %v4305, 8.507059e+37
    %v4307 = vand.u32 %v4295, 2147483648
    %v4308 = vor.u32 1.1754944e-38, %v4307
    %v4309 = vsel %vm4306, %v4308, %v4304
    %v4310 = vmul.f32 %v4285, %v4309
    %v4311 = vmin.f32 %v4310, 1.0
    %v4312 = vmax.f32 %v4311, -1.0
    %v4313 = vmul.f32 %v4180, %v4180
    %v4314 = vmin.f32 16.0, %v4313
    %v4315 = vmul.f32 %v4314, 2.1237322e-06
    %v4316 = vadd.f32 %v4315, 0.00028619796
    %v4317 = vmul.f32 %v4314, %v4316
    %v4318 = vadd.f32 %v4317, 0.0036580483
    %v4319 = vmul.f32 %v4314, %v4318
    %v4320 = vadd.f32 %v4319, 0.05243302
    %v4321 = vmul.f32 %v4314, %v4320
    %v4322 = vadd.f32 %v4321, 0.18741608
    %v4323 = vmul.f32 %v4314, %v4322
    %v4324 = vadd.f32 %v4323, 1.1283791
    %v4325 = vmul.f32 %v4180, %v4324
    %v4326 = vmul.f32 %v4314, 3.8918573e-05
    %v4327 = vadd.f32 %v4326, 0.001143296
    %v4328 = vmul.f32 %v4314, %v4327
    %v4329 = vadd.f32 %v4328, 0.014752088
    %v4330 = vmul.f32 %v4314, %v4329
    %v4331 = vadd.f32 %v4330, 0.112945676
    %v4332 = vmul.f32 %v4314, %v4331
    %v4333 = vadd.f32 %v4332, 0.4994258
    %v4334 = vmul.f32 %v4314, %v4333
    %v4335 = vadd.f32 %v4334, 1.0
    %v4336 = vrcp.pop %v4335
    %v4337 = vmul.f32 %v4335, %v4336
    %v4338 = vsub.f32 1.0, %v4337
    %v4339 = vmul.f32 %v4336, %v4338
    %v4340 = vadd.f32 %v4336, %v4339
    %vm4341 = vweird.f32 %v4335
    %vm4342 = vweird.f32 %v4336
    %vm4343 = vmor %vm4341, %vm4342
    %v4344 = vsel %vm4343, %v4336, %v4340
    %v4345 = vand.u32 2147483647, %v4335
    %vm4346 = vcmp.eq.f32.partialorder %v4345, 8.507059e+37
    %v4347 = vand.u32 %v4335, 2147483648
    %v4348 = vor.u32 1.1754944e-38, %v4347
    %v4349 = vsel %vm4346, %v4348, %v4344
    %v4350 = vmul.f32 %v4325, %v4349
    %v4351 = vmin.f32 %v4350, 1.0
    %v4352 = vmax.f32 %v4351, -1.0
    %v4353 = vmul.f32 %v4181, %v4181
    %v4354 = vmin.f32 16.0, %v4353
    %v4355 = vmul.f32 %v4354, 2.1237322e-06
    %v4356 = vadd.f32 %v4355, 0.00028619796
    %v4357 = vmul.f32 %v4354, %v4356
    %v4358 = vadd.f32 %v4357, 0.0036580483
    %v4359 = vmul.f32 %v4354, %v4358
    %v4360 = vadd.f32 %v4359, 0.05243302
    %v4361 = vmul.f32 %v4354, %v4360
    %v4362 = vadd.f32 %v4361, 0.18741608
    %v4363 = vmul.f32 %v4354, %v4362
    %v4364 = vadd.f32 %v4363, 1.1283791
    %v4365 = vmul.f32 %v4181, %v4364
    %v4366 = vmul.f32 %v4354, 3.8918573e-05
    %v4367 = vadd.f32 %v4366, 0.001143296
    %v4368 = vmul.f32 %v4354, %v4367
    %v4369 = vadd.f32 %v4368, 0.014752088
    %v4370 = vmul.f32 %v4354, %v4369
    %v4371 = vadd.f32 %v4370, 0.112945676
    %v4372 = vmul.f32 %v4354, %v4371
    %v4373 = vadd.f32 %v4372, 0.4994258
    %v4374 = vmul.f32 %v4354, %v4373
    %v4375 = vadd.f32 %v4374, 1.0
    %v4376 = vrcp.pop %v4375
    %v4377 = vmul.f32 %v4375, %v4376
    %v4378 = vsub.f32 1.0, %v4377
    %v4379 = vmul.f32 %v4376, %v4378
    %v4380 = vadd.f32 %v4376, %v4379
    %vm4381 = vweird.f32 %v4375
    %vm4382 = vweird.f32 %v4376
    %vm4383 = vmor %vm4381, %vm4382
    %v4384 = vsel %vm4383, %v4376, %v4380
    %v4385 = vand.u32 2147483647, %v4375
    %vm4386 = vcmp.eq.f32.partialorder %v4385, 8.507059e+37
    %v4387 = vand.u32 %v4375, 2147483648
    %v4388 = vor.u32 1.1754944e-38, %v4387
    %v4389 = vsel %vm4386, %v4388, %v4384
    %v4390 = vmul.f32 %v4365, %v4389
    %v4391 = vmin.f32 %v4390, 1.0
    %v4392 = vmax.f32 %v4391, -1.0
    %v4393 = vmul.f32 %v4182, %v4182
    %v4394 = vmin.f32 16.0, %v4393
    %v4395 = vmul.f32 %v4394, 2.1237322e-06
    %v4396 = vadd.f32 %v4395, 0.00028619796
    %v4397 = vmul.f32 %v4394, %v4396
    %v4398 = vadd.f32 %v4397, 0.0036580483
    %v4399 = vmul.f32 %v4394, %v4398
    %v4400 = vadd.f32 %v4399, 0.05243302
    %v4401 = vmul.f32 %v4394, %v4400
    %v4402 = vadd.f32 %v4401, 0.18741608
    %v4403 = vmul.f32 %v4394, %v4402
    %v4404 = vadd.f32 %v4403, 1.1283791
    %v4405 = vmul.f32 %v4182, %v4404
    %v4406 = vmul.f32 %v4394, 3.8918573e-05
    %v4407 = vadd.f32 %v4406, 0.001143296
    %v4408 = vmul.f32 %v4394, %v4407
    %v4409 = vadd.f32 %v4408, 0.014752088
    %v4410 = vmul.f32 %v4394, %v4409
    %v4411 = vadd.f32 %v4410, 0.112945676
    %v4412 = vmul.f32 %v4394, %v4411
    %v4413 = vadd.f32 %v4412, 0.4994258
    %v4414 = vmul.f32 %v4394, %v4413
    %v4415 = vadd.f32 %v4414, 1.0
    %v4416 = vrcp.pop %v4415
    %v4417 = vmul.f32 %v4415, %v4416
    %v4418 = vsub.f32 1.0, %v4417
    %v4419 = vmul.f32 %v4416, %v4418
    %v4420 = vadd.f32 %v4416, %v4419
    %vm4421 = vweird.f32 %v4415
    %vm4422 = vweird.f32 %v4416
    %vm4423 = vmor %vm4421, %vm4422
    %v4424 = vsel %vm4423, %v4416, %v4420
    %v4425 = vand.u32 2147483647, %v4415
    %vm4426 = vcmp.eq.f32.partialorder %v4425, 8.507059e+37
    %v4427 = vand.u32 %v4415, 2147483648
    %v4428 = vor.u32 1.1754944e-38, %v4427
    %v4429 = vsel %vm4426, %v4428, %v4424
    %v4430 = vmul.f32 %v4405, %v4429
    %v4431 = vmin.f32 %v4430, 1.0
    %v4432 = vmax.f32 %v4431, -1.0
    %v4433 = vmul.f32 %v4183, %v4183
    %v4434 = vmin.f32 16.0, %v4433
    %v4435 = vmul.f32 %v4434, 2.1237322e-06
    %v4436 = vadd.f32 %v4435, 0.00028619796
    %v4437 = vmul.f32 %v4434, %v4436
    %v4438 = vadd.f32 %v4437, 0.0036580483
    %v4439 = vmul.f32 %v4434, %v4438
    %v4440 = vadd.f32 %v4439, 0.05243302
    %v4441 = vmul.f32 %v4434, %v4440
    %v4442 = vadd.f32 %v4441, 0.18741608
    %v4443 = vmul.f32 %v4434, %v4442
    %v4444 = vadd.f32 %v4443, 1.1283791
    %v4445 = vmul.f32 %v4183, %v4444
    %v4446 = vmul.f32 %v4434, 3.8918573e-05
    %v4447 = vadd.f32 %v4446, 0.001143296
    %v4448 = vmul.f32 %v4434, %v4447
    %v4449 = vadd.f32 %v4448, 0.014752088
    %v4450 = vmul.f32 %v4434, %v4449
    %v4451 = vadd.f32 %v4450, 0.112945676
    %v4452 = vmul.f32 %v4434, %v4451
    %v4453 = vadd.f32 %v4452, 0.4994258
    %v4454 = vmul.f32 %v4434, %v4453
    %v4455 = vadd.f32 %v4454, 1.0
    %v4456 = vrcp.pop %v4455
    %v4457 = vmul.f32 %v4455, %v4456
    %v4458 = vsub.f32 1.0, %v4457
    %v4459 = vmul.f32 %v4456, %v4458
    %v4460 = vadd.f32 %v4456, %v4459
    %vm4461 = vweird.f32 %v4455
    %vm4462 = vweird.f32 %v4456
    %vm4463 = vmor %vm4461, %vm4462
    %v4464 = vsel %vm4463, %v4456, %v4460
    %v4465 = vand.u32 2147483647, %v4455
    %vm4466 = vcmp.eq.f32.partialorder %v4465, 8.507059e+37
    %v4467 = vand.u32 %v4455, 2147483648
    %v4468 = vor.u32 1.1754944e-38, %v4467
    %v4469 = vsel %vm4466, %v4468, %v4464
    %v4470 = vmul.f32 %v4445, %v4469
    %v4471 = vmin.f32 %v4470, 1.0
    %v4472 = vmax.f32 %v4471, -1.0
    %v4473 = vmul.f32 %v4184, %v4184
    %v4474 = vmin.f32 16.0, %v4473
    %v4475 = vmul.f32 %v4474, 2.1237322e-06
    %v4476 = vadd.f32 %v4475, 0.00028619796
    %v4477 = vmul.f32 %v4474, %v4476
    %v4478 = vadd.f32 %v4477, 0.0036580483
    %v4479 = vmul.f32 %v4474, %v4478
    %v4480 = vadd.f32 %v4479, 0.05243302
    %v4481 = vmul.f32 %v4474, %v4480
    %v4482 = vadd.f32 %v4481, 0.18741608
    %v4483 = vmul.f32 %v4474, %v4482
    %v4484 = vadd.f32 %v4483, 1.1283791
    %v4485 = vmul.f32 %v4184, %v4484
    %v4486 = vmul.f32 %v4474, 3.8918573e-05
    %v4487 = vadd.f32 %v4486, 0.001143296
    %v4488 = vmul.f32 %v4474, %v4487
    %v4489 = vadd.f32 %v4488, 0.014752088
    %v4490 = vmul.f32 %v4474, %v4489
    %v4491 = vadd.f32 %v4490, 0.112945676
    %v4492 = vmul.f32 %v4474, %v4491
    %v4493 = vadd.f32 %v4492, 0.4994258
    %v4494 = vmul.f32 %v4474, %v4493
    %v4495 = vadd.f32 %v4494, 1.0
    %v4496 = vrcp.pop %v4495
    %v4497 = vmul.f32 %v4495, %v4496
    %v4498 = vsub.f32 1.0, %v4497
    %v4499 = vmul.f32 %v4496, %v4498
    %v4500 = vadd.f32 %v4496, %v4499
    %vm4501 = vweird.f32 %v4495
    %vm4502 = vweird.f32 %v4496
    %vm4503 = vmor %vm4501, %vm4502
    %v4504 = vsel %vm4503, %v4496, %v4500
    %v4505 = vand.u32 2147483647, %v4495
    %vm4506 = vcmp.eq.f32.partialorder %v4505, 8.507059e+37
    %v4507 = vand.u32 %v4495, 2147483648
    %v4508 = vor.u32 1.1754944e-38, %v4507
    %v4509 = vsel %vm4506, %v4508, %v4504
    %v4510 = vmul.f32 %v4485, %v4509
    %v4511 = vmin.f32 %v4510, 1.0
    %v4512 = vmax.f32 %v4511, -1.0
    %v4513 = vmul.f32 %v4185, %v4185
    %v4514 = vmin.f32 16.0, %v4513
    %v4515 = vmul.f32 %v4514, 2.1237322e-06
    %v4516 = vadd.f32 %v4515, 0.00028619796
    %v4517 = vmul.f32 %v4514, %v4516
    %v4518 = vadd.f32 %v4517, 0.0036580483
    %v4519 = vmul.f32 %v4514, %v4518
    %v4520 = vadd.f32 %v4519, 0.05243302
    %v4521 = vmul.f32 %v4514, %v4520
    %v4522 = vadd.f32 %v4521, 0.18741608
    %v4523 = vmul.f32 %v4514, %v4522
    %v4524 = vadd.f32 %v4523, 1.1283791
    %v4525 = vmul.f32 %v4185, %v4524
    %v4526 = vmul.f32 %v4514, 3.8918573e-05
    %v4527 = vadd.f32 %v4526, 0.001143296
    %v4528 = vmul.f32 %v4514, %v4527
    %v4529 = vadd.f32 %v4528, 0.014752088
    %v4530 = vmul.f32 %v4514, %v4529
    %v4531 = vadd.f32 %v4530, 0.112945676
    %v4532 = vmul.f32 %v4514, %v4531
    %v4533 = vadd.f32 %v4532, 0.4994258
    %v4534 = vmul.f32 %v4514, %v4533
    %v4535 = vadd.f32 %v4534, 1.0
    %v4536 = vrcp.pop %v4535
    %v4537 = vmul.f32 %v4535, %v4536
    %v4538 = vsub.f32 1.0, %v4537
    %v4539 = vmul.f32 %v4536, %v4538
    %v4540 = vadd.f32 %v4536, %v4539
    %vm4541 = vweird.f32 %v4535
    %vm4542 = vweird.f32 %v4536
    %vm4543 = vmor %vm4541, %vm4542
    %v4544 = vsel %vm4543, %v4536, %v4540
    %v4545 = vand.u32 2147483647, %v4535
    %vm4546 = vcmp.eq.f32.partialorder %v4545, 8.507059e+37
    %v4547 = vand.u32 %v4535, 2147483648
    %v4548 = vor.u32 1.1754944e-38, %v4547
    %v4549 = vsel %vm4546, %v4548, %v4544
    %v4550 = vmul.f32 %v4525, %v4549
    %v4551 = vmin.f32 %v4550, 1.0
    %v4552 = vmax.f32 %v4551, -1.0
    %v4553 = vmul.f32 %v4186, %v4186
    %v4554 = vmin.f32 16.0, %v4553
    %v4555 = vmul.f32 %v4554, 2.1237322e-06
    %v4556 = vadd.f32 %v4555, 0.00028619796
    %v4557 = vmul.f32 %v4554, %v4556
    %v4558 = vadd.f32 %v4557, 0.0036580483
    %v4559 = vmul.f32 %v4554, %v4558
    %v4560 = vadd.f32 %v4559, 0.05243302
    %v4561 = vmul.f32 %v4554, %v4560
    %v4562 = vadd.f32 %v4561, 0.18741608
    %v4563 = vmul.f32 %v4554, %v4562
    %v4564 = vadd.f32 %v4563, 1.1283791
    %v4565 = vmul.f32 %v4186, %v4564
    %v4566 = vmul.f32 %v4554, 3.8918573e-05
    %v4567 = vadd.f32 %v4566, 0.001143296
    %v4568 = vmul.f32 %v4554, %v4567
    %v4569 = vadd.f32 %v4568, 0.014752088
    %v4570 = vmul.f32 %v4554, %v4569
    %v4571 = vadd.f32 %v4570, 0.112945676
    %v4572 = vmul.f32 %v4554, %v4571
    %v4573 = vadd.f32 %v4572, 0.4994258
    %v4574 = vmul.f32 %v4554, %v4573
    %v4575 = vadd.f32 %v4574, 1.0
    %v4576 = vrcp.pop %v4575
    %v4577 = vmul.f32 %v4575, %v4576
    %v4578 = vsub.f32 1.0, %v4577
    %v4579 = vmul.f32 %v4576, %v4578
    %v4580 = vadd.f32 %v4576, %v4579
    %vm4581 = vweird.f32 %v4575
    %vm4582 = vweird.f32 %v4576
    %vm4583 = vmor %vm4581, %vm4582
    %v4584 = vsel %vm4583, %v4576, %v4580
    %v4585 = vand.u32 2147483647, %v4575
    %vm4586 = vcmp.eq.f32.partialorder %v4585, 8.507059e+37
    %v4587 = vand.u32 %v4575, 2147483648
    %v4588 = vor.u32 1.1754944e-38, %v4587
    %v4589 = vsel %vm4586, %v4588, %v4584
    %v4590 = vmul.f32 %v4565, %v4589
    %v4591 = vmin.f32 %v4590, 1.0
    %v4592 = vmax.f32 %v4591, -1.0
    %v4593 = vmul.f32 %v4187, %v4187
    %v4594 = vmin.f32 16.0, %v4593
    %v4595 = vmul.f32 %v4594, 2.1237322e-06
    %v4596 = vadd.f32 %v4595, 0.00028619796
    %v4597 = vmul.f32 %v4594, %v4596
    %v4598 = vadd.f32 %v4597, 0.0036580483
    %v4599 = vmul.f32 %v4594, %v4598
    %v4600 = vadd.f32 %v4599, 0.05243302
    %v4601 = vmul.f32 %v4594, %v4600
    %v4602 = vadd.f32 %v4601, 0.18741608
    %v4603 = vmul.f32 %v4594, %v4602
    %v4604 = vadd.f32 %v4603, 1.1283791
    %v4605 = vmul.f32 %v4187, %v4604
    %v4606 = vmul.f32 %v4594, 3.8918573e-05
    %v4607 = vadd.f32 %v4606, 0.001143296
    %v4608 = vmul.f32 %v4594, %v4607
    %v4609 = vadd.f32 %v4608, 0.014752088
    %v4610 = vmul.f32 %v4594, %v4609
    %v4611 = vadd.f32 %v4610, 0.112945676
    %v4612 = vmul.f32 %v4594, %v4611
    %v4613 = vadd.f32 %v4612, 0.4994258
    %v4614 = vmul.f32 %v4594, %v4613
    %v4615 = vadd.f32 %v4614, 1.0
    %v4616 = vrcp.pop %v4615
    %v4617 = vmul.f32 %v4615, %v4616
    %v4618 = vsub.f32 1.0, %v4617
    %v4619 = vmul.f32 %v4616, %v4618
    %v4620 = vadd.f32 %v4616, %v4619
    %vm4621 = vweird.f32 %v4615
    %vm4622 = vweird.f32 %v4616
    %vm4623 = vmor %vm4621, %vm4622
    %v4624 = vsel %vm4623, %v4616, %v4620
    %v4625 = vand.u32 2147483647, %v4615
    %vm4626 = vcmp.eq.f32.partialorder %v4625, 8.507059e+37
    %v4627 = vand.u32 %v4615, 2147483648
    %v4628 = vor.u32 1.1754944e-38, %v4627
    %v4629 = vsel %vm4626, %v4628, %v4624
    %v4630 = vmul.f32 %v4605, %v4629
    %v4631 = vmin.f32 %v4630, 1.0
    %v4632 = vmax.f32 %v4631, -1.0
    %v4633 = vmul.f32 %v4188, %v4188
    %v4634 = vmin.f32 16.0, %v4633
    %v4635 = vmul.f32 %v4634, 2.1237322e-06
    %v4636 = vadd.f32 %v4635, 0.00028619796
    %v4637 = vmul.f32 %v4634, %v4636
    %v4638 = vadd.f32 %v4637, 0.0036580483
    %v4639 = vmul.f32 %v4634, %v4638
    %v4640 = vadd.f32 %v4639, 0.05243302
    %v4641 = vmul.f32 %v4634, %v4640
    %v4642 = vadd.f32 %v4641, 0.18741608
    %v4643 = vmul.f32 %v4634, %v4642
    %v4644 = vadd.f32 %v4643, 1.1283791
    %v4645 = vmul.f32 %v4188, %v4644
    %v4646 = vmul.f32 %v4634, 3.8918573e-05
    %v4647 = vadd.f32 %v4646, 0.001143296
    %v4648 = vmul.f32 %v4634, %v4647
    %v4649 = vadd.f32 %v4648, 0.014752088
    %v4650 = vmul.f32 %v4634, %v4649
    %v4651 = vadd.f32 %v4650, 0.112945676
    %v4652 = vmul.f32 %v4634, %v4651
    %v4653 = vadd.f32 %v4652, 0.4994258
    %v4654 = vmul.f32 %v4634, %v4653
    %v4655 = vadd.f32 %v4654, 1.0
    %v4656 = vrcp.pop %v4655
    %v4657 = vmul.f32 %v4655, %v4656
    %v4658 = vsub.f32 1.0, %v4657
    %v4659 = vmul.f32 %v4656, %v4658
    %v4660 = vadd.f32 %v4656, %v4659
    %vm4661 = vweird.f32 %v4655
    %vm4662 = vweird.f32 %v4656
    %vm4663 = vmor %vm4661, %vm4662
    %v4664 = vsel %vm4663, %v4656, %v4660
    %v4665 = vand.u32 2147483647, %v4655
    %vm4666 = vcmp.eq.f32.partialorder %v4665, 8.507059e+37
    %v4667 = vand.u32 %v4655, 2147483648
    %v4668 = vor.u32 1.1754944e-38, %v4667
    %v4669 = vsel %vm4666, %v4668, %v4664
    %v4670 = vmul.f32 %v4645, %v4669
    %v4671 = vmin.f32 %v4670, 1.0
    %v4672 = vmax.f32 %v4671, -1.0
    %v4673 = vmul.f32 %v4189, %v4189
    %v4674 = vmin.f32 16.0, %v4673
    %v4675 = vmul.f32 %v4674, 2.1237322e-06
    %v4676 = vadd.f32 %v4675, 0.00028619796
    %v4677 = vmul.f32 %v4674, %v4676
    %v4678 = vadd.f32 %v4677, 0.0036580483
    %v4679 = vmul.f32 %v4674, %v4678
    %v4680 = vadd.f32 %v4679, 0.05243302
    %v4681 = vmul.f32 %v4674, %v4680
    %v4682 = vadd.f32 %v4681, 0.18741608
    %v4683 = vmul.f32 %v4674, %v4682
    %v4684 = vadd.f32 %v4683, 1.1283791
    %v4685 = vmul.f32 %v4189, %v4684
    %v4686 = vmul.f32 %v4674, 3.8918573e-05
    %v4687 = vadd.f32 %v4686, 0.001143296
    %v4688 = vmul.f32 %v4674, %v4687
    %v4689 = vadd.f32 %v4688, 0.014752088
    %v4690 = vmul.f32 %v4674, %v4689
    %v4691 = vadd.f32 %v4690, 0.112945676
    %v4692 = vmul.f32 %v4674, %v4691
    %v4693 = vadd.f32 %v4692, 0.4994258
    %v4694 = vmul.f32 %v4674, %v4693
    %v4695 = vadd.f32 %v4694, 1.0
    %v4696 = vrcp.pop %v4695
    %v4697 = vmul.f32 %v4695, %v4696
    %v4698 = vsub.f32 1.0, %v4697
    %v4699 = vmul.f32 %v4696, %v4698
    %v4700 = vadd.f32 %v4696, %v4699
    %vm4701 = vweird.f32 %v4695
    %vm4702 = vweird.f32 %v4696
    %vm4703 = vmor %vm4701, %vm4702
    %v4704 = vsel %vm4703, %v4696, %v4700
    %v4705 = vand.u32 2147483647, %v4695
    %vm4706 = vcmp.eq.f32.partialorder %v4705, 8.507059e+37
    %v4707 = vand.u32 %v4695, 2147483648
    %v4708 = vor.u32 1.1754944e-38, %v4707
    %v4709 = vsel %vm4706, %v4708, %v4704
    %v4710 = vmul.f32 %v4685, %v4709
    %v4711 = vmin.f32 %v4710, 1.0
    %v4712 = vmax.f32 %v4711, -1.0
    %v4713 = vmul.f32 %v4190, %v4190
    %v4714 = vmin.f32 16.0, %v4713
    %v4715 = vmul.f32 %v4714, 2.1237322e-06
    %v4716 = vadd.f32 %v4715, 0.00028619796
    %v4717 = vmul.f32 %v4714, %v4716
    %v4718 = vadd.f32 %v4717, 0.0036580483
    %v4719 = vmul.f32 %v4714, %v4718
    %v4720 = vadd.f32 %v4719, 0.05243302
    %v4721 = vmul.f32 %v4714, %v4720
    %v4722 = vadd.f32 %v4721, 0.18741608
    %v4723 = vmul.f32 %v4714, %v4722
    %v4724 = vadd.f32 %v4723, 1.1283791
    %v4725 = vmul.f32 %v4190, %v4724
    %v4726 = vmul.f32 %v4714, 3.8918573e-05
    %v4727 = vadd.f32 %v4726, 0.001143296
    %v4728 = vmul.f32 %v4714, %v4727
    %v4729 = vadd.f32 %v4728, 0.014752088
    %v4730 = vmul.f32 %v4714, %v4729
    %v4731 = vadd.f32 %v4730, 0.112945676
    %v4732 = vmul.f32 %v4714, %v4731
    %v4733 = vadd.f32 %v4732, 0.4994258
    %v4734 = vmul.f32 %v4714, %v4733
    %v4735 = vadd.f32 %v4734, 1.0
    %v4736 = vrcp.pop %v4735
    %v4737 = vmul.f32 %v4735, %v4736
    %v4738 = vsub.f32 1.0, %v4737
    %v4739 = vmul.f32 %v4736, %v4738
    %v4740 = vadd.f32 %v4736, %v4739
    %vm4741 = vweird.f32 %v4735
    %vm4742 = vweird.f32 %v4736
    %vm4743 = vmor %vm4741, %vm4742
    %v4744 = vsel %vm4743, %v4736, %v4740
    %v4745 = vand.u32 2147483647, %v4735
    %vm4746 = vcmp.eq.f32.partialorder %v4745, 8.507059e+37
    %v4747 = vand.u32 %v4735, 2147483648
    %v4748 = vor.u32 1.1754944e-38, %v4747
    %v4749 = vsel %vm4746, %v4748, %v4744
    %v4750 = vmul.f32 %v4725, %v4749
    %v4751 = vmin.f32 %v4750, 1.0
    %v4752 = vmax.f32 %v4751, -1.0
    %v4753 = vmul.f32 %v4191, %v4191
    %v4754 = vmin.f32 16.0, %v4753
    %v4755 = vmul.f32 %v4754, 2.1237322e-06
    %v4756 = vadd.f32 %v4755, 0.00028619796
    %v4757 = vmul.f32 %v4754, %v4756
    %v4758 = vadd.f32 %v4757, 0.0036580483
    %v4759 = vmul.f32 %v4754, %v4758
    %v4760 = vadd.f32 %v4759, 0.05243302
    %v4761 = vmul.f32 %v4754, %v4760
    %v4762 = vadd.f32 %v4761, 0.18741608
    %v4763 = vmul.f32 %v4754, %v4762
    %v4764 = vadd.f32 %v4763, 1.1283791
    %v4765 = vmul.f32 %v4191, %v4764
    %v4766 = vmul.f32 %v4754, 3.8918573e-05
    %v4767 = vadd.f32 %v4766, 0.001143296
    %v4768 = vmul.f32 %v4754, %v4767
    %v4769 = vadd.f32 %v4768, 0.014752088
    %v4770 = vmul.f32 %v4754, %v4769
    %v4771 = vadd.f32 %v4770, 0.112945676
    %v4772 = vmul.f32 %v4754, %v4771
    %v4773 = vadd.f32 %v4772, 0.4994258
    %v4774 = vmul.f32 %v4754, %v4773
    %v4775 = vadd.f32 %v4774, 1.0
    %v4776 = vrcp.pop %v4775
    %v4777 = vmul.f32 %v4775, %v4776
    %v4778 = vsub.f32 1.0, %v4777
    %v4779 = vmul.f32 %v4776, %v4778
    %v4780 = vadd.f32 %v4776, %v4779
    %vm4781 = vweird.f32 %v4775
    %vm4782 = vweird.f32 %v4776
    %vm4783 = vmor %vm4781, %vm4782
    %v4784 = vsel %vm4783, %v4776, %v4780
    %v4785 = vand.u32 2147483647, %v4775
    %vm4786 = vcmp.eq.f32.partialorder %v4785, 8.507059e+37
    %v4787 = vand.u32 %v4775, 2147483648
    %v4788 = vor.u32 1.1754944e-38, %v4787
    %v4789 = vsel %vm4786, %v4788, %v4784
    %v4790 = vmul.f32 %v4765, %v4789
    %v4791 = vmin.f32 %v4790, 1.0
    %v4792 = vmax.f32 %v4791, -1.0
    %v4793 = vmul.f32 %v4192, %v4192
    %v4794 = vmin.f32 16.0, %v4793
    %v4795 = vmul.f32 %v4794, 2.1237322e-06
    %v4796 = vadd.f32 %v4795, 0.00028619796
    %v4797 = vmul.f32 %v4794, %v4796
    %v4798 = vadd.f32 %v4797, 0.0036580483
    %v4799 = vmul.f32 %v4794, %v4798
    %v4800 = vadd.f32 %v4799, 0.05243302
    %v4801 = vmul.f32 %v4794, %v4800
    %v4802 = vadd.f32 %v4801, 0.18741608
    %v4803 = vmul.f32 %v4794, %v4802
    %v4804 = vadd.f32 %v4803, 1.1283791
    %v4805 = vmul.f32 %v4192, %v4804
    %v4806 = vmul.f32 %v4794, 3.8918573e-05
    %v4807 = vadd.f32 %v4806, 0.001143296
    %v4808 = vmul.f32 %v4794, %v4807
    %v4809 = vadd.f32 %v4808, 0.014752088
    %v4810 = vmul.f32 %v4794, %v4809
    %v4811 = vadd.f32 %v4810, 0.112945676
    %v4812 = vmul.f32 %v4794, %v4811
    %v4813 = vadd.f32 %v4812, 0.4994258
    %v4814 = vmul.f32 %v4794, %v4813
    %v4815 = vadd.f32 %v4814, 1.0
    %v4816 = vrcp.pop %v4815
    %v4817 = vmul.f32 %v4815, %v4816
    %v4818 = vsub.f32 1.0, %v4817
    %v4819 = vmul.f32 %v4816, %v4818
    %v4820 = vadd.f32 %v4816, %v4819
    %vm4821 = vweird.f32 %v4815
    %vm4822 = vweird.f32 %v4816
    %vm4823 = vmor %vm4821, %vm4822
    %v4824 = vsel %vm4823, %v4816, %v4820
    %v4825 = vand.u32 2147483647, %v4815
    %vm4826 = vcmp.eq.f32.partialorder %v4825, 8.507059e+37
    %v4827 = vand.u32 %v4815, 2147483648
    %v4828 = vor.u32 1.1754944e-38, %v4827
    %v4829 = vsel %vm4826, %v4828, %v4824
    %v4830 = vmul.f32 %v4805, %v4829
    %v4831 = vmin.f32 %v4830, 1.0
    %v4832 = vmax.f32 %v4831, -1.0
    %v4833 = vadd.f32 %v4232, 1.0
    %v4834 = vadd.f32 %v4272, 1.0
    %v4835 = vadd.f32 %v4312, 1.0
    %v4836 = vadd.f32 %v4352, 1.0
    %v4837 = vadd.f32 %v4392, 1.0
    %v4838 = vadd.f32 %v4432, 1.0
    %v4839 = vadd.f32 %v4472, 1.0
    %v4840 = vadd.f32 %v4512, 1.0
    %v4841 = vadd.f32 %v4552, 1.0
    %v4842 = vadd.f32 %v4592, 1.0
    %v4843 = vadd.f32 %v4632, 1.0
    %v4844 = vadd.f32 %v4672, 1.0
    %v4845 = vadd.f32 %v4712, 1.0
    %v4846 = vadd.f32 %v4752, 1.0
    %v4847 = vadd.f32 %v4792, 1.0
    %v4848 = vadd.f32 %v4832, 1.0
    %v4849 = vmul.f32 %v4161, %v4833
    %v4850 = vmul.f32 %v4162, %v4834
    %v4851 = vmul.f32 %v4163, %v4835
    %v4852 = vmul.f32 %v4164, %v4836
    %v4853 = vmul.f32 %v4165, %v4837
    %v4854 = vmul.f32 %v4166, %v4838
    %v4855 = vmul.f32 %v4167, %v4839
    %v4856 = vmul.f32 %v4168, %v4840
    %v4857 = vmul.f32 %v4169, %v4841
    %v4858 = vmul.f32 %v4170, %v4842
    %v4859 = vmul.f32 %v4171, %v4843
    %v4860 = vmul.f32 %v4172, %v4844
    %v4861 = vmul.f32 %v4173, %v4845
    %v4862 = vmul.f32 %v4174, %v4846
    %v4863 = vmul.f32 %v4175, %v4847
    %v4864 = vmul.f32 %v4176, %v4848
    %v4865 = vld [vmem:[%s8] sm:$0xff]
    %v4866 = vld [vmem:[%s8 + $0x8] sm:$0xff]
    %v4867 = vld [vmem:[%s8 + $0x10] sm:$0xff]
    %v4868 = vld [vmem:[%s8 + $0x18] sm:$0xff]
    %v4869 = vld [vmem:[%s8 + $0x20] sm:$0xff]
    %v4870 = vld [vmem:[%s8 + $0x28] sm:$0xff]
    %v4871 = vld [vmem:[%s8 + $0x30] sm:$0xff]
    %v4872 = vld [vmem:[%s8 + $0x38] sm:$0xff]
    %v4873 = vld [vmem:[%s8 + $0x40] sm:$0xff]
    %v4874 = vld [vmem:[%s8 + $0x48] sm:$0xff]
    %v4875 = vld [vmem:[%s8 + $0x50] sm:$0xff]
    %v4876 = vld [vmem:[%s8 + $0x58] sm:$0xff]
    %v4877 = vld [vmem:[%s8 + $0x60] sm:$0xff]
    %v4878 = vld [vmem:[%s8 + $0x68] sm:$0xff]
    %v4879 = vld [vmem:[%s8 + $0x70] sm:$0xff]
    %v4880 = vld [vmem:[%s8 + $0x78] sm:$0xff]
    %v4881 = vld [vmem:[%s9] sm:$0x1]
    %v4883 = vperm.slane %v4881, 0
    %4885 = vmatpush.msra.mxu0 %v4880
    %4886 = vmatpush.msra.mxu0 %v4879
    %4887 = vmatpush.msra.mxu0 %v4878
    %4888 = vmatpush.msra.mxu0 %v4877
    %4889 = vmatpush.msra.mxu0 %v4876
    %4890 = vmatpush.msra.mxu0 %v4875
    %4891 = vmatpush.msra.mxu0 %v4874
    %4892 = vmatpush.msra.mxu0 %v4873
    %4893 = vmatpush.msra.mxu0 %v4872
    %4894 = vmatpush.msra.mxu0 %v4871
    %4895 = vmatpush.msra.mxu0 %v4870
    %4896 = vmatpush.msra.mxu0 %v4869
    %4897 = vmatpush.msra.mxu0 %v4868
    %4898 = vmatpush.msra.mxu0 %v4867
    %4899 = vmatpush.msra.mxu0 %v4866
    %4900 = vmatpush.msra.mxu0 %v4865
    %4901 = vmatmul.f32.gmra.mxu0 %v4849
    %v4902 = vpop.f32.mrf.mxu0
    %v4903 = vadd.f32 %v4883, %v4902
    %4904 = vmatmul.f32.gmra.mxu0 %v4850
    %v4905 = vpop.f32.mrf.mxu0
    %v4906 = vadd.f32 %v4883, %v4905
    %4907 = vmatmul.f32.gmra.mxu0 %v4851
    %v4908 = vpop.f32.mrf.mxu0
    %v4909 = vadd.f32 %v4883, %v4908
    %4910 = vmatmul.f32.gmra.mxu0 %v4852
    %v4911 = vpop.f32.mrf.mxu0
    %v4912 = vadd.f32 %v4883, %v4911
    %4913 = vmatmul.f32.gmra.mxu0 %v4853
    %v4914 = vpop.f32.mrf.mxu0
    %v4915 = vadd.f32 %v4883, %v4914
    %4916 = vmatmul.f32.gmra.mxu0 %v4854
    %v4917 = vpop.f32.mrf.mxu0
    %v4918 = vadd.f32 %v4883, %v4917
    %4919 = vmatmul.f32.gmra.mxu0 %v4855
    %v4920 = vpop.f32.mrf.mxu0
    %v4921 = vadd.f32 %v4883, %v4920
    %4922 = vmatmul.f32.gmra.mxu0 %v4856
    %v4923 = vpop.f32.mrf.mxu0
    %v4924 = vadd.f32 %v4883, %v4923
    %4925 = vmatmul.f32.gmra.mxu0 %v4857
    %v4926 = vpop.f32.mrf.mxu0
    %v4927 = vadd.f32 %v4883, %v4926
    %4928 = vmatmul.f32.gmra.mxu0 %v4858
    %v4929 = vpop.f32.mrf.mxu0
    %v4930 = vadd.f32 %v4883, %v4929
    %4931 = vmatmul.f32.gmra.mxu0 %v4859
    %v4932 = vpop.f32.mrf.mxu0
    %v4933 = vadd.f32 %v4883, %v4932
    %4934 = vmatmul.f32.gmra.mxu0 %v4860
    %v4935 = vpop.f32.mrf.mxu0
    %v4936 = vadd.f32 %v4883, %v4935
    %4937 = vmatmul.f32.gmra.mxu0 %v4861
    %v4938 = vpop.f32.mrf.mxu0
    %v4939 = vadd.f32 %v4883, %v4938
    %4940 = vmatmul.f32.gmra.mxu0 %v4862
    %v4941 = vpop.f32.mrf.mxu0
    %v4942 = vadd.f32 %v4883, %v4941
    %4943 = vmatmul.f32.gmra.mxu0 %v4863
    %v4944 = vpop.f32.mrf.mxu0
    %v4945 = vadd.f32 %v4883, %v4944
    %4946 = vmatmul.f32.gmra.mxu0 %v4864
    %v4947 = vpop.f32.mrf.mxu0
    %v4948 = vadd.f32 %v4883, %v4947
    %4949 = vdwg.mxu0
    %v4950 = vadd.f32 %v3672, %v4903
    %v4951 = vadd.f32 %v3673, %v4906
    %v4952 = vadd.f32 %v3674, %v4909
    %v4953 = vadd.f32 %v3675, %v4912
    %v4954 = vadd.f32 %v3676, %v4915
    %v4955 = vadd.f32 %v3677, %v4918
    %v4956 = vadd.f32 %v3678, %v4921
    %v4957 = vadd.f32 %v3679, %v4924
    %v4958 = vadd.f32 %v3680, %v4927
    %v4959 = vadd.f32 %v3681, %v4930
    %v4960 = vadd.f32 %v3682, %v4933
    %v4961 = vadd.f32 %v3683, %v4936
    %v4962 = vadd.f32 %v3684, %v4939
    %v4963 = vadd.f32 %v3685, %v4942
    %v4964 = vadd.f32 %v3686, %v4945
    %v4965 = vadd.f32 %v3687, %v4948
    %4966 = vst.msk [vmem:[%s10] sm:$0xff] %vm83, %v4950
    %4967 = vst.msk [vmem:[%s10 + $0x8] sm:$0xff] %vm83, %v4951
    %4968 = vst.msk [vmem:[%s10 + $0x10] sm:$0xff] %vm83, %v4952
    %4969 = vst.msk [vmem:[%s10 + $0x18] sm:$0xff] %vm83, %v4953
    %4970 = vst.msk [vmem:[%s10 + $0x20] sm:$0xff] %vm83, %v4954
    %4971 = vst.msk [vmem:[%s10 + $0x28] sm:$0xff] %vm83, %v4955
    %4972 = vst.msk [vmem:[%s10 + $0x30] sm:$0xff] %vm83, %v4956
    %4973 = vst.msk [vmem:[%s10 + $0x38] sm:$0xff] %vm83, %v4957
    %4974 = vst.msk [vmem:[%s10 + $0x40] sm:$0xff] %vm83, %v4958
    %4975 = vst.msk [vmem:[%s10 + $0x48] sm:$0xff] %vm83, %v4959
    %4976 = vst.msk [vmem:[%s10 + $0x50] sm:$0xff] %vm83, %v4960
    %4977 = vst.msk [vmem:[%s10 + $0x58] sm:$0xff] %vm83, %v4961
    %4978 = vst.msk [vmem:[%s10 + $0x60] sm:$0xff] %vm83, %v4962
    %4979 = vst.msk [vmem:[%s10 + $0x68] sm:$0xff] %vm83, %v4963
    %4980 = vst.msk [vmem:[%s10 + $0x70] sm:$0xff] %vm83, %v4964
    %4981 = vst.msk [vmem:[%s10 + $0x78] sm:$0xff] %vm83, %v4965
    // Predicated region
    $region50: #{_lambda_.1} parent=1 // pred_check
      _
    $region51: #{_lambda_.1} parent=1 // pred_check_branch
      %4983 = sbr.rel (0) target = $region53
    $region52: #{_lambda_.1} parent=1 // pred_region
      _
    $region53: #{_lambda_.1} parent=1 // pred_fallthru
      _
    // Predicated region
    $region54: #{_lambda_.1} parent=1 // pred_check
      _
    $region55: #{_lambda_.1} parent=1 // pred_check_branch
      %4985 = sbr.rel (0) target = $region57
    $region56: #{_lambda_.1} parent=1 // pred_region
      _
    $region57: #{_lambda_.1} parent=1 // pred_fallthru
      _
    %4986 = vsyncpa [#allocation3], 1
    %4987 = vsyncpa [#allocation5], 1

</llo_original>
